<compile_context>
chip_gen: v7x
topology: tpu7x:2x2x1
jax: 0.10.0
libtpu: 0.0.40
codegen_flags: <defaults>
</compile_context>

<pallas_src>
import functools

import jax
import jax.numpy as jnp
import numpy as np
from jax.experimental import pallas as pl
from jax.experimental.pallas import tpu as pltpu


def _relu(x):
    return jnp.maximum(x, 0.0)


def _mm(a_bf16, w_bf16):
    # Both operands bf16 -> single MXU pass regardless of ambient precision
    # config; accumulate in f32.
    return jnp.dot(a_bf16, w_bf16, preferred_element_type=jnp.float32)


def pointnet_seg_kernel(x_ref,
                        w1_ref, b1_ref, w2_ref, b2_ref, w3_ref, b3_ref,
                        wg_ref, bg_ref,
                        wc1_ref, bc1_ref, wc2_ref, bc2_ref, wc3_ref, bc3_ref,
                        out_ref, *, block_batch, num_points):
    B, P = block_batch, num_points
    bf16 = jnp.bfloat16
    x = x_ref[...]                                          # (B*P, 3) f32

    # ---- point_features --------------------------------------------------
    # Layer 1 (3 -> 64): the K=3 contraction runs on the VPU as three
    # broadcast multiply-adds (a K=3 MXU matmul would use <3% of the
    # contraction width and waste a full MXU pass).  Elementwise math is f32.
    f1 = _relu(x[:, 0:1] * w1_ref[0:1, :]
               + x[:, 1:2] * w1_ref[1:2, :]
               + x[:, 2:3] * w1_ref[2:3, :]
               + b1_ref[...])                               # (B*P, 64) f32
    f1 = f1.astype(bf16)

    # Classifier layer-1 pre-activation accumulated incrementally so that
    # f1/f2/f3 do not all stay live until the classifier block.  Row slices
    # of wc1 follow the PyTorch concat order [f1 | f2 | f3 | global].
    pre = _mm(f1, wc1_ref[0:64, :])                         # (B*P, 256) f32

    f2 = _relu(_mm(f1, w2_ref[...]) + b2_ref[...])          # (B*P, 128) f32
    f2 = f2.astype(bf16)
    pre = pre + _mm(f2, wc1_ref[64:192, :])

    f3 = _relu(_mm(f2, w3_ref[...]) + b3_ref[...])          # (B*P, 256) f32
    f3 = f3.astype(bf16)
    pre = pre + _mm(f3, wc1_ref[192:448, :])

    # ---- global_features (Conv1d + BN, no ReLU) ---------------------------
    g = _mm(f3, wg_ref[...]) + bg_ref[...]                  # (B*P, 128) f32

    # ---- pooling: chained MaxPool1d == per-sample global max over points --
    gmax = jnp.max(g.reshape(B, P, 128), axis=1)            # (B, 128) f32

    # ---- classifier ------------------------------------------------------
    # The global part is constant across points within a sample, so it is
    # folded into a per-sample bias (one tiny M=B matmul); bc1 added once.
    gbias = _mm(gmax.astype(bf16), wc1_ref[448:576, :]) + bc1_ref[...]  # (B,256)
    c1 = _relu(pre.reshape(B, P, 256) + gbias[:, None, :]).reshape(B * P, 256)
    c1 = c1.astype(bf16)

    c2 = _relu(_mm(c1, wc2_ref[...]) + bc2_ref[...])        # (B*P, 128) f32
    c2 = c2.astype(bf16)

    # Final conv; output channels padded only to a multiple of 8 -> compact
    # HBM writeback (the 128-lane-padded f32 path wrote ~16x more).
    out = _mm(c2, wc3_ref[...]) + bc3_ref[...]              # (B*P, c_pad) f32
    out_ref[...] = out.astype(out_ref.dtype)


def _check_pool_chain(num_points):
    """Mirror the nn.Module's pooling-construction asserts."""
    assert num_points % 8 == 0, (
        f"Number of points must be divisible by 8: {num_points}")
    rem = num_points
    while rem > 8:
        assert rem % 8 == 0, "number_points must be recursively divisible by 8"
        rem //= 8
    # For any constructible num_points the chained MaxPool1d(kernel==stride)
    # covers every point exactly, i.e. it is a global max -- which is what
    # the kernel computes.


def _device_tuning():
    """(target_rows, vmem_limit_bytes, prefer_even_grid) per TPU generation."""
    try:
        kind = jax.devices()[0].device_kind.lower()
    except Exception:  # pragma: no cover - defensive
        kind = ""
    if ("v5" in kind) or ("v6" in kind):
        # 128 MiB physical VMEM, single TensorCore: bigger blocks amortize the
        # ~0.35 us/step overhead; grid parity is irrelevant.
        return 4096, 96 * 1024 * 1024, False
    # v7x (64 MiB physical VMEM, 2 TensorCores) and unknown chips: stay
    # conservative on VMEM and keep the grid length even so both TCs get work.
    return 2048, 48 * 1024 * 1024, True


def _choose_block_batch(n, p, target_rows, prefer_even_grid):
    """Samples per grid step.

    Aim for M = B*P of a few thousand rows: >= 256 fills the 256-wide MXU and
    amortizes the per-grid-step overhead, while the activation working set
    stays well inside VMEM (incl. double-buffered I/O blocks).  On v7x prefer
    an even number of grid steps so dimension_semantics=('parallel',) shards
    evenly across its 2 TensorCores.
    """
    fits = [b for b in range(1, n + 1)
            if n % b == 0 and b * p <= max(target_rows, p)]
    if prefer_even_grid:
        even = [b for b in fits if (n // b) % 2 == 0]
        if even:
            return max(even)
        multi = [b for b in fits if (n // b) >= 2]
        if multi:
            return max(multi)
    return max(fits)


def pointnet_segmentation(x, params, num_seg_classes, *, block_batch=None):
    """x: (N, P, 3) float32 -> (N, num_seg_classes, P) float32."""
    N, P, C = x.shape
    assert C == 3
    _check_pool_chain(P)

    (w1, b1, w2, b2, w3, b3, wg, bg, wc1, bc1, wc2, bc2, wc3, bc3) = params

    target_rows, vmem_limit, prefer_even_grid = _device_tuning()

    # Pad the final conv's output channels only to a multiple of 8 (sublane
    # granularity) so the kernel writeback stays compact; sliced off below.
    c_pad = 8 * ((num_seg_classes + 7) // 8)
    wc3_p = jnp.pad(wc3, ((0, 0), (0, c_pad - num_seg_classes)))
    bc3_p = jnp.pad(bc3, ((0, 0), (0, c_pad - num_seg_classes)))

    bf16 = jnp.bfloat16
    # MXU weights travel as bf16 (halves weight DMA, removes per-step VPU
    # converts); layer-1 weights and all biases stay f32 (used on the VPU).
    kparams = (w1, b1,
               w2.astype(bf16), b2,
               w3.astype(bf16), b3,
               wg.astype(bf16), bg,
               wc1.astype(bf16), bc1,
               wc2.astype(bf16), bc2,
               wc3_p.astype(bf16), bc3_p)

    if block_batch is None:
        block_batch = _choose_block_batch(N, P, target_rows, prefer_even_grid)
    B = block_batch
    assert N % B == 0

    # Free, contiguous reshape: rows = (sample, point) in C-order.
    x_flat = x.reshape(N * P, C)

    in_specs = [pl.BlockSpec((B * P, C), lambda n: (n, 0))]
    for prm in kparams:
        # Constant index_map -> fetched once by the pipeline; the ~0.6 MiB of
        # double-buffer overhead for bf16 weights is negligible.
        in_specs.append(pl.BlockSpec(prm.shape, lambda n: (0, 0)))

    kernel = functools.partial(pointnet_seg_kernel,
                               block_batch=B, num_points=P)

    # TODO(synk): for very large num_points (>~8k) add a point-tile grid axis
    # with a two-pass / accumulator global max instead of one block per chunk
    # of whole samples.
    out = pl.pallas_call(
        kernel,
        out_shape=jax.ShapeDtypeStruct((N * P, c_pad), jnp.float32),
        grid_spec=pltpu.PrefetchScalarGridSpec(
            num_scalar_prefetch=0,
            grid=(N // B,),
            in_specs=in_specs,
            out_specs=pl.BlockSpec((B * P, c_pad), lambda n: (n, 0)),
        ),
        compiler_params=pltpu.CompilerParams(
            dimension_semantics=("parallel",),
            vmem_limit_bytes=vmem_limit,
        ),
    )(x_flat, *kparams)

    # (N*P, c_pad) -> (N, num_seg_classes, P).  Only ~c_pad (8) lanes/point of
    # wrapper-side transpose traffic, vs 128 lanes/point in the old path.
    out = jnp.transpose(out.reshape(N, P, c_pad), (0, 2, 1))
    return out[:, :num_seg_classes, :]


# ---------------- deterministic parameter construction ----------------

def make_raw_params(key, num_seg_classes):
    keys = iter(jax.random.split(key, 40))

    def conv(cin, cout):
        w = jax.random.normal(next(keys), (cout, cin), jnp.float32) / jnp.sqrt(cin)
        b = 0.05 * jax.random.normal(next(keys), (cout,), jnp.float32)
        return w, b

    def bn(c):
        gamma = 1.0 + 0.1 * jax.random.normal(next(keys), (c,), jnp.float32)
        beta = 0.05 * jax.random.normal(next(keys), (c,), jnp.float32)
        mean = 0.05 * jax.random.normal(next(keys), (c,), jnp.float32)
        var = 0.5 + jax.random.uniform(next(keys), (c,), jnp.float32)
        return gamma, beta, mean, var

    pf = [conv(cin, cout) + bn(cout) for cin, cout in [(3, 64), (64, 128), (128, 256)]]
    gf = conv(256, 128) + bn(128)
    cls = [conv(cin, cout) + bn(cout) for cin, cout in [(576, 256), (256, 128)]]
    cls.append(conv(128, num_seg_classes))
    return {"pf": pf, "gf": gf, "cls": cls}


def fold_params(raw, eps=1e-5):
    # Fold eval-mode BatchNorm into conv:  y = (Wx+b)*s + (beta - mean*s)
    def fold(w, b, g, bt, m, v):
        s = g / jnp.sqrt(v + eps)
        return (w * s[:, None]).T, (b * s + bt - m * s)[None, :]

    out = []
    for blk in raw["pf"]:
        out.extend(fold(*blk))
    out.extend(fold(*raw["gf"]))
    for blk in raw["cls"][:2]:
        out.extend(fold(*blk))
    w, b = raw["cls"][2]
    out.extend([w.T, b[None, :]])
    return tuple(out)


# -------- pure-JAX reference (PyTorch semantics, eval-mode BN, f32) --------

def ref_forward(x, raw, eps=1e-5):
    hp = jax.lax.Precision.HIGHEST
    h = jnp.transpose(x, (0, 2, 1))                       # (N, 3, P)

    def conv_bn(h, w, b, g, bt, m, v, relu):
        y = jnp.einsum("oc,ncp->nop", w, h, precision=hp) + b[None, :, None]
        y = (y - m[None, :, None]) * (g / jnp.sqrt(v + eps))[None, :, None] \
            + bt[None, :, None]
        return jnp.maximum(y, 0.0) if relu else y

    feats = []
    for blk in raw["pf"]:
        h = conv_bn(h, *blk, relu=True)
        feats.append(h)
    h = conv_bn(h, *raw["gf"], relu=False)
    gmax = jnp.max(h, axis=2, keepdims=True)              # (N, 128, 1)
    feats.append(jnp.broadcast_to(gmax, h.shape))         # repeat over points
    h = jnp.concatenate(feats, axis=1)                    # (N, 576, P)
    for blk in raw["cls"][:2]:
        h = conv_bn(h, *blk, relu=True)
    w, b = raw["cls"][2]
    return jnp.einsum("oc,ncp->nop", w, h, precision=hp) + b[None, :, None]


if __name__ == "__main__":
    N, NUM_POINTS, NUM_SEG_CLASSES = 8, 64, 5
    key = jax.random.PRNGKey(0)
    kx, kp = jax.random.split(key)

    x = jax.random.normal(kx, (N, NUM_POINTS, 3), jnp.float32)
    raw = make_raw_params(kp, NUM_SEG_CLASSES)
    params = fold_params(raw)

    out = pointnet_segmentation(x, params, NUM_SEG_CLASSES)
    out = jax.block_until_ready(out)
    assert out.shape == (N, NUM_SEG_CLASSES, NUM_POINTS)

    ref = ref_forward(x, raw)
    # Kernel matmuls run single-pass bf16 on the MXU with f32 accumulation;
    # the reference is f32 (HIGHEST), so compare with a bf16-appropriate
    # tolerance.
    np.testing.assert_allclose(np.asarray(out), np.asarray(ref),
                               rtol=3e-2, atol=3e-2)
    print("KERNEL_OK")
</pallas_src>

<mosaic_0001>
module attributes {stable_mosaic.version = 11 : i64} {
  func.func @pointnet_seg_kernel(%arg0: i32, %arg1: memref<256x3xf32, #tpu.memory_space<vmem>>, %arg2: memref<3x64xf32, #tpu.memory_space<vmem>>, %arg3: memref<1x64xf32, #tpu.memory_space<vmem>>, %arg4: memref<64x128xbf16, #tpu.memory_space<vmem>>, %arg5: memref<1x128xf32, #tpu.memory_space<vmem>>, %arg6: memref<128x256xbf16, #tpu.memory_space<vmem>>, %arg7: memref<1x256xf32, #tpu.memory_space<vmem>>, %arg8: memref<256x128xbf16, #tpu.memory_space<vmem>>, %arg9: memref<1x128xf32, #tpu.memory_space<vmem>>, %arg10: memref<576x256xbf16, #tpu.memory_space<vmem>>, %arg11: memref<1x256xf32, #tpu.memory_space<vmem>>, %arg12: memref<256x128xbf16, #tpu.memory_space<vmem>>, %arg13: memref<1x128xf32, #tpu.memory_space<vmem>>, %arg14: memref<128x8xbf16, #tpu.memory_space<vmem>>, %arg15: memref<1x8xf32, #tpu.memory_space<vmem>>, %arg16: memref<256x8xf32, #tpu.memory_space<vmem>>) attributes {dimension_semantics = [#tpu.dimension_semantics<parallel>], iteration_bounds = array<i64: 2>, scalar_prefetch = 0 : i64, scratch_operands = 0 : i64, tpu.core_type = #tpu.core_type<tc>, window_params = [{transform_indices = @transform_0, window_bounds = array<i64: 256, 3>}, {pipeline_mode = #tpu.pipeline_mode<synchronous>, transform_indices = @transform_1, window_bounds = array<i64: 3, 64>}, {pipeline_mode = #tpu.pipeline_mode<synchronous>, transform_indices = @transform_2, window_bounds = array<i64: 1, 64>}, {pipeline_mode = #tpu.pipeline_mode<synchronous>, transform_indices = @transform_3, window_bounds = array<i64: 64, 128>}, {pipeline_mode = #tpu.pipeline_mode<synchronous>, transform_indices = @transform_4, window_bounds = array<i64: 1, 128>}, {pipeline_mode = #tpu.pipeline_mode<synchronous>, transform_indices = @transform_5, window_bounds = array<i64: 128, 256>}, {pipeline_mode = #tpu.pipeline_mode<synchronous>, transform_indices = @transform_6, window_bounds = array<i64: 1, 256>}, {pipeline_mode = #tpu.pipeline_mode<synchronous>, transform_indices = @transform_7, window_bounds = array<i64: 256, 128>}, {pipeline_mode = #tpu.pipeline_mode<synchronous>, transform_indices = @transform_8, window_bounds = array<i64: 1, 128>}, {pipeline_mode = #tpu.pipeline_mode<synchronous>, transform_indices = @transform_9, window_bounds = array<i64: 576, 256>}, {pipeline_mode = #tpu.pipeline_mode<synchronous>, transform_indices = @transform_10, window_bounds = array<i64: 1, 256>}, {pipeline_mode = #tpu.pipeline_mode<synchronous>, transform_indices = @transform_11, window_bounds = array<i64: 256, 128>}, {pipeline_mode = #tpu.pipeline_mode<synchronous>, transform_indices = @transform_12, window_bounds = array<i64: 1, 128>}, {pipeline_mode = #tpu.pipeline_mode<synchronous>, transform_indices = @transform_13, window_bounds = array<i64: 128, 8>}, {pipeline_mode = #tpu.pipeline_mode<synchronous>, transform_indices = @transform_14, window_bounds = array<i64: 1, 8>}, {transform_indices = @transform_15, window_bounds = array<i64: 256, 8>}]} {
    %c0 = arith.constant 0 : index
    %c0_0 = arith.constant 0 : index
    %0 = vector.load %arg1[%c0, %c0_0] : memref<256x3xf32, #tpu.memory_space<vmem>>, vector<256x3xf32>
    %1 = vector.extract_strided_slice %0 {offsets = [0, 0], sizes = [256, 1], strides = [1, 1]} : vector<256x3xf32> to vector<256x1xf32>
    %c0_1 = arith.constant 0 : index
    %c0_2 = arith.constant 0 : index
    %2 = vector.load %arg2[%c0_1, %c0_2] : memref<3x64xf32, #tpu.memory_space<vmem>>, vector<1x64xf32>
    %3 = vector.broadcast %1 : vector<256x1xf32> to vector<256x64xf32>
    %4 = vector.broadcast %2 : vector<1x64xf32> to vector<256x64xf32>
    %5 = arith.mulf %3, %4 : vector<256x64xf32>
    %6 = vector.extract_strided_slice %0 {offsets = [0, 1], sizes = [256, 1], strides = [1, 1]} : vector<256x3xf32> to vector<256x1xf32>
    %c1 = arith.constant 1 : index
    %c0_3 = arith.constant 0 : index
    %7 = vector.load %arg2[%c1, %c0_3] : memref<3x64xf32, #tpu.memory_space<vmem>>, vector<1x64xf32>
    %8 = vector.broadcast %6 : vector<256x1xf32> to vector<256x64xf32>
    %9 = vector.broadcast %7 : vector<1x64xf32> to vector<256x64xf32>
    %10 = arith.mulf %8, %9 : vector<256x64xf32>
    %11 = arith.addf %5, %10 : vector<256x64xf32>
    %12 = vector.extract_strided_slice %0 {offsets = [0, 2], sizes = [256, 1], strides = [1, 1]} : vector<256x3xf32> to vector<256x1xf32>
    %c2 = arith.constant 2 : index
    %c0_4 = arith.constant 0 : index
    %13 = vector.load %arg2[%c2, %c0_4] : memref<3x64xf32, #tpu.memory_space<vmem>>, vector<1x64xf32>
    %14 = vector.broadcast %12 : vector<256x1xf32> to vector<256x64xf32>
    %15 = vector.broadcast %13 : vector<1x64xf32> to vector<256x64xf32>
    %16 = arith.mulf %14, %15 : vector<256x64xf32>
    %17 = arith.addf %11, %16 : vector<256x64xf32>
    %c0_5 = arith.constant 0 : index
    %c0_6 = arith.constant 0 : index
    %18 = vector.load %arg3[%c0_5, %c0_6] : memref<1x64xf32, #tpu.memory_space<vmem>>, vector<1x64xf32>
    %19 = vector.broadcast %18 : vector<1x64xf32> to vector<256x64xf32>
    %20 = arith.addf %17, %19 : vector<256x64xf32>
    %cst = arith.constant 0.000000e+00 : f32
    %21 = vector.broadcast %cst : f32 to vector<256x64xf32>
    %22 = arith.maximumf %20, %21 : vector<256x64xf32>
    %23 = arith.truncf %22 : vector<256x64xf32> to vector<256x64xbf16>
    %c0_7 = arith.constant 0 : index
    %c0_8 = arith.constant 0 : index
    %24 = vector.load %arg10[%c0_7, %c0_8] : memref<576x256xbf16, #tpu.memory_space<vmem>>, vector<64x256xbf16>
    %cst_9 = arith.constant dense<0.000000e+00> : vector<256x256xf32>
    %25 = tpu.matmul %23, %24, %cst_9 {dimension_numbers = #tpu.dot_dimension_numbers<[1], [0], [0], [1], [0, 0, 1, 1], [], []>} : vector<256x64xbf16>, vector<64x256xbf16>, vector<256x256xf32> -> vector<256x256xf32>
    %c0_10 = arith.constant 0 : index
    %c0_11 = arith.constant 0 : index
    %26 = vector.load %arg4[%c0_10, %c0_11] : memref<64x128xbf16, #tpu.memory_space<vmem>>, vector<64x128xbf16>
    %cst_12 = arith.constant dense<0.000000e+00> : vector<256x128xf32>
    %27 = tpu.matmul %23, %26, %cst_12 {dimension_numbers = #tpu.dot_dimension_numbers<[1], [0], [0], [1], [0, 0, 1, 1], [], []>} : vector<256x64xbf16>, vector<64x128xbf16>, vector<256x128xf32> -> vector<256x128xf32>
    %c0_13 = arith.constant 0 : index
    %c0_14 = arith.constant 0 : index
    %28 = vector.load %arg5[%c0_13, %c0_14] : memref<1x128xf32, #tpu.memory_space<vmem>>, vector<1x128xf32>
    %29 = vector.broadcast %28 : vector<1x128xf32> to vector<256x128xf32>
    %30 = arith.addf %27, %29 : vector<256x128xf32>
    %cst_15 = arith.constant 0.000000e+00 : f32
    %31 = vector.broadcast %cst_15 : f32 to vector<256x128xf32>
    %32 = arith.maximumf %30, %31 : vector<256x128xf32>
    %33 = arith.truncf %32 : vector<256x128xf32> to vector<256x128xbf16>
    %c64 = arith.constant 64 : index
    %c0_16 = arith.constant 0 : index
    %34 = vector.load %arg10[%c64, %c0_16] : memref<576x256xbf16, #tpu.memory_space<vmem>>, vector<128x256xbf16>
    %cst_17 = arith.constant dense<0.000000e+00> : vector<256x256xf32>
    %35 = tpu.matmul %33, %34, %cst_17 {dimension_numbers = #tpu.dot_dimension_numbers<[1], [0], [0], [1], [0, 0, 1, 1], [], []>} : vector<256x128xbf16>, vector<128x256xbf16>, vector<256x256xf32> -> vector<256x256xf32>
    %36 = arith.addf %25, %35 : vector<256x256xf32>
    %c0_18 = arith.constant 0 : index
    %c0_19 = arith.constant 0 : index
    %37 = vector.load %arg6[%c0_18, %c0_19] : memref<128x256xbf16, #tpu.memory_space<vmem>>, vector<128x256xbf16>
    %cst_20 = arith.constant dense<0.000000e+00> : vector<256x256xf32>
    %38 = tpu.matmul %33, %37, %cst_20 {dimension_numbers = #tpu.dot_dimension_numbers<[1], [0], [0], [1], [0, 0, 1, 1], [], []>} : vector<256x128xbf16>, vector<128x256xbf16>, vector<256x256xf32> -> vector<256x256xf32>
    %c0_21 = arith.constant 0 : index
    %c0_22 = arith.constant 0 : index
    %39 = vector.load %arg7[%c0_21, %c0_22] : memref<1x256xf32, #tpu.memory_space<vmem>>, vector<1x256xf32>
    %40 = vector.broadcast %39 : vector<1x256xf32> to vector<256x256xf32>
    %41 = arith.addf %38, %40 : vector<256x256xf32>
    %cst_23 = arith.constant 0.000000e+00 : f32
    %42 = vector.broadcast %cst_23 : f32 to vector<256x256xf32>
    %43 = arith.maximumf %41, %42 : vector<256x256xf32>
    %44 = arith.truncf %43 : vector<256x256xf32> to vector<256x256xbf16>
    %c192 = arith.constant 192 : index
    %c0_24 = arith.constant 0 : index
    %45 = vector.load %arg10[%c192, %c0_24] : memref<576x256xbf16, #tpu.memory_space<vmem>>, vector<256x256xbf16>
    %cst_25 = arith.constant dense<0.000000e+00> : vector<256x256xf32>
    %46 = tpu.matmul %44, %45, %cst_25 {dimension_numbers = #tpu.dot_dimension_numbers<[1], [0], [0], [1], [0, 0, 1, 1], [], []>} : vector<256x256xbf16>, vector<256x256xbf16>, vector<256x256xf32> -> vector<256x256xf32>
    %47 = arith.addf %36, %46 : vector<256x256xf32>
    %c0_26 = arith.constant 0 : index
    %c0_27 = arith.constant 0 : index
    %48 = vector.load %arg8[%c0_26, %c0_27] : memref<256x128xbf16, #tpu.memory_space<vmem>>, vector<256x128xbf16>
    %cst_28 = arith.constant dense<0.000000e+00> : vector<256x128xf32>
    %49 = tpu.matmul %44, %48, %cst_28 {dimension_numbers = #tpu.dot_dimension_numbers<[1], [0], [0], [1], [0, 0, 1, 1], [], []>} : vector<256x256xbf16>, vector<256x128xbf16>, vector<256x128xf32> -> vector<256x128xf32>
    %c0_29 = arith.constant 0 : index
    %c0_30 = arith.constant 0 : index
    %50 = vector.load %arg9[%c0_29, %c0_30] : memref<1x128xf32, #tpu.memory_space<vmem>>, vector<1x128xf32>
    %51 = vector.broadcast %50 : vector<1x128xf32> to vector<256x128xf32>
    %52 = arith.addf %49, %51 : vector<256x128xf32>
    %53 = vector.shape_cast %52 : vector<256x128xf32> to vector<4x64x128xf32>
    %cst_31 = arith.constant dense<0xFF800000> : vector<4x128xf32>
    %54 = vector.multi_reduction <maximumf>, %53, %cst_31 [1] : vector<4x64x128xf32> to vector<4x128xf32>
    %55 = arith.truncf %54 : vector<4x128xf32> to vector<4x128xbf16>
    %c448 = arith.constant 448 : index
    %c0_32 = arith.constant 0 : index
    %56 = vector.load %arg10[%c448, %c0_32] : memref<576x256xbf16, #tpu.memory_space<vmem>>, vector<128x256xbf16>
    %cst_33 = arith.constant dense<0.000000e+00> : vector<4x256xf32>
    %57 = tpu.matmul %55, %56, %cst_33 {dimension_numbers = #tpu.dot_dimension_numbers<[1], [0], [0], [1], [0, 0, 1, 1], [], []>} : vector<4x128xbf16>, vector<128x256xbf16>, vector<4x256xf32> -> vector<4x256xf32>
    %c0_34 = arith.constant 0 : index
    %c0_35 = arith.constant 0 : index
    %58 = vector.load %arg11[%c0_34, %c0_35] : memref<1x256xf32, #tpu.memory_space<vmem>>, vector<1x256xf32>
    %59 = vector.broadcast %58 : vector<1x256xf32> to vector<4x256xf32>
    %60 = arith.addf %57, %59 : vector<4x256xf32>
    %61 = vector.shape_cast %47 : vector<256x256xf32> to vector<4x64x256xf32>
    %62 = vector.shape_cast %60 : vector<4x256xf32> to vector<4x1x256xf32>
    %63 = vector.broadcast %62 : vector<4x1x256xf32> to vector<4x64x256xf32>
    %64 = arith.addf %61, %63 : vector<4x64x256xf32>
    %cst_36 = arith.constant 0.000000e+00 : f32
    %65 = vector.broadcast %cst_36 : f32 to vector<4x64x256xf32>
    %66 = arith.maximumf %64, %65 : vector<4x64x256xf32>
    %67 = vector.shape_cast %66 : vector<4x64x256xf32> to vector<256x256xf32>
    %68 = arith.truncf %67 : vector<256x256xf32> to vector<256x256xbf16>
    %c0_37 = arith.constant 0 : index
    %c0_38 = arith.constant 0 : index
    %69 = vector.load %arg12[%c0_37, %c0_38] : memref<256x128xbf16, #tpu.memory_space<vmem>>, vector<256x128xbf16>
    %cst_39 = arith.constant dense<0.000000e+00> : vector<256x128xf32>
    %70 = tpu.matmul %68, %69, %cst_39 {dimension_numbers = #tpu.dot_dimension_numbers<[1], [0], [0], [1], [0, 0, 1, 1], [], []>} : vector<256x256xbf16>, vector<256x128xbf16>, vector<256x128xf32> -> vector<256x128xf32>
    %c0_40 = arith.constant 0 : index
    %c0_41 = arith.constant 0 : index
    %71 = vector.load %arg13[%c0_40, %c0_41] : memref<1x128xf32, #tpu.memory_space<vmem>>, vector<1x128xf32>
    %72 = vector.broadcast %71 : vector<1x128xf32> to vector<256x128xf32>
    %73 = arith.addf %70, %72 : vector<256x128xf32>
    %cst_42 = arith.constant 0.000000e+00 : f32
    %74 = vector.broadcast %cst_42 : f32 to vector<256x128xf32>
    %75 = arith.maximumf %73, %74 : vector<256x128xf32>
    %76 = arith.truncf %75 : vector<256x128xf32> to vector<256x128xbf16>
    %c0_43 = arith.constant 0 : index
    %c0_44 = arith.constant 0 : index
    %77 = vector.load %arg14[%c0_43, %c0_44] : memref<128x8xbf16, #tpu.memory_space<vmem>>, vector<128x8xbf16>
    %cst_45 = arith.constant dense<0.000000e+00> : vector<256x8xf32>
    %78 = tpu.matmul %76, %77, %cst_45 {dimension_numbers = #tpu.dot_dimension_numbers<[1], [0], [0], [1], [0, 0, 1, 1], [], []>} : vector<256x128xbf16>, vector<128x8xbf16>, vector<256x8xf32> -> vector<256x8xf32>
    %c0_46 = arith.constant 0 : index
    %c0_47 = arith.constant 0 : index
    %79 = vector.load %arg15[%c0_46, %c0_47] : memref<1x8xf32, #tpu.memory_space<vmem>>, vector<1x8xf32>
    %80 = vector.broadcast %79 : vector<1x8xf32> to vector<256x8xf32>
    %81 = arith.addf %78, %80 : vector<256x8xf32>
    %c0_48 = arith.constant 0 : index
    %c0_49 = arith.constant 0 : index
    %82 = vector.load %arg16[%c0_48, %c0_49] : memref<256x8xf32, #tpu.memory_space<vmem>>, vector<256x8xf32>
    tpu.vector_store %arg16[%c0_48, %c0_49], %81 {strides = array<i32>} : memref<256x8xf32, #tpu.memory_space<vmem>>, vector<256x8xf32>,
    return
  }
  func.func @transform_0(%arg0: i32) -> (i32, i32) {
    %c0_i32 = arith.constant 0 : i32
    %c0_i32_0 = arith.constant 0 : i32
    return %arg0, %c0_i32 : i32, i32
  }
  func.func @transform_1(%arg0: i32) -> (i32, i32) {
    %c0_i32 = arith.constant 0 : i32
    %c0_i32_0 = arith.constant 0 : i32
    %c0_i32_1 = arith.constant 0 : i32
    return %c0_i32, %c0_i32_0 : i32, i32
  }
  func.func @transform_2(%arg0: i32) -> (i32, i32) {
    %c0_i32 = arith.constant 0 : i32
    %c0_i32_0 = arith.constant 0 : i32
    %c0_i32_1 = arith.constant 0 : i32
    return %c0_i32, %c0_i32_0 : i32, i32
  }
  func.func @transform_3(%arg0: i32) -> (i32, i32) {
    %c0_i32 = arith.constant 0 : i32
    %c0_i32_0 = arith.constant 0 : i32
    %c0_i32_1 = arith.constant 0 : i32
    return %c0_i32, %c0_i32_0 : i32, i32
  }
  func.func @transform_4(%arg0: i32) -> (i32, i32) {
    %c0_i32 = arith.constant 0 : i32
    %c0_i32_0 = arith.constant 0 : i32
    %c0_i32_1 = arith.constant 0 : i32
    return %c0_i32, %c0_i32_0 : i32, i32
  }
  func.func @transform_5(%arg0: i32) -> (i32, i32) {
    %c0_i32 = arith.constant 0 : i32
    %c0_i32_0 = arith.constant 0 : i32
    %c0_i32_1 = arith.constant 0 : i32
    return %c0_i32, %c0_i32_0 : i32, i32
  }
  func.func @transform_6(%arg0: i32) -> (i32, i32) {
    %c0_i32 = arith.constant 0 : i32
    %c0_i32_0 = arith.constant 0 : i32
    %c0_i32_1 = arith.constant 0 : i32
    return %c0_i32, %c0_i32_0 : i32, i32
  }
  func.func @transform_7(%arg0: i32) -> (i32, i32) {
    %c0_i32 = arith.constant 0 : i32
    %c0_i32_0 = arith.constant 0 : i32
    %c0_i32_1 = arith.constant 0 : i32
    return %c0_i32, %c0_i32_0 : i32, i32
  }
  func.func @transform_8(%arg0: i32) -> (i32, i32) {
    %c0_i32 = arith.constant 0 : i32
    %c0_i32_0 = arith.constant 0 : i32
    %c0_i32_1 = arith.constant 0 : i32
    return %c0_i32, %c0_i32_0 : i32, i32
  }
  func.func @transform_9(%arg0: i32) -> (i32, i32) {
    %c0_i32 = arith.constant 0 : i32
    %c0_i32_0 = arith.constant 0 : i32
    %c0_i32_1 = arith.constant 0 : i32
    return %c0_i32, %c0_i32_0 : i32, i32
  }
  func.func @transform_10(%arg0: i32) -> (i32, i32) {
    %c0_i32 = arith.constant 0 : i32
    %c0_i32_0 = arith.constant 0 : i32
    %c0_i32_1 = arith.constant 0 : i32
    return %c0_i32, %c0_i32_0 : i32, i32
  }
  func.func @transform_11(%arg0: i32) -> (i32, i32) {
    %c0_i32 = arith.constant 0 : i32
    %c0_i32_0 = arith.constant 0 : i32
    %c0_i32_1 = arith.constant 0 : i32
    return %c0_i32, %c0_i32_0 : i32, i32
  }
  func.func @transform_12(%arg0: i32) -> (i32, i32) {
    %c0_i32 = arith.constant 0 : i32
    %c0_i32_0 = arith.constant 0 : i32
    %c0_i32_1 = arith.constant 0 : i32
    return %c0_i32, %c0_i32_0 : i32, i32
  }
  func.func @transform_13(%arg0: i32) -> (i32, i32) {
    %c0_i32 = arith.constant 0 : i32
    %c0_i32_0 = arith.constant 0 : i32
    %c0_i32_1 = arith.constant 0 : i32
    return %c0_i32, %c0_i32_0 : i32, i32
  }
  func.func @transform_14(%arg0: i32) -> (i32, i32) {
    %c0_i32 = arith.constant 0 : i32
    %c0_i32_0 = arith.constant 0 : i32
    %c0_i32_1 = arith.constant 0 : i32
    return %c0_i32, %c0_i32_0 : i32, i32
  }
  func.func @transform_15(%arg0: i32) -> (i32, i32) {
    %c0_i32 = arith.constant 0 : i32
    %c0_i32_0 = arith.constant 0 : i32
    return %arg0, %c0_i32 : i32, i32
  }
}

</mosaic_0001>

<llo_original>
// kernel: tpu_custom_call.1
$region0: #{tpu_custom_call.1}
  #allocation0 [shape = 'u32[]', space=smem, size = 0x4, offset = 0x4, fixed_abs, tag = 'smem constant byte address 0x4 - core index']
  #allocation1 [shape = 'u32[144,128]{1,0:T(1,128)}', space=vmem, size = 0x12000, scoped, tag = 'internal scratch']
  %s0 = inlined_call_operand.vmem [shape: f32[512,3], index: 0, kind: input, shape index: {}]
  %s1 = inlined_call_operand.vmem [shape: f32[3,64], index: 1, kind: input, shape index: {}]
  %s2 = inlined_call_operand.vmem [shape: f32[1,64], index: 2, kind: input, shape index: {}]
  %s3 = inlined_call_operand.vmem [shape: bf16[64,128], index: 3, kind: input, shape index: {}]
  %s4 = inlined_call_operand.vmem [shape: f32[1,128], index: 4, kind: input, shape index: {}]
  %s5 = inlined_call_operand.hbm [shape: bf16[128,256], index: 5, kind: input, shape index: {}]
  %s6 = inlined_call_operand.vmem [shape: f32[1,256], index: 6, kind: input, shape index: {}]
  %s7 = inlined_call_operand.hbm [shape: bf16[256,128], index: 7, kind: input, shape index: {}]
  %s8 = inlined_call_operand.vmem [shape: f32[1,128], index: 8, kind: input, shape index: {}]
  %s9 = inlined_call_operand.vmem [shape: bf16[576,256], index: 9, kind: input, shape index: {}]
  %s10 = inlined_call_operand.vmem [shape: f32[1,256], index: 10, kind: input, shape index: {}]
  %s11 = inlined_call_operand.hbm [shape: bf16[256,128], index: 11, kind: input, shape index: {}]
  %s12 = inlined_call_operand.vmem [shape: f32[1,128], index: 12, kind: input, shape index: {}]
  %s13 = inlined_call_operand.vmem [shape: bf16[128,8], index: 13, kind: input, shape index: {}]
  %s14 = inlined_call_operand.vmem [shape: f32[1,8], index: 14, kind: input, shape index: {}]
  %s15 = inlined_call_operand.vmem [shape: f32[512,8], index: 15, kind: output, shape index: {}]
  %s16 = sld [smem:[#allocation0]]
  $region105: #{tpu_custom_call.1} parent=0
    _
  %s18 = ssub.s32 1, %s16
  %s19 = scalar_select 0, %s18, %s16
  $region1: #{tpu_custom_call.1} parent=0
    #allocation2 [shape = 'u8[65536]{0}', space=vmem, size = 0x10000, scoped, tag = 'input window, operand 5, single buffered']
    #allocation3 [shape = 's32[2]{0}', space=sflag, size = 0x8, scoped, tag = 'scoped memory for tpu_custom_call.1']
    #allocation4 [shape = 'u8[65536]{0}', space=vmem, size = 0x10000, scoped, tag = 'input window, operand 7, single buffered']
    #allocation5 [shape = 's32[1]{0}', space=sflag, size = 0x4, scoped, tag = 'scoped memory for tpu_custom_call.1']
    #allocation6 [shape = 'u8[65536]{0}', space=vmem, size = 0x10000, scoped, tag = 'input window, operand 11, single buffered']
    %20 = vsyncpa [#allocation3], 0
    %21 = vsyncpa [#allocation5], 0
    loop: start=0, step=1, limit=4
    $region2: #{tpu_custom_call.1} parent=1 // loop_pre_header
      _
    $region3: #{tpu_custom_call.1} parent=1 // loop_header
      %s23 = sphi 0, %s27
      %p24 = scmp.ge.s32.totalorder %s23, 4
      %s33 = sphi 0, %s35
      %s36 = sphi 0, %s33
      %s37 = sphi 0, %s36
      %s53 = sphi 0, %s37
      %s57 = sphi 0, %s57
      %s59 = sphi 0, %s57
      %s60 = sphi 0, %s59
      %s74 = sphi 0, %s60
      %s78 = sphi 0, %s78
      %s80 = sphi 0, %s78
      %s81 = sphi 0, %s80
      %s95 = sphi 0, %s81
      %s99 = sphi 0, %s99
      %s101 = sphi 0, %s99
      %s102 = sphi 0, %s101
      %s116 = sphi 0, %s102
      %s120 = sphi 0, %s120
      %s122 = sphi 0, %s120
      %s123 = sphi 0, %s122
      %s137 = sphi 0, %s123
      %s141 = sphi 0, %s141
      %s143 = sphi 0, %s141
      %s144 = sphi 0, %s143
      %s158 = sphi 0, %s144
      %s162 = sphi 0, %s162
      %s164 = sphi 0, %s162
      %s165 = sphi 0, %s164
      %s179 = sphi 0, %s165
      %s183 = sphi 0, %s183
      %s185 = sphi 0, %s183
      %s186 = sphi 0, %s185
      %s200 = sphi 0, %s186
      %s204 = sphi 0, %s204
      %s206 = sphi 0, %s204
      %s207 = sphi 0, %s206
      %s221 = sphi 0, %s207
      %s225 = sphi 0, %s225
      %s227 = sphi 0, %s225
      %s228 = sphi 0, %s227
      %s242 = sphi 0, %s228
      %s246 = sphi 0, %s246
      %s248 = sphi 0, %s246
      %s249 = sphi 0, %s248
      %s263 = sphi 0, %s249
      %s267 = sphi 0, %s267
      %s269 = sphi 0, %s267
      %s270 = sphi 0, %s269
      %s284 = sphi 0, %s270
      %s288 = sphi 0, %s288
      %s290 = sphi 0, %s288
      %s291 = sphi 0, %s290
      %s305 = sphi 0, %s291
      %s309 = sphi 0, %s309
      %s311 = sphi 0, %s309
      %s312 = sphi 0, %s311
      %s326 = sphi 0, %s312
      %s330 = sphi 0, %s330
      %s332 = sphi 0, %s330
      %s333 = sphi 0, %s332
      %s347 = sphi 0, %s333
      %s353 = sphi 0, %s355
      %s356 = sphi 0, %s353
      %s357 = sphi 0, %s356
      %s373 = sphi 0, %s357
    $region4: #{tpu_custom_call.1} parent=1 // loop_header_branch
      %26 = sbr.rel (%p24) target = $region8
    $region5: #{tpu_custom_call.1} parent=1 // loop_body
      %s28 = ssub.s32 %s23, 1
      %s29 = ssub.s32 %s23, 2
      %s30 = sadd.s32 %s23, 1
      %s31 = ssub.s32 %s23, %s30
      %p32 = scmp.eq.s32.totalorder %s31, 0
      %s34 = sadd.s32 %s33, 1
      %s35 = scalar_select %p32, %s33, %s34
      %p38 = pneg %p32
      %p39 = scmp.eq.s32.totalorder %s23, 1
      %p40 = por %p38, %p39
      %p41 = scmp.ne.s32.totalorder %s33, %s36
      %p42 = scmp.eq.s32.totalorder %s23, 0
      %p43 = por %p41, %p42
      %p44 = scmp.ne.s32.totalorder %s33, %s36
      %p45 = scmp.eq.s32.totalorder %s28, 1
      %p46 = por %p44, %p45
      %p47 = scmp.ne.s32.totalorder %s36, %s37
      %p48 = scmp.eq.s32.totalorder %s28, 0
      %p49 = por %p47, %p48
      %p50 = scmp.ne.s32.totalorder %s36, %s37
      %p51 = scmp.eq.s32.totalorder %s29, 1
      %p52 = por %p50, %p51
      %p54 = scmp.ne.s32.totalorder %s37, %s53
      %p55 = scmp.eq.s32.totalorder %s29, 0
      %p56 = por %p54, %p55
      %s58 = sadd.s32 %s57, 1
      %p61 = scmp.eq.s32.totalorder %s23, 1
      %p62 = scmp.ne.s32.totalorder %s57, %s59
      %p63 = scmp.eq.s32.totalorder %s23, 0
      %p64 = por %p62, %p63
      %p65 = scmp.ne.s32.totalorder %s57, %s59
      %p66 = scmp.eq.s32.totalorder %s28, 1
      %p67 = por %p65, %p66
      %p68 = scmp.ne.s32.totalorder %s59, %s60
      %p69 = scmp.eq.s32.totalorder %s28, 0
      %p70 = por %p68, %p69
      %p71 = scmp.ne.s32.totalorder %s59, %s60
      %p72 = scmp.eq.s32.totalorder %s29, 1
      %p73 = por %p71, %p72
      %p75 = scmp.ne.s32.totalorder %s60, %s74
      %p76 = scmp.eq.s32.totalorder %s29, 0
      %p77 = por %p75, %p76
      %s79 = sadd.s32 %s78, 1
      %p82 = scmp.eq.s32.totalorder %s23, 1
      %p83 = scmp.ne.s32.totalorder %s78, %s80
      %p84 = scmp.eq.s32.totalorder %s23, 0
      %p85 = por %p83, %p84
      %p86 = scmp.ne.s32.totalorder %s78, %s80
      %p87 = scmp.eq.s32.totalorder %s28, 1
      %p88 = por %p86, %p87
      %p89 = scmp.ne.s32.totalorder %s80, %s81
      %p90 = scmp.eq.s32.totalorder %s28, 0
      %p91 = por %p89, %p90
      %p92 = scmp.ne.s32.totalorder %s80, %s81
      %p93 = scmp.eq.s32.totalorder %s29, 1
      %p94 = por %p92, %p93
      %p96 = scmp.ne.s32.totalorder %s81, %s95
      %p97 = scmp.eq.s32.totalorder %s29, 0
      %p98 = por %p96, %p97
      %s100 = sadd.s32 %s99, 1
      %p103 = scmp.eq.s32.totalorder %s23, 1
      %p104 = scmp.ne.s32.totalorder %s99, %s101
      %p105 = scmp.eq.s32.totalorder %s23, 0
      %p106 = por %p104, %p105
      %p107 = scmp.ne.s32.totalorder %s99, %s101
      %p108 = scmp.eq.s32.totalorder %s28, 1
      %p109 = por %p107, %p108
      %p110 = scmp.ne.s32.totalorder %s101, %s102
      %p111 = scmp.eq.s32.totalorder %s28, 0
      %p112 = por %p110, %p111
      %p113 = scmp.ne.s32.totalorder %s101, %s102
      %p114 = scmp.eq.s32.totalorder %s29, 1
      %p115 = por %p113, %p114
      %p117 = scmp.ne.s32.totalorder %s102, %s116
      %p118 = scmp.eq.s32.totalorder %s29, 0
      %p119 = por %p117, %p118
      %s121 = sadd.s32 %s120, 1
      %p124 = scmp.eq.s32.totalorder %s23, 1
      %p125 = scmp.ne.s32.totalorder %s120, %s122
      %p126 = scmp.eq.s32.totalorder %s23, 0
      %p127 = por %p125, %p126
      %p128 = scmp.ne.s32.totalorder %s120, %s122
      %p129 = scmp.eq.s32.totalorder %s28, 1
      %p130 = por %p128, %p129
      %p131 = scmp.ne.s32.totalorder %s122, %s123
      %p132 = scmp.eq.s32.totalorder %s28, 0
      %p133 = por %p131, %p132
      %p134 = scmp.ne.s32.totalorder %s122, %s123
      %p135 = scmp.eq.s32.totalorder %s29, 1
      %p136 = por %p134, %p135
      %p138 = scmp.ne.s32.totalorder %s123, %s137
      %p139 = scmp.eq.s32.totalorder %s29, 0
      %p140 = por %p138, %p139
      %s142 = sadd.s32 %s141, 1
      %p145 = scmp.eq.s32.totalorder %s23, 1
      %p146 = scmp.ne.s32.totalorder %s141, %s143
      %p147 = scmp.eq.s32.totalorder %s23, 0
      %p148 = por %p146, %p147
      %p149 = scmp.ne.s32.totalorder %s141, %s143
      %p150 = scmp.eq.s32.totalorder %s28, 1
      %p151 = por %p149, %p150
      %p152 = scmp.ne.s32.totalorder %s143, %s144
      %p153 = scmp.eq.s32.totalorder %s28, 0
      %p154 = por %p152, %p153
      %p155 = scmp.ne.s32.totalorder %s143, %s144
      %p156 = scmp.eq.s32.totalorder %s29, 1
      %p157 = por %p155, %p156
      %p159 = scmp.ne.s32.totalorder %s144, %s158
      %p160 = scmp.eq.s32.totalorder %s29, 0
      %p161 = por %p159, %p160
      %s163 = sadd.s32 %s162, 1
      %p166 = scmp.eq.s32.totalorder %s23, 1
      %p167 = scmp.ne.s32.totalorder %s162, %s164
      %p168 = scmp.eq.s32.totalorder %s23, 0
      %p169 = por %p167, %p168
      %p170 = scmp.ne.s32.totalorder %s162, %s164
      %p171 = scmp.eq.s32.totalorder %s28, 1
      %p172 = por %p170, %p171
      %p173 = scmp.ne.s32.totalorder %s164, %s165
      %p174 = scmp.eq.s32.totalorder %s28, 0
      %p175 = por %p173, %p174
      %p176 = scmp.ne.s32.totalorder %s164, %s165
      %p177 = scmp.eq.s32.totalorder %s29, 1
      %p178 = por %p176, %p177
      %p180 = scmp.ne.s32.totalorder %s165, %s179
      %p181 = scmp.eq.s32.totalorder %s29, 0
      %p182 = por %p180, %p181
      %s184 = sadd.s32 %s183, 1
      %p187 = scmp.eq.s32.totalorder %s23, 1
      %p188 = scmp.ne.s32.totalorder %s183, %s185
      %p189 = scmp.eq.s32.totalorder %s23, 0
      %p190 = por %p188, %p189
      %p191 = scmp.ne.s32.totalorder %s183, %s185
      %p192 = scmp.eq.s32.totalorder %s28, 1
      %p193 = por %p191, %p192
      %p194 = scmp.ne.s32.totalorder %s185, %s186
      %p195 = scmp.eq.s32.totalorder %s28, 0
      %p196 = por %p194, %p195
      %p197 = scmp.ne.s32.totalorder %s185, %s186
      %p198 = scmp.eq.s32.totalorder %s29, 1
      %p199 = por %p197, %p198
      %p201 = scmp.ne.s32.totalorder %s186, %s200
      %p202 = scmp.eq.s32.totalorder %s29, 0
      %p203 = por %p201, %p202
      %s205 = sadd.s32 %s204, 1
      %p208 = scmp.eq.s32.totalorder %s23, 1
      %p209 = scmp.ne.s32.totalorder %s204, %s206
      %p210 = scmp.eq.s32.totalorder %s23, 0
      %p211 = por %p209, %p210
      %p212 = scmp.ne.s32.totalorder %s204, %s206
      %p213 = scmp.eq.s32.totalorder %s28, 1
      %p214 = por %p212, %p213
      %p215 = scmp.ne.s32.totalorder %s206, %s207
      %p216 = scmp.eq.s32.totalorder %s28, 0
      %p217 = por %p215, %p216
      %p218 = scmp.ne.s32.totalorder %s206, %s207
      %p219 = scmp.eq.s32.totalorder %s29, 1
      %p220 = por %p218, %p219
      %p222 = scmp.ne.s32.totalorder %s207, %s221
      %p223 = scmp.eq.s32.totalorder %s29, 0
      %p224 = por %p222, %p223
      %s226 = sadd.s32 %s225, 1
      %p229 = scmp.eq.s32.totalorder %s23, 1
      %p230 = scmp.ne.s32.totalorder %s225, %s227
      %p231 = scmp.eq.s32.totalorder %s23, 0
      %p232 = por %p230, %p231
      %p233 = scmp.ne.s32.totalorder %s225, %s227
      %p234 = scmp.eq.s32.totalorder %s28, 1
      %p235 = por %p233, %p234
      %p236 = scmp.ne.s32.totalorder %s227, %s228
      %p237 = scmp.eq.s32.totalorder %s28, 0
      %p238 = por %p236, %p237
      %p239 = scmp.ne.s32.totalorder %s227, %s228
      %p240 = scmp.eq.s32.totalorder %s29, 1
      %p241 = por %p239, %p240
      %p243 = scmp.ne.s32.totalorder %s228, %s242
      %p244 = scmp.eq.s32.totalorder %s29, 0
      %p245 = por %p243, %p244
      %s247 = sadd.s32 %s246, 1
      %p250 = scmp.eq.s32.totalorder %s23, 1
      %p251 = scmp.ne.s32.totalorder %s246, %s248
      %p252 = scmp.eq.s32.totalorder %s23, 0
      %p253 = por %p251, %p252
      %p254 = scmp.ne.s32.totalorder %s246, %s248
      %p255 = scmp.eq.s32.totalorder %s28, 1
      %p256 = por %p254, %p255
      %p257 = scmp.ne.s32.totalorder %s248, %s249
      %p258 = scmp.eq.s32.totalorder %s28, 0
      %p259 = por %p257, %p258
      %p260 = scmp.ne.s32.totalorder %s248, %s249
      %p261 = scmp.eq.s32.totalorder %s29, 1
      %p262 = por %p260, %p261
      %p264 = scmp.ne.s32.totalorder %s249, %s263
      %p265 = scmp.eq.s32.totalorder %s29, 0
      %p266 = por %p264, %p265
      %s268 = sadd.s32 %s267, 1
      %p271 = scmp.eq.s32.totalorder %s23, 1
      %p272 = scmp.ne.s32.totalorder %s267, %s269
      %p273 = scmp.eq.s32.totalorder %s23, 0
      %p274 = por %p272, %p273
      %p275 = scmp.ne.s32.totalorder %s267, %s269
      %p276 = scmp.eq.s32.totalorder %s28, 1
      %p277 = por %p275, %p276
      %p278 = scmp.ne.s32.totalorder %s269, %s270
      %p279 = scmp.eq.s32.totalorder %s28, 0
      %p280 = por %p278, %p279
      %p281 = scmp.ne.s32.totalorder %s269, %s270
      %p282 = scmp.eq.s32.totalorder %s29, 1
      %p283 = por %p281, %p282
      %p285 = scmp.ne.s32.totalorder %s270, %s284
      %p286 = scmp.eq.s32.totalorder %s29, 0
      %p287 = por %p285, %p286
      %s289 = sadd.s32 %s288, 1
      %p292 = scmp.eq.s32.totalorder %s23, 1
      %p293 = scmp.ne.s32.totalorder %s288, %s290
      %p294 = scmp.eq.s32.totalorder %s23, 0
      %p295 = por %p293, %p294
      %p296 = scmp.ne.s32.totalorder %s288, %s290
      %p297 = scmp.eq.s32.totalorder %s28, 1
      %p298 = por %p296, %p297
      %p299 = scmp.ne.s32.totalorder %s290, %s291
      %p300 = scmp.eq.s32.totalorder %s28, 0
      %p301 = por %p299, %p300
      %p302 = scmp.ne.s32.totalorder %s290, %s291
      %p303 = scmp.eq.s32.totalorder %s29, 1
      %p304 = por %p302, %p303
      %p306 = scmp.ne.s32.totalorder %s291, %s305
      %p307 = scmp.eq.s32.totalorder %s29, 0
      %p308 = por %p306, %p307
      %s310 = sadd.s32 %s309, 1
      %p313 = scmp.eq.s32.totalorder %s23, 1
      %p314 = scmp.ne.s32.totalorder %s309, %s311
      %p315 = scmp.eq.s32.totalorder %s23, 0
      %p316 = por %p314, %p315
      %p317 = scmp.ne.s32.totalorder %s309, %s311
      %p318 = scmp.eq.s32.totalorder %s28, 1
      %p319 = por %p317, %p318
      %p320 = scmp.ne.s32.totalorder %s311, %s312
      %p321 = scmp.eq.s32.totalorder %s28, 0
      %p322 = por %p320, %p321
      %p323 = scmp.ne.s32.totalorder %s311, %s312
      %p324 = scmp.eq.s32.totalorder %s29, 1
      %p325 = por %p323, %p324
      %p327 = scmp.ne.s32.totalorder %s312, %s326
      %p328 = scmp.eq.s32.totalorder %s29, 0
      %p329 = por %p327, %p328
      %s331 = sadd.s32 %s330, 1
      %p334 = scmp.eq.s32.totalorder %s23, 1
      %p335 = scmp.ne.s32.totalorder %s330, %s332
      %p336 = scmp.eq.s32.totalorder %s23, 0
      %p337 = por %p335, %p336
      %p338 = scmp.ne.s32.totalorder %s330, %s332
      %p339 = scmp.eq.s32.totalorder %s28, 1
      %p340 = por %p338, %p339
      %p341 = scmp.ne.s32.totalorder %s332, %s333
      %p342 = scmp.eq.s32.totalorder %s28, 0
      %p343 = por %p341, %p342
      %p344 = scmp.ne.s32.totalorder %s332, %s333
      %p345 = scmp.eq.s32.totalorder %s29, 1
      %p346 = por %p344, %p345
      %p348 = scmp.ne.s32.totalorder %s333, %s347
      %p349 = scmp.eq.s32.totalorder %s29, 0
      %p350 = por %p348, %p349
      %s351 = ssub.s32 %s23, %s30
      %p352 = scmp.eq.s32.totalorder %s351, 0
      %s354 = sadd.s32 %s353, 1
      %s355 = scalar_select %p352, %s353, %s354
      %p358 = pneg %p352
      %p359 = scmp.eq.s32.totalorder %s23, 1
      %p360 = por %p358, %p359
      %p361 = scmp.ne.s32.totalorder %s353, %s356
      %p362 = scmp.eq.s32.totalorder %s23, 0
      %p363 = por %p361, %p362
      %p364 = scmp.ne.s32.totalorder %s353, %s356
      %p365 = scmp.eq.s32.totalorder %s28, 1
      %p366 = por %p364, %p365
      %p367 = scmp.ne.s32.totalorder %s356, %s357
      %p368 = scmp.eq.s32.totalorder %s28, 0
      %p369 = por %p367, %p368
      %p370 = scmp.ne.s32.totalorder %s356, %s357
      %p371 = scmp.eq.s32.totalorder %s29, 1
      %p372 = por %p370, %p371
      %p374 = scmp.ne.s32.totalorder %s357, %s373
      %p375 = scmp.eq.s32.totalorder %s29, 0
      %p376 = por %p374, %p375
      %p377 = scmp.le.s32.totalorder 1, %s23
      %p378 = scmp.lt.s32.totalorder %s23, 3
      %p379 = pnand %p377, %p378
      %p380 = pneg %p379
      // Predicated region
      $region9: #{tpu_custom_call.1} parent=5 // pred_check
        _
      $region10: #{tpu_custom_call.1} parent=5 // pred_check_branch
        %382 = sbr.rel (%p379) target = $region12
      $region11: #{tpu_custom_call.1} parent=5 // pred_region
        %s383 = ssub.s32 %s23, 1
        // Predicated region
        $region13: #{tpu_custom_call.1} parent=11 // pred_check
          %p384 = pneg %p70
        $region14: #{tpu_custom_call.1} parent=11 // pred_check_branch
          %386 = sbr.rel (%p384) target = $region16
        $region15: #{tpu_custom_call.1} parent=11 // pred_region
          _
        $region16: #{tpu_custom_call.1} parent=11 // pred_fallthru
          _
        // Predicated region
        $region17: #{tpu_custom_call.1} parent=11 // pred_check
          %p387 = pneg %p91
        $region18: #{tpu_custom_call.1} parent=11 // pred_check_branch
          %389 = sbr.rel (%p387) target = $region20
        $region19: #{tpu_custom_call.1} parent=11 // pred_region
          _
        $region20: #{tpu_custom_call.1} parent=11 // pred_fallthru
          _
        // Predicated region
        $region21: #{tpu_custom_call.1} parent=11 // pred_check
          %p390 = pneg %p112
        $region22: #{tpu_custom_call.1} parent=11 // pred_check_branch
          %392 = sbr.rel (%p390) target = $region24
        $region23: #{tpu_custom_call.1} parent=11 // pred_region
          _
        $region24: #{tpu_custom_call.1} parent=11 // pred_fallthru
          _
        // Predicated region
        $region25: #{tpu_custom_call.1} parent=11 // pred_check
          %p393 = pneg %p133
        $region26: #{tpu_custom_call.1} parent=11 // pred_check_branch
          %395 = sbr.rel (%p393) target = $region28
        $region27: #{tpu_custom_call.1} parent=11 // pred_region
          _
        $region28: #{tpu_custom_call.1} parent=11 // pred_fallthru
          _
        // Predicated region
        $region29: #{tpu_custom_call.1} parent=11 // pred_check
          %p396 = pneg %p154
        $region30: #{tpu_custom_call.1} parent=11 // pred_check_branch
          %398 = sbr.rel (%p396) target = $region32
        $region31: #{tpu_custom_call.1} parent=11 // pred_region
          %s400 = ssub.s32 2048, 2048
          %401 = vsyncadd [#allocation3], %s400
          %s402 = sshll.u32 [#allocation2], 4
          %s403 = int_to_ptr.vmem [resolvable:$true] %s402
          %408 = dma.hbm_to_vmem [thread:$0]  %s5, 2048, %s403, [#allocation3], 128, 128, 8
        $region32: #{tpu_custom_call.1} parent=11 // pred_fallthru
          _
        // Predicated region
        $region33: #{tpu_custom_call.1} parent=11 // pred_check
          %p409 = pneg %p175
        $region34: #{tpu_custom_call.1} parent=11 // pred_check_branch
          %411 = sbr.rel (%p409) target = $region36
        $region35: #{tpu_custom_call.1} parent=11 // pred_region
          _
        $region36: #{tpu_custom_call.1} parent=11 // pred_fallthru
          _
        // Predicated region
        $region37: #{tpu_custom_call.1} parent=11 // pred_check
          %p412 = pneg %p196
        $region38: #{tpu_custom_call.1} parent=11 // pred_check_branch
          %414 = sbr.rel (%p412) target = $region40
        $region39: #{tpu_custom_call.1} parent=11 // pred_region
          %s416 = ssub.s32 2048, 2048
          %417 = vsyncadd [#allocation5], %s416
          %s418 = sshll.u32 [#allocation4], 4
          %s419 = int_to_ptr.vmem [resolvable:$true] %s418
          %424 = dma.hbm_to_vmem [thread:$0]  %s7, 2048, %s419, [#allocation5], 64, 64, 4
        $region40: #{tpu_custom_call.1} parent=11 // pred_fallthru
          _
        // Predicated region
        $region41: #{tpu_custom_call.1} parent=11 // pred_check
          %p425 = pneg %p217
        $region42: #{tpu_custom_call.1} parent=11 // pred_check_branch
          %427 = sbr.rel (%p425) target = $region44
        $region43: #{tpu_custom_call.1} parent=11 // pred_region
          _
        $region44: #{tpu_custom_call.1} parent=11 // pred_fallthru
          _
        // Predicated region
        $region45: #{tpu_custom_call.1} parent=11 // pred_check
          %p428 = pneg %p238
        $region46: #{tpu_custom_call.1} parent=11 // pred_check_branch
          %430 = sbr.rel (%p428) target = $region48
        $region47: #{tpu_custom_call.1} parent=11 // pred_region
          _
        $region48: #{tpu_custom_call.1} parent=11 // pred_fallthru
          _
        // Predicated region
        $region49: #{tpu_custom_call.1} parent=11 // pred_check
          %p431 = pneg %p259
        $region50: #{tpu_custom_call.1} parent=11 // pred_check_branch
          %433 = sbr.rel (%p431) target = $region52
        $region51: #{tpu_custom_call.1} parent=11 // pred_region
          _
        $region52: #{tpu_custom_call.1} parent=11 // pred_fallthru
          _
        // Predicated region
        $region53: #{tpu_custom_call.1} parent=11 // pred_check
          %p434 = pneg %p280
        $region54: #{tpu_custom_call.1} parent=11 // pred_check_branch
          %436 = sbr.rel (%p434) target = $region56
        $region55: #{tpu_custom_call.1} parent=11 // pred_region
          %s438 = ssub.s32 2048, 2048
          %439 = vsyncadd [#allocation5], %s438
          %s440 = sshll.u32 [#allocation6], 4
          %s441 = int_to_ptr.vmem [resolvable:$true] %s440
          %446 = dma.hbm_to_vmem [thread:$0]  %s11, 2048, %s441, [#allocation5], 64, 64, 4
        $region56: #{tpu_custom_call.1} parent=11 // pred_fallthru
          _
        // Predicated region
        $region57: #{tpu_custom_call.1} parent=11 // pred_check
          %p447 = pneg %p301
        $region58: #{tpu_custom_call.1} parent=11 // pred_check_branch
          %449 = sbr.rel (%p447) target = $region60
        $region59: #{tpu_custom_call.1} parent=11 // pred_region
          _
        $region60: #{tpu_custom_call.1} parent=11 // pred_fallthru
          _
        // Predicated region
        $region61: #{tpu_custom_call.1} parent=11 // pred_check
          %p450 = pneg %p322
        $region62: #{tpu_custom_call.1} parent=11 // pred_check_branch
          %452 = sbr.rel (%p450) target = $region64
        $region63: #{tpu_custom_call.1} parent=11 // pred_region
          _
        $region64: #{tpu_custom_call.1} parent=11 // pred_fallthru
          _
        // Predicated region
        $region65: #{tpu_custom_call.1} parent=11 // pred_check
          %p453 = pneg %p343
        $region66: #{tpu_custom_call.1} parent=11 // pred_check_branch
          %455 = sbr.rel (%p453) target = $region68
        $region67: #{tpu_custom_call.1} parent=11 // pred_region
          _
        $region68: #{tpu_custom_call.1} parent=11 // pred_fallthru
          _
      $region12: #{tpu_custom_call.1} parent=5 // pred_fallthru
        _
      %p456 = scmp.lt.s32.totalorder %s23, 2
      // Predicated region
      $region69: #{tpu_custom_call.1} parent=5 // pred_check
        %p457 = pneg %p456
      $region70: #{tpu_custom_call.1} parent=5 // pred_check_branch
        %459 = sbr.rel (%p457) target = $region72
      $region71: #{tpu_custom_call.1} parent=5 // pred_region
        // Predicated region
        $region73: #{tpu_custom_call.1} parent=71 // pred_check
          %p460 = pneg %p43
        $region74: #{tpu_custom_call.1} parent=71 // pred_check_branch
          %462 = sbr.rel (%p460) target = $region76
        $region75: #{tpu_custom_call.1} parent=71 // pred_region
          %s463 = smul.u32 32, %s23
          %p464 = scmp.lt.s32.totalorder %s463, 63
          %s465 = scalar_select %p464, %s463, 63
          %s466 = smul.addr %s465, 8
          %s467 = scalar_lea.vmem %s0, %s466
          %s468 = smul.u32 32, %s23
        $region76: #{tpu_custom_call.1} parent=71 // pred_fallthru
          _
      $region72: #{tpu_custom_call.1} parent=5 // pred_fallthru
        _
      %p469 = scmp.le.s32.totalorder 1, %s23
      %p470 = scmp.lt.s32.totalorder %s23, 3
      %p471 = pnand %p469, %p470
      %p472 = pneg %p471
      // Predicated region
      $region77: #{tpu_custom_call.1} parent=5 // pred_check
        _
      $region78: #{tpu_custom_call.1} parent=5 // pred_check_branch
        %474 = sbr.rel (%p471) target = $region80
      $region79: #{tpu_custom_call.1} parent=5 // pred_region
        %s475 = ssub.s32 %s23, 1
        // Predicated region
        $region81: #{tpu_custom_call.1} parent=79 // pred_check
          %p476 = pneg %p154
        $region82: #{tpu_custom_call.1} parent=79 // pred_check_branch
          %478 = sbr.rel (%p476) target = $region84
        $region83: #{tpu_custom_call.1} parent=79 // pred_region
          %479 = dma.done [#allocation3], 2048
        $region84: #{tpu_custom_call.1} parent=79 // pred_fallthru
          _
        // Predicated region
        $region85: #{tpu_custom_call.1} parent=79 // pred_check
          %p480 = pneg %p196
        $region86: #{tpu_custom_call.1} parent=79 // pred_check_branch
          %482 = sbr.rel (%p480) target = $region88
        $region87: #{tpu_custom_call.1} parent=79 // pred_region
          %483 = dma.done [#allocation5], 2048
        $region88: #{tpu_custom_call.1} parent=79 // pred_fallthru
          _
        // Predicated region
        $region89: #{tpu_custom_call.1} parent=79 // pred_check
          %p484 = pneg %p280
        $region90: #{tpu_custom_call.1} parent=79 // pred_check_branch
          %486 = sbr.rel (%p484) target = $region92
        $region91: #{tpu_custom_call.1} parent=79 // pred_region
          %487 = dma.done [#allocation5], 2048
        $region92: #{tpu_custom_call.1} parent=79 // pred_fallthru
          _
        %s488 = smul.u32 32, %s28
        %p489 = scmp.lt.s32.totalorder %s488, 63
        %s490 = scalar_select %p489, %s488, 63
        %s491 = smul.addr %s490, 8
        %s492 = scalar_lea.vmem %s0, %s491
        %p493 = pneg %p49
        %p494 = pneg %p46
        %p495 = pneg %p70
        %p496 = pneg %p67
        %p497 = pneg %p91
        %p498 = pneg %p88
        %p499 = pneg %p112
        %p500 = pneg %p109
        %p501 = pneg %p133
        %p502 = pneg %p130
        %p503 = pneg %p154
        %p504 = pneg %p151
        %p505 = pneg %p175
        %p506 = pneg %p172
        %p507 = pneg %p196
        %p508 = pneg %p193
        %p509 = pneg %p217
        %p510 = pneg %p214
        %p511 = pneg %p238
        %p512 = pneg %p235
        %p513 = pneg %p259
        %p514 = pneg %p256
        %p515 = pneg %p280
        %p516 = pneg %p277
        %p517 = pneg %p301
        %p518 = pneg %p298
        %p519 = pneg %p322
        %p520 = pneg %p319
        %p521 = pneg %p343
        %p522 = pneg %p340
        %p523 = pneg %p369
        %p524 = pneg %p366
        %s525 = smul.u32 32, %s28
        %p526 = scmp.lt.s32.totalorder %s525, 63
        %s527 = scalar_select %p526, %s525, 63
        %s528 = smul.addr %s527, 8
        %s529 = scalar_lea.vmem %s15, %s528
        %s530 = smul.u32 32, %s28
        %p531 = scmp.lt.s32.totalorder %s530, 63
        %s532 = scalar_select %p531, %s530, 63
        %s533 = smul.addr %s532, 8
        %s534 = scalar_lea.vmem %s0, %s533
        %s535 = smul.u32 32, %s28
        %s536 = smul.u32 32, %s28
        %p537 = scmp.lt.s32.totalorder %s536, 63
        %s538 = scalar_select %p537, %s536, 63
        %s539 = smul.addr %s538, 8
        %s540 = scalar_lea.vmem %s15, %s539
        %s541 = smul.u32 32, %s28
        %v543 = vld [vmem:[%s534] sm:$0xff]
        %v544 = vld [vmem:[%s534 + $0x8] sm:$0xff]
        %v545 = vld [vmem:[%s534 + $0x10] sm:$0xff]
        %v546 = vld [vmem:[%s534 + $0x18] sm:$0xff]
        %v547 = vld [vmem:[%s534 + $0x20] sm:$0xff]
        %v548 = vld [vmem:[%s534 + $0x28] sm:$0xff]
        %v549 = vld [vmem:[%s534 + $0x30] sm:$0xff]
        %v550 = vld [vmem:[%s534 + $0x38] sm:$0xff]
        %v551 = vld [vmem:[%s534 + $0x40] sm:$0xff]
        %v552 = vld [vmem:[%s534 + $0x48] sm:$0xff]
        %v553 = vld [vmem:[%s534 + $0x50] sm:$0xff]
        %v554 = vld [vmem:[%s534 + $0x58] sm:$0xff]
        %v555 = vld [vmem:[%s534 + $0x60] sm:$0xff]
        %v556 = vld [vmem:[%s534 + $0x68] sm:$0xff]
        %v557 = vld [vmem:[%s534 + $0x70] sm:$0xff]
        %v558 = vld [vmem:[%s534 + $0x78] sm:$0xff]
        %v559 = vld [vmem:[%s534 + $0x80] sm:$0xff]
        %v560 = vld [vmem:[%s534 + $0x88] sm:$0xff]
        %v561 = vld [vmem:[%s534 + $0x90] sm:$0xff]
        %v562 = vld [vmem:[%s534 + $0x98] sm:$0xff]
        %v563 = vld [vmem:[%s534 + $0xa0] sm:$0xff]
        %v564 = vld [vmem:[%s534 + $0xa8] sm:$0xff]
        %v565 = vld [vmem:[%s534 + $0xb0] sm:$0xff]
        %v566 = vld [vmem:[%s534 + $0xb8] sm:$0xff]
        %v567 = vld [vmem:[%s534 + $0xc0] sm:$0xff]
        %v568 = vld [vmem:[%s534 + $0xc8] sm:$0xff]
        %v569 = vld [vmem:[%s534 + $0xd0] sm:$0xff]
        %v570 = vld [vmem:[%s534 + $0xd8] sm:$0xff]
        %v571 = vld [vmem:[%s534 + $0xe0] sm:$0xff]
        %v572 = vld [vmem:[%s534 + $0xe8] sm:$0xff]
        %v573 = vld [vmem:[%s534 + $0xf0] sm:$0xff]
        %v574 = vld [vmem:[%s534 + $0xf8] sm:$0xff]
        %v575 = vld [vmem:[%s1] sm:$0x1]
        %577 = vset.pattern.permute.xlu0 0
        %578 = vperm.xlu0 %577, %v543
        %v579 = vpop.permute.xlu0 %578
        %582 = vset.pattern.permute.xlu0 0
        %583 = vperm.xlu0 %582, %v544
        %v584 = vpop.permute.xlu0 %583
        %587 = vset.pattern.permute.xlu0 0
        %588 = vperm.xlu0 %587, %v545
        %v589 = vpop.permute.xlu0 %588
        %592 = vset.pattern.permute.xlu0 0
        %593 = vperm.xlu0 %592, %v546
        %v594 = vpop.permute.xlu0 %593
        %597 = vset.pattern.permute.xlu0 0
        %598 = vperm.xlu0 %597, %v547
        %v599 = vpop.permute.xlu0 %598
        %602 = vset.pattern.permute.xlu0 0
        %603 = vperm.xlu0 %602, %v548
        %v604 = vpop.permute.xlu0 %603
        %607 = vset.pattern.permute.xlu0 0
        %608 = vperm.xlu0 %607, %v549
        %v609 = vpop.permute.xlu0 %608
        %612 = vset.pattern.permute.xlu0 0
        %613 = vperm.xlu0 %612, %v550
        %v614 = vpop.permute.xlu0 %613
        %617 = vset.pattern.permute.xlu0 0
        %618 = vperm.xlu0 %617, %v551
        %v619 = vpop.permute.xlu0 %618
        %622 = vset.pattern.permute.xlu0 0
        %623 = vperm.xlu0 %622, %v552
        %v624 = vpop.permute.xlu0 %623
        %627 = vset.pattern.permute.xlu0 0
        %628 = vperm.xlu0 %627, %v553
        %v629 = vpop.permute.xlu0 %628
        %632 = vset.pattern.permute.xlu0 0
        %633 = vperm.xlu0 %632, %v554
        %v634 = vpop.permute.xlu0 %633
        %637 = vset.pattern.permute.xlu0 0
        %638 = vperm.xlu0 %637, %v555
        %v639 = vpop.permute.xlu0 %638
        %642 = vset.pattern.permute.xlu0 0
        %643 = vperm.xlu0 %642, %v556
        %v644 = vpop.permute.xlu0 %643
        %647 = vset.pattern.permute.xlu0 0
        %648 = vperm.xlu0 %647, %v557
        %v649 = vpop.permute.xlu0 %648
        %652 = vset.pattern.permute.xlu0 0
        %653 = vperm.xlu0 %652, %v558
        %v654 = vpop.permute.xlu0 %653
        %657 = vset.pattern.permute.xlu0 0
        %658 = vperm.xlu0 %657, %v559
        %v659 = vpop.permute.xlu0 %658
        %662 = vset.pattern.permute.xlu0 0
        %663 = vperm.xlu0 %662, %v560
        %v664 = vpop.permute.xlu0 %663
        %667 = vset.pattern.permute.xlu0 0
        %668 = vperm.xlu0 %667, %v561
        %v669 = vpop.permute.xlu0 %668
        %672 = vset.pattern.permute.xlu0 0
        %673 = vperm.xlu0 %672, %v562
        %v674 = vpop.permute.xlu0 %673
        %677 = vset.pattern.permute.xlu0 0
        %678 = vperm.xlu0 %677, %v563
        %v679 = vpop.permute.xlu0 %678
        %682 = vset.pattern.permute.xlu0 0
        %683 = vperm.xlu0 %682, %v564
        %v684 = vpop.permute.xlu0 %683
        %687 = vset.pattern.permute.xlu0 0
        %688 = vperm.xlu0 %687, %v565
        %v689 = vpop.permute.xlu0 %688
        %692 = vset.pattern.permute.xlu0 0
        %693 = vperm.xlu0 %692, %v566
        %v694 = vpop.permute.xlu0 %693
        %697 = vset.pattern.permute.xlu0 0
        %698 = vperm.xlu0 %697, %v567
        %v699 = vpop.permute.xlu0 %698
        %702 = vset.pattern.permute.xlu0 0
        %703 = vperm.xlu0 %702, %v568
        %v704 = vpop.permute.xlu0 %703
        %707 = vset.pattern.permute.xlu0 0
        %708 = vperm.xlu0 %707, %v569
        %v709 = vpop.permute.xlu0 %708
        %712 = vset.pattern.permute.xlu0 0
        %713 = vperm.xlu0 %712, %v570
        %v714 = vpop.permute.xlu0 %713
        %717 = vset.pattern.permute.xlu0 0
        %718 = vperm.xlu0 %717, %v571
        %v719 = vpop.permute.xlu0 %718
        %722 = vset.pattern.permute.xlu0 0
        %723 = vperm.xlu0 %722, %v572
        %v724 = vpop.permute.xlu0 %723
        %727 = vset.pattern.permute.xlu0 0
        %728 = vperm.xlu0 %727, %v573
        %v729 = vpop.permute.xlu0 %728
        %732 = vset.pattern.permute.xlu0 0
        %733 = vperm.xlu0 %732, %v574
        %v734 = vpop.permute.xlu0 %733
        %v736 = vlaneseq
        %v737 = vshrl.u32 %v736, 7
        %v738 = vsub.s32 0, %v737
        %v739 = vrot.slane %v575, %v738
        %v740 = vmul.f32 %v579, %v739
        %v741 = vmul.f32 %v584, %v739
        %v742 = vmul.f32 %v589, %v739
        %v743 = vmul.f32 %v594, %v739
        %v744 = vmul.f32 %v599, %v739
        %v745 = vmul.f32 %v604, %v739
        %v746 = vmul.f32 %v609, %v739
        %v747 = vmul.f32 %v614, %v739
        %v748 = vmul.f32 %v619, %v739
        %v749 = vmul.f32 %v624, %v739
        %v750 = vmul.f32 %v629, %v739
        %v751 = vmul.f32 %v634, %v739
        %v752 = vmul.f32 %v639, %v739
        %v753 = vmul.f32 %v644, %v739
        %v754 = vmul.f32 %v649, %v739
        %v755 = vmul.f32 %v654, %v739
        %v756 = vmul.f32 %v659, %v739
        %v757 = vmul.f32 %v664, %v739
        %v758 = vmul.f32 %v669, %v739
        %v759 = vmul.f32 %v674, %v739
        %v760 = vmul.f32 %v679, %v739
        %v761 = vmul.f32 %v684, %v739
        %v762 = vmul.f32 %v689, %v739
        %v763 = vmul.f32 %v694, %v739
        %v764 = vmul.f32 %v699, %v739
        %v765 = vmul.f32 %v704, %v739
        %v766 = vmul.f32 %v709, %v739
        %v767 = vmul.f32 %v714, %v739
        %v768 = vmul.f32 %v719, %v739
        %v769 = vmul.f32 %v724, %v739
        %v770 = vmul.f32 %v729, %v739
        %v771 = vmul.f32 %v734, %v739
        %v772 = vld [vmem:[%s1 + $0x1] sm:$0x1]
        %773 = vset.pattern.permute.xlu0 1
        %774 = vperm.xlu0 %773, %v543
        %v775 = vpop.permute.xlu0 %774
        %777 = vset.pattern.permute.xlu0 1
        %778 = vperm.xlu0 %777, %v544
        %v779 = vpop.permute.xlu0 %778
        %781 = vset.pattern.permute.xlu0 1
        %782 = vperm.xlu0 %781, %v545
        %v783 = vpop.permute.xlu0 %782
        %785 = vset.pattern.permute.xlu0 1
        %786 = vperm.xlu0 %785, %v546
        %v787 = vpop.permute.xlu0 %786
        %789 = vset.pattern.permute.xlu0 1
        %790 = vperm.xlu0 %789, %v547
        %v791 = vpop.permute.xlu0 %790
        %793 = vset.pattern.permute.xlu0 1
        %794 = vperm.xlu0 %793, %v548
        %v795 = vpop.permute.xlu0 %794
        %797 = vset.pattern.permute.xlu0 1
        %798 = vperm.xlu0 %797, %v549
        %v799 = vpop.permute.xlu0 %798
        %801 = vset.pattern.permute.xlu0 1
        %802 = vperm.xlu0 %801, %v550
        %v803 = vpop.permute.xlu0 %802
        %805 = vset.pattern.permute.xlu0 1
        %806 = vperm.xlu0 %805, %v551
        %v807 = vpop.permute.xlu0 %806
        %809 = vset.pattern.permute.xlu0 1
        %810 = vperm.xlu0 %809, %v552
        %v811 = vpop.permute.xlu0 %810
        %813 = vset.pattern.permute.xlu0 1
        %814 = vperm.xlu0 %813, %v553
        %v815 = vpop.permute.xlu0 %814
        %817 = vset.pattern.permute.xlu0 1
        %818 = vperm.xlu0 %817, %v554
        %v819 = vpop.permute.xlu0 %818
        %821 = vset.pattern.permute.xlu0 1
        %822 = vperm.xlu0 %821, %v555
        %v823 = vpop.permute.xlu0 %822
        %825 = vset.pattern.permute.xlu0 1
        %826 = vperm.xlu0 %825, %v556
        %v827 = vpop.permute.xlu0 %826
        %829 = vset.pattern.permute.xlu0 1
        %830 = vperm.xlu0 %829, %v557
        %v831 = vpop.permute.xlu0 %830
        %833 = vset.pattern.permute.xlu0 1
        %834 = vperm.xlu0 %833, %v558
        %v835 = vpop.permute.xlu0 %834
        %837 = vset.pattern.permute.xlu0 1
        %838 = vperm.xlu0 %837, %v559
        %v839 = vpop.permute.xlu0 %838
        %841 = vset.pattern.permute.xlu0 1
        %842 = vperm.xlu0 %841, %v560
        %v843 = vpop.permute.xlu0 %842
        %845 = vset.pattern.permute.xlu0 1
        %846 = vperm.xlu0 %845, %v561
        %v847 = vpop.permute.xlu0 %846
        %849 = vset.pattern.permute.xlu0 1
        %850 = vperm.xlu0 %849, %v562
        %v851 = vpop.permute.xlu0 %850
        %853 = vset.pattern.permute.xlu0 1
        %854 = vperm.xlu0 %853, %v563
        %v855 = vpop.permute.xlu0 %854
        %857 = vset.pattern.permute.xlu0 1
        %858 = vperm.xlu0 %857, %v564
        %v859 = vpop.permute.xlu0 %858
        %861 = vset.pattern.permute.xlu0 1
        %862 = vperm.xlu0 %861, %v565
        %v863 = vpop.permute.xlu0 %862
        %865 = vset.pattern.permute.xlu0 1
        %866 = vperm.xlu0 %865, %v566
        %v867 = vpop.permute.xlu0 %866
        %869 = vset.pattern.permute.xlu0 1
        %870 = vperm.xlu0 %869, %v567
        %v871 = vpop.permute.xlu0 %870
        %873 = vset.pattern.permute.xlu0 1
        %874 = vperm.xlu0 %873, %v568
        %v875 = vpop.permute.xlu0 %874
        %877 = vset.pattern.permute.xlu0 1
        %878 = vperm.xlu0 %877, %v569
        %v879 = vpop.permute.xlu0 %878
        %881 = vset.pattern.permute.xlu0 1
        %882 = vperm.xlu0 %881, %v570
        %v883 = vpop.permute.xlu0 %882
        %885 = vset.pattern.permute.xlu0 1
        %886 = vperm.xlu0 %885, %v571
        %v887 = vpop.permute.xlu0 %886
        %889 = vset.pattern.permute.xlu0 1
        %890 = vperm.xlu0 %889, %v572
        %v891 = vpop.permute.xlu0 %890
        %893 = vset.pattern.permute.xlu0 1
        %894 = vperm.xlu0 %893, %v573
        %v895 = vpop.permute.xlu0 %894
        %897 = vset.pattern.permute.xlu0 1
        %898 = vperm.xlu0 %897, %v574
        %v899 = vpop.permute.xlu0 %898
        %v901 = vlaneseq
        %v902 = vshrl.u32 %v901, 7
        %v903 = vsub.s32 0, %v902
        %v904 = vrot.slane %v772, %v903
        %v905 = vmul.f32 %v775, %v904
        %v906 = vmul.f32 %v779, %v904
        %v907 = vmul.f32 %v783, %v904
        %v908 = vmul.f32 %v787, %v904
        %v909 = vmul.f32 %v791, %v904
        %v910 = vmul.f32 %v795, %v904
        %v911 = vmul.f32 %v799, %v904
        %v912 = vmul.f32 %v803, %v904
        %v913 = vmul.f32 %v807, %v904
        %v914 = vmul.f32 %v811, %v904
        %v915 = vmul.f32 %v815, %v904
        %v916 = vmul.f32 %v819, %v904
        %v917 = vmul.f32 %v823, %v904
        %v918 = vmul.f32 %v827, %v904
        %v919 = vmul.f32 %v831, %v904
        %v920 = vmul.f32 %v835, %v904
        %v921 = vmul.f32 %v839, %v904
        %v922 = vmul.f32 %v843, %v904
        %v923 = vmul.f32 %v847, %v904
        %v924 = vmul.f32 %v851, %v904
        %v925 = vmul.f32 %v855, %v904
        %v926 = vmul.f32 %v859, %v904
        %v927 = vmul.f32 %v863, %v904
        %v928 = vmul.f32 %v867, %v904
        %v929 = vmul.f32 %v871, %v904
        %v930 = vmul.f32 %v875, %v904
        %v931 = vmul.f32 %v879, %v904
        %v932 = vmul.f32 %v883, %v904
        %v933 = vmul.f32 %v887, %v904
        %v934 = vmul.f32 %v891, %v904
        %v935 = vmul.f32 %v895, %v904
        %v936 = vmul.f32 %v899, %v904
        %v937 = vadd.f32 %v740, %v905
        %v938 = vadd.f32 %v741, %v906
        %v939 = vadd.f32 %v742, %v907
        %v940 = vadd.f32 %v743, %v908
        %v941 = vadd.f32 %v744, %v909
        %v942 = vadd.f32 %v745, %v910
        %v943 = vadd.f32 %v746, %v911
        %v944 = vadd.f32 %v747, %v912
        %v945 = vadd.f32 %v748, %v913
        %v946 = vadd.f32 %v749, %v914
        %v947 = vadd.f32 %v750, %v915
        %v948 = vadd.f32 %v751, %v916
        %v949 = vadd.f32 %v752, %v917
        %v950 = vadd.f32 %v753, %v918
        %v951 = vadd.f32 %v754, %v919
        %v952 = vadd.f32 %v755, %v920
        %v953 = vadd.f32 %v756, %v921
        %v954 = vadd.f32 %v757, %v922
        %v955 = vadd.f32 %v758, %v923
        %v956 = vadd.f32 %v759, %v924
        %v957 = vadd.f32 %v760, %v925
        %v958 = vadd.f32 %v761, %v926
        %v959 = vadd.f32 %v762, %v927
        %v960 = vadd.f32 %v763, %v928
        %v961 = vadd.f32 %v764, %v929
        %v962 = vadd.f32 %v765, %v930
        %v963 = vadd.f32 %v766, %v931
        %v964 = vadd.f32 %v767, %v932
        %v965 = vadd.f32 %v768, %v933
        %v966 = vadd.f32 %v769, %v934
        %v967 = vadd.f32 %v770, %v935
        %v968 = vadd.f32 %v771, %v936
        %v969 = vld [vmem:[%s1 + $0x2] sm:$0x1]
        %970 = vset.pattern.permute.xlu0 2
        %971 = vperm.xlu0 %970, %v543
        %v972 = vpop.permute.xlu0 %971
        %974 = vset.pattern.permute.xlu0 2
        %975 = vperm.xlu0 %974, %v544
        %v976 = vpop.permute.xlu0 %975
        %978 = vset.pattern.permute.xlu0 2
        %979 = vperm.xlu0 %978, %v545
        %v980 = vpop.permute.xlu0 %979
        %982 = vset.pattern.permute.xlu0 2
        %983 = vperm.xlu0 %982, %v546
        %v984 = vpop.permute.xlu0 %983
        %986 = vset.pattern.permute.xlu0 2
        %987 = vperm.xlu0 %986, %v547
        %v988 = vpop.permute.xlu0 %987
        %990 = vset.pattern.permute.xlu0 2
        %991 = vperm.xlu0 %990, %v548
        %v992 = vpop.permute.xlu0 %991
        %994 = vset.pattern.permute.xlu0 2
        %995 = vperm.xlu0 %994, %v549
        %v996 = vpop.permute.xlu0 %995
        %998 = vset.pattern.permute.xlu0 2
        %999 = vperm.xlu0 %998, %v550
        %v1000 = vpop.permute.xlu0 %999
        %1002 = vset.pattern.permute.xlu0 2
        %1003 = vperm.xlu0 %1002, %v551
        %v1004 = vpop.permute.xlu0 %1003
        %1006 = vset.pattern.permute.xlu0 2
        %1007 = vperm.xlu0 %1006, %v552
        %v1008 = vpop.permute.xlu0 %1007
        %1010 = vset.pattern.permute.xlu0 2
        %1011 = vperm.xlu0 %1010, %v553
        %v1012 = vpop.permute.xlu0 %1011
        %1014 = vset.pattern.permute.xlu0 2
        %1015 = vperm.xlu0 %1014, %v554
        %v1016 = vpop.permute.xlu0 %1015
        %1018 = vset.pattern.permute.xlu0 2
        %1019 = vperm.xlu0 %1018, %v555
        %v1020 = vpop.permute.xlu0 %1019
        %1022 = vset.pattern.permute.xlu0 2
        %1023 = vperm.xlu0 %1022, %v556
        %v1024 = vpop.permute.xlu0 %1023
        %1026 = vset.pattern.permute.xlu0 2
        %1027 = vperm.xlu0 %1026, %v557
        %v1028 = vpop.permute.xlu0 %1027
        %1030 = vset.pattern.permute.xlu0 2
        %1031 = vperm.xlu0 %1030, %v558
        %v1032 = vpop.permute.xlu0 %1031
        %1034 = vset.pattern.permute.xlu0 2
        %1035 = vperm.xlu0 %1034, %v559
        %v1036 = vpop.permute.xlu0 %1035
        %1038 = vset.pattern.permute.xlu0 2
        %1039 = vperm.xlu0 %1038, %v560
        %v1040 = vpop.permute.xlu0 %1039
        %1042 = vset.pattern.permute.xlu0 2
        %1043 = vperm.xlu0 %1042, %v561
        %v1044 = vpop.permute.xlu0 %1043
        %1046 = vset.pattern.permute.xlu0 2
        %1047 = vperm.xlu0 %1046, %v562
        %v1048 = vpop.permute.xlu0 %1047
        %1050 = vset.pattern.permute.xlu0 2
        %1051 = vperm.xlu0 %1050, %v563
        %v1052 = vpop.permute.xlu0 %1051
        %1054 = vset.pattern.permute.xlu0 2
        %1055 = vperm.xlu0 %1054, %v564
        %v1056 = vpop.permute.xlu0 %1055
        %1058 = vset.pattern.permute.xlu0 2
        %1059 = vperm.xlu0 %1058, %v565
        %v1060 = vpop.permute.xlu0 %1059
        %1062 = vset.pattern.permute.xlu0 2
        %1063 = vperm.xlu0 %1062, %v566
        %v1064 = vpop.permute.xlu0 %1063
        %1066 = vset.pattern.permute.xlu0 2
        %1067 = vperm.xlu0 %1066, %v567
        %v1068 = vpop.permute.xlu0 %1067
        %1070 = vset.pattern.permute.xlu0 2
        %1071 = vperm.xlu0 %1070, %v568
        %v1072 = vpop.permute.xlu0 %1071
        %1074 = vset.pattern.permute.xlu0 2
        %1075 = vperm.xlu0 %1074, %v569
        %v1076 = vpop.permute.xlu0 %1075
        %1078 = vset.pattern.permute.xlu0 2
        %1079 = vperm.xlu0 %1078, %v570
        %v1080 = vpop.permute.xlu0 %1079
        %1082 = vset.pattern.permute.xlu0 2
        %1083 = vperm.xlu0 %1082, %v571
        %v1084 = vpop.permute.xlu0 %1083
        %1086 = vset.pattern.permute.xlu0 2
        %1087 = vperm.xlu0 %1086, %v572
        %v1088 = vpop.permute.xlu0 %1087
        %1090 = vset.pattern.permute.xlu0 2
        %1091 = vperm.xlu0 %1090, %v573
        %v1092 = vpop.permute.xlu0 %1091
        %1094 = vset.pattern.permute.xlu0 2
        %1095 = vperm.xlu0 %1094, %v574
        %v1096 = vpop.permute.xlu0 %1095
        %v1098 = vlaneseq
        %v1099 = vshrl.u32 %v1098, 7
        %v1100 = vsub.s32 0, %v1099
        %v1101 = vrot.slane %v969, %v1100
        %v1102 = vmul.f32 %v972, %v1101
        %v1103 = vmul.f32 %v976, %v1101
        %v1104 = vmul.f32 %v980, %v1101
        %v1105 = vmul.f32 %v984, %v1101
        %v1106 = vmul.f32 %v988, %v1101
        %v1107 = vmul.f32 %v992, %v1101
        %v1108 = vmul.f32 %v996, %v1101
        %v1109 = vmul.f32 %v1000, %v1101
        %v1110 = vmul.f32 %v1004, %v1101
        %v1111 = vmul.f32 %v1008, %v1101
        %v1112 = vmul.f32 %v1012, %v1101
        %v1113 = vmul.f32 %v1016, %v1101
        %v1114 = vmul.f32 %v1020, %v1101
        %v1115 = vmul.f32 %v1024, %v1101
        %v1116 = vmul.f32 %v1028, %v1101
        %v1117 = vmul.f32 %v1032, %v1101
        %v1118 = vmul.f32 %v1036, %v1101
        %v1119 = vmul.f32 %v1040, %v1101
        %v1120 = vmul.f32 %v1044, %v1101
        %v1121 = vmul.f32 %v1048, %v1101
        %v1122 = vmul.f32 %v1052, %v1101
        %v1123 = vmul.f32 %v1056, %v1101
        %v1124 = vmul.f32 %v1060, %v1101
        %v1125 = vmul.f32 %v1064, %v1101
        %v1126 = vmul.f32 %v1068, %v1101
        %v1127 = vmul.f32 %v1072, %v1101
        %v1128 = vmul.f32 %v1076, %v1101
        %v1129 = vmul.f32 %v1080, %v1101
        %v1130 = vmul.f32 %v1084, %v1101
        %v1131 = vmul.f32 %v1088, %v1101
        %v1132 = vmul.f32 %v1092, %v1101
        %v1133 = vmul.f32 %v1096, %v1101
        %v1134 = vadd.f32 %v937, %v1102
        %v1135 = vadd.f32 %v938, %v1103
        %v1136 = vadd.f32 %v939, %v1104
        %v1137 = vadd.f32 %v940, %v1105
        %v1138 = vadd.f32 %v941, %v1106
        %v1139 = vadd.f32 %v942, %v1107
        %v1140 = vadd.f32 %v943, %v1108
        %v1141 = vadd.f32 %v944, %v1109
        %v1142 = vadd.f32 %v945, %v1110
        %v1143 = vadd.f32 %v946, %v1111
        %v1144 = vadd.f32 %v947, %v1112
        %v1145 = vadd.f32 %v948, %v1113
        %v1146 = vadd.f32 %v949, %v1114
        %v1147 = vadd.f32 %v950, %v1115
        %v1148 = vadd.f32 %v951, %v1116
        %v1149 = vadd.f32 %v952, %v1117
        %v1150 = vadd.f32 %v953, %v1118
        %v1151 = vadd.f32 %v954, %v1119
        %v1152 = vadd.f32 %v955, %v1120
        %v1153 = vadd.f32 %v956, %v1121
        %v1154 = vadd.f32 %v957, %v1122
        %v1155 = vadd.f32 %v958, %v1123
        %v1156 = vadd.f32 %v959, %v1124
        %v1157 = vadd.f32 %v960, %v1125
        %v1158 = vadd.f32 %v961, %v1126
        %v1159 = vadd.f32 %v962, %v1127
        %v1160 = vadd.f32 %v963, %v1128
        %v1161 = vadd.f32 %v964, %v1129
        %v1162 = vadd.f32 %v965, %v1130
        %v1163 = vadd.f32 %v966, %v1131
        %v1164 = vadd.f32 %v967, %v1132
        %v1165 = vadd.f32 %v968, %v1133
        %v1166 = vld [vmem:[%s2] sm:$0x1]
        %v1168 = vlaneseq
        %v1169 = vshrl.u32 %v1168, 7
        %v1170 = vsub.s32 0, %v1169
        %v1171 = vrot.slane %v1166, %v1170
        %v1173 = vadd.f32 %v1134, %v1171
        %v1174 = vadd.f32 %v1135, %v1171
        %v1175 = vadd.f32 %v1136, %v1171
        %v1176 = vadd.f32 %v1137, %v1171
        %v1177 = vadd.f32 %v1138, %v1171
        %v1178 = vadd.f32 %v1139, %v1171
        %v1179 = vadd.f32 %v1140, %v1171
        %v1180 = vadd.f32 %v1141, %v1171
        %v1181 = vadd.f32 %v1142, %v1171
        %v1182 = vadd.f32 %v1143, %v1171
        %v1183 = vadd.f32 %v1144, %v1171
        %v1184 = vadd.f32 %v1145, %v1171
        %v1185 = vadd.f32 %v1146, %v1171
        %v1186 = vadd.f32 %v1147, %v1171
        %v1187 = vadd.f32 %v1148, %v1171
        %v1188 = vadd.f32 %v1149, %v1171
        %v1189 = vadd.f32 %v1150, %v1171
        %v1190 = vadd.f32 %v1151, %v1171
        %v1191 = vadd.f32 %v1152, %v1171
        %v1192 = vadd.f32 %v1153, %v1171
        %v1193 = vadd.f32 %v1154, %v1171
        %v1194 = vadd.f32 %v1155, %v1171
        %v1195 = vadd.f32 %v1156, %v1171
        %v1196 = vadd.f32 %v1157, %v1171
        %v1197 = vadd.f32 %v1158, %v1171
        %v1198 = vadd.f32 %v1159, %v1171
        %v1199 = vadd.f32 %v1160, %v1171
        %v1200 = vadd.f32 %v1161, %v1171
        %v1201 = vadd.f32 %v1162, %v1171
        %v1202 = vadd.f32 %v1163, %v1171
        %v1203 = vadd.f32 %v1164, %v1171
        %v1204 = vadd.f32 %v1165, %v1171
        %v1205 = vmax.f32 %v1173, 0.0
        %v1206 = vmax.f32 %v1174, 0.0
        %v1207 = vmax.f32 %v1175, 0.0
        %v1208 = vmax.f32 %v1176, 0.0
        %v1209 = vmax.f32 %v1177, 0.0
        %v1210 = vmax.f32 %v1178, 0.0
        %v1211 = vmax.f32 %v1179, 0.0
        %v1212 = vmax.f32 %v1180, 0.0
        %v1213 = vmax.f32 %v1181, 0.0
        %v1214 = vmax.f32 %v1182, 0.0
        %v1215 = vmax.f32 %v1183, 0.0
        %v1216 = vmax.f32 %v1184, 0.0
        %v1217 = vmax.f32 %v1185, 0.0
        %v1218 = vmax.f32 %v1186, 0.0
        %v1219 = vmax.f32 %v1187, 0.0
        %v1220 = vmax.f32 %v1188, 0.0
        %v1221 = vmax.f32 %v1189, 0.0
        %v1222 = vmax.f32 %v1190, 0.0
        %v1223 = vmax.f32 %v1191, 0.0
        %v1224 = vmax.f32 %v1192, 0.0
        %v1225 = vmax.f32 %v1193, 0.0
        %v1226 = vmax.f32 %v1194, 0.0
        %v1227 = vmax.f32 %v1195, 0.0
        %v1228 = vmax.f32 %v1196, 0.0
        %v1229 = vmax.f32 %v1197, 0.0
        %v1230 = vmax.f32 %v1198, 0.0
        %v1231 = vmax.f32 %v1199, 0.0
        %v1232 = vmax.f32 %v1200, 0.0
        %v1233 = vmax.f32 %v1201, 0.0
        %v1234 = vmax.f32 %v1202, 0.0
        %v1235 = vmax.f32 %v1203, 0.0
        %v1236 = vmax.f32 %v1204, 0.0
        %v1237 = vpack.c.bf16 %v1206, %v1205
        %v1238 = vpack.c.bf16 %v1208, %v1207
        %v1239 = vpack.c.bf16 %v1210, %v1209
        %v1240 = vpack.c.bf16 %v1212, %v1211
        %v1241 = vpack.c.bf16 %v1214, %v1213
        %v1242 = vpack.c.bf16 %v1216, %v1215
        %v1243 = vpack.c.bf16 %v1218, %v1217
        %v1244 = vpack.c.bf16 %v1220, %v1219
        %v1245 = vpack.c.bf16 %v1222, %v1221
        %v1246 = vpack.c.bf16 %v1224, %v1223
        %v1247 = vpack.c.bf16 %v1226, %v1225
        %v1248 = vpack.c.bf16 %v1228, %v1227
        %v1249 = vpack.c.bf16 %v1230, %v1229
        %v1250 = vpack.c.bf16 %v1232, %v1231
        %v1251 = vpack.c.bf16 %v1234, %v1233
        %v1252 = vpack.c.bf16 %v1236, %v1235
        %v1253 = vld [vmem:[%s9] sm:$0xff]
        %v1254 = vld [vmem:[%s9 + $0x8] sm:$0xff]
        %v1255 = vld [vmem:[%s9 + $0x10] sm:$0xff]
        %v1256 = vld [vmem:[%s9 + $0x18] sm:$0xff]
        %v1257 = vld [vmem:[%s9 + $0x20] sm:$0xff]
        %v1258 = vld [vmem:[%s9 + $0x28] sm:$0xff]
        %v1259 = vld [vmem:[%s9 + $0x30] sm:$0xff]
        %v1260 = vld [vmem:[%s9 + $0x38] sm:$0xff]
        %v1261 = vld [vmem:[%s3] sm:$0xf]
        %v1262 = vld [vmem:[%s3 + $0x4] sm:$0xf]
        %v1263 = vld [vmem:[%s3 + $0x8] sm:$0xf]
        %v1264 = vld [vmem:[%s3 + $0xc] sm:$0xf]
        %v1265 = vld [vmem:[%s3 + $0x10] sm:$0xf]
        %v1266 = vld [vmem:[%s3 + $0x14] sm:$0xf]
        %v1267 = vld [vmem:[%s3 + $0x18] sm:$0xf]
        %v1268 = vld [vmem:[%s3 + $0x1c] sm:$0xf]
        %v1269 = vld [vmem:[%s4] sm:$0x1]
        %v1271 = vlaneseq
        %v1272 = vshrl.u32 %v1271, 7
        %v1273 = vsub.s32 0, %v1272
        %v1274 = vrot.slane %v1269, %v1273
        %v1284 = vunpack.c.l.b16 %v1261
        %v1285 = vunpack.c.l.b16 %v1262
        %v1286 = vunpack.c.l.b16 %v1263
        %v1287 = vunpack.c.l.b16 %v1264
        %v1288 = vunpack.c.l.b16 %v1265
        %v1289 = vunpack.c.l.b16 %v1266
        %v1290 = vunpack.c.l.b16 %v1267
        %v1291 = vunpack.c.l.b16 %v1268
        %v1292 = vpack.c.b16 %v1285, %v1284
        %v1293 = vpack.c.b16 %v1287, %v1286
        %v1294 = vpack.c.b16 %v1289, %v1288
        %v1295 = vpack.c.b16 %v1291, %v1290
        %vm1300 = vcmask 523264
        %v1302 = vsel %vm1300, %v1237, 0
        %v1305 = vsel %vm1300, %v1238, 0
        %v1308 = vsel %vm1300, %v1239, 0
        %v1311 = vsel %vm1300, %v1240, 0
        %v1314 = vsel %vm1300, %v1241, 0
        %v1317 = vsel %vm1300, %v1242, 0
        %v1320 = vsel %vm1300, %v1243, 0
        %v1323 = vsel %vm1300, %v1244, 0
        %v1326 = vsel %vm1300, %v1245, 0
        %v1329 = vsel %vm1300, %v1246, 0
        %v1332 = vsel %vm1300, %v1247, 0
        %v1335 = vsel %vm1300, %v1248, 0
        %v1338 = vsel %vm1300, %v1249, 0
        %v1341 = vsel %vm1300, %v1250, 0
        %v1344 = vsel %vm1300, %v1251, 0
        %v1347 = vsel %vm1300, %v1252, 0
        %1349 = vmatprep.subr.bf16.mxu0 0
        %1350 = vmatpush1.bf16.msra.mxu0 %v1292
        %1351 = vmatprep.subr.bf16.mxu0 0
        %1352 = vmatpush1.bf16.msra.mxu0 %v1293
        %1353 = vmatprep.subr.bf16.mxu0 0
        %1354 = vmatpush1.bf16.msra.mxu0 %v1294
        %1355 = vmatprep.subr.bf16.mxu0 0
        %1356 = vmatpush1.bf16.msra.mxu0 %v1295
        %1357 = vmatprep.subr.bf16.mxu0 0
        %1358 = vmatpush1.bf16.msra.mxu0 0
        %1359 = vmatprep.subr.bf16.mxu0 0
        %1360 = vmatpush1.bf16.msra.mxu0 0
        %1361 = vmatprep.subr.bf16.mxu0 0
        %1362 = vmatpush1.bf16.msra.mxu0 0
        %1363 = vmatprep.subr.bf16.mxu0 0
        %1364 = vmatpush1.bf16.msra.mxu0 0
        %1365 = vmatprep.subr.bf16.mxu0 0
        %1366 = vmatpush1.bf16.msra.mxu0 0
        %1367 = vmatprep.subr.bf16.mxu0 0
        %1368 = vmatpush1.bf16.msra.mxu0 0
        %1369 = vmatprep.subr.bf16.mxu0 0
        %1370 = vmatpush1.bf16.msra.mxu0 0
        %1371 = vmatprep.subr.bf16.mxu0 0
        %1372 = vmatpush1.bf16.msra.mxu0 0
        %1373 = vmatprep.subr.bf16.mxu0 0
        %1374 = vmatpush1.bf16.msra.mxu0 0
        %1375 = vmatprep.subr.bf16.mxu0 0
        %1376 = vmatpush1.bf16.msra.mxu0 0
        %1377 = vmatprep.subr.bf16.mxu0 0
        %1378 = vmatpush1.bf16.msra.mxu0 0
        %1379 = vmatprep.subr.bf16.mxu0 0
        %1380 = vmatpush1.bf16.msra.mxu0 0
        %1381 = vmatprep.mubr.bf16.mxu0 0
        %1382 = vmatmul.mubr.bf16.gmra.mrb[0].mxu0 %v1302
        %v1383 = vpop.f32.mrb[0].mxu0
        %v1384 = vadd.f32 %v1274, %v1383
        %v1385 = vpop.f32.mrb[0].mxu0
        %v1386 = vpop.f32.mrb[0].mxu0
        %v1387 = vadd.f32 %v1274, %v1386
        %v1388 = vpop.f32.mrb[0].mxu0
        %1389 = vmatprep.mubr.bf16.mxu0 0
        %1390 = vmatmul.mubr.bf16.gmra.mrb[0].mxu0 %v1305
        %v1391 = vpop.f32.mrb[0].mxu0
        %v1392 = vadd.f32 %v1274, %v1391
        %v1393 = vpop.f32.mrb[0].mxu0
        %v1394 = vpop.f32.mrb[0].mxu0
        %v1395 = vadd.f32 %v1274, %v1394
        %v1396 = vpop.f32.mrb[0].mxu0
        %1397 = vmatprep.mubr.bf16.mxu0 0
        %1398 = vmatmul.mubr.bf16.gmra.mrb[0].mxu0 %v1308
        %v1399 = vpop.f32.mrb[0].mxu0
        %v1400 = vadd.f32 %v1274, %v1399
        %v1401 = vpop.f32.mrb[0].mxu0
        %v1402 = vpop.f32.mrb[0].mxu0
        %v1403 = vadd.f32 %v1274, %v1402
        %v1404 = vpop.f32.mrb[0].mxu0
        %1405 = vmatprep.mubr.bf16.mxu0 0
        %1406 = vmatmul.mubr.bf16.gmra.mrb[0].mxu0 %v1311
        %v1407 = vpop.f32.mrb[0].mxu0
        %v1408 = vadd.f32 %v1274, %v1407
        %v1409 = vpop.f32.mrb[0].mxu0
        %v1410 = vpop.f32.mrb[0].mxu0
        %v1411 = vadd.f32 %v1274, %v1410
        %v1412 = vpop.f32.mrb[0].mxu0
        %1413 = vmatprep.mubr.bf16.mxu0 0
        %1414 = vmatmul.mubr.bf16.gmra.mrb[0].mxu0 %v1314
        %v1415 = vpop.f32.mrb[0].mxu0
        %v1416 = vadd.f32 %v1274, %v1415
        %v1417 = vpop.f32.mrb[0].mxu0
        %v1418 = vpop.f32.mrb[0].mxu0
        %v1419 = vadd.f32 %v1274, %v1418
        %v1420 = vpop.f32.mrb[0].mxu0
        %1421 = vmatprep.mubr.bf16.mxu0 0
        %1422 = vmatmul.mubr.bf16.gmra.mrb[0].mxu0 %v1317
        %v1423 = vpop.f32.mrb[0].mxu0
        %v1424 = vadd.f32 %v1274, %v1423
        %v1425 = vpop.f32.mrb[0].mxu0
        %v1426 = vpop.f32.mrb[0].mxu0
        %v1427 = vadd.f32 %v1274, %v1426
        %v1428 = vpop.f32.mrb[0].mxu0
        %1429 = vmatprep.mubr.bf16.mxu0 0
        %1430 = vmatmul.mubr.bf16.gmra.mrb[0].mxu0 %v1320
        %v1431 = vpop.f32.mrb[0].mxu0
        %v1432 = vadd.f32 %v1274, %v1431
        %v1433 = vpop.f32.mrb[0].mxu0
        %v1434 = vpop.f32.mrb[0].mxu0
        %v1435 = vadd.f32 %v1274, %v1434
        %v1436 = vpop.f32.mrb[0].mxu0
        %1437 = vmatprep.mubr.bf16.mxu0 0
        %1438 = vmatmul.mubr.bf16.gmra.mrb[0].mxu0 %v1323
        %v1439 = vpop.f32.mrb[0].mxu0
        %v1440 = vadd.f32 %v1274, %v1439
        %v1441 = vpop.f32.mrb[0].mxu0
        %v1442 = vpop.f32.mrb[0].mxu0
        %v1443 = vadd.f32 %v1274, %v1442
        %v1444 = vpop.f32.mrb[0].mxu0
        %1445 = vmatprep.mubr.bf16.mxu0 0
        %1446 = vmatmul.mubr.bf16.gmra.mrb[0].mxu0 %v1326
        %v1447 = vpop.f32.mrb[0].mxu0
        %v1448 = vadd.f32 %v1274, %v1447
        %v1449 = vpop.f32.mrb[0].mxu0
        %v1450 = vpop.f32.mrb[0].mxu0
        %v1451 = vadd.f32 %v1274, %v1450
        %v1452 = vpop.f32.mrb[0].mxu0
        %1453 = vmatprep.mubr.bf16.mxu0 0
        %1454 = vmatmul.mubr.bf16.gmra.mrb[0].mxu0 %v1329
        %v1455 = vpop.f32.mrb[0].mxu0
        %v1456 = vadd.f32 %v1274, %v1455
        %v1457 = vpop.f32.mrb[0].mxu0
        %v1458 = vpop.f32.mrb[0].mxu0
        %v1459 = vadd.f32 %v1274, %v1458
        %v1460 = vpop.f32.mrb[0].mxu0
        %1461 = vmatprep.mubr.bf16.mxu0 0
        %1462 = vmatmul.mubr.bf16.gmra.mrb[0].mxu0 %v1332
        %v1463 = vpop.f32.mrb[0].mxu0
        %v1464 = vadd.f32 %v1274, %v1463
        %v1465 = vpop.f32.mrb[0].mxu0
        %v1466 = vpop.f32.mrb[0].mxu0
        %v1467 = vadd.f32 %v1274, %v1466
        %v1468 = vpop.f32.mrb[0].mxu0
        %1469 = vmatprep.mubr.bf16.mxu0 0
        %1470 = vmatmul.mubr.bf16.gmra.mrb[0].mxu0 %v1335
        %v1471 = vpop.f32.mrb[0].mxu0
        %v1472 = vadd.f32 %v1274, %v1471
        %v1473 = vpop.f32.mrb[0].mxu0
        %v1474 = vpop.f32.mrb[0].mxu0
        %v1475 = vadd.f32 %v1274, %v1474
        %v1476 = vpop.f32.mrb[0].mxu0
        %1477 = vmatprep.mubr.bf16.mxu0 0
        %1478 = vmatmul.mubr.bf16.gmra.mrb[0].mxu0 %v1338
        %v1479 = vpop.f32.mrb[0].mxu0
        %v1480 = vadd.f32 %v1274, %v1479
        %v1481 = vpop.f32.mrb[0].mxu0
        %v1482 = vpop.f32.mrb[0].mxu0
        %v1483 = vadd.f32 %v1274, %v1482
        %v1484 = vpop.f32.mrb[0].mxu0
        %1485 = vmatprep.mubr.bf16.mxu0 0
        %1486 = vmatmul.mubr.bf16.gmra.mrb[0].mxu0 %v1341
        %v1487 = vpop.f32.mrb[0].mxu0
        %v1488 = vadd.f32 %v1274, %v1487
        %v1489 = vpop.f32.mrb[0].mxu0
        %v1490 = vpop.f32.mrb[0].mxu0
        %v1491 = vadd.f32 %v1274, %v1490
        %v1492 = vpop.f32.mrb[0].mxu0
        %1493 = vmatprep.mubr.bf16.mxu0 0
        %1494 = vmatmul.mubr.bf16.gmra.mrb[0].mxu0 %v1344
        %v1495 = vpop.f32.mrb[0].mxu0
        %v1496 = vadd.f32 %v1274, %v1495
        %v1497 = vpop.f32.mrb[0].mxu0
        %v1498 = vpop.f32.mrb[0].mxu0
        %v1499 = vadd.f32 %v1274, %v1498
        %v1500 = vpop.f32.mrb[0].mxu0
        %1501 = vmatprep.mubr.bf16.mxu0 0
        %1502 = vmatmul.mubr.bf16.gmra.mrb[0].mxu0 %v1347
        %v1503 = vpop.f32.mrb[0].mxu0
        %v1504 = vadd.f32 %v1274, %v1503
        %v1505 = vpop.f32.mrb[0].mxu0
        %v1506 = vpop.f32.mrb[0].mxu0
        %v1507 = vadd.f32 %v1274, %v1506
        %v1508 = vpop.f32.mrb[0].mxu0
        %1509 = vdwg.mxu0
        %v1510 = vmax.f32 %v1384, 0.0
        %v1511 = vmax.f32 %v1387, 0.0
        %v1512 = vmax.f32 %v1392, 0.0
        %v1513 = vmax.f32 %v1395, 0.0
        %v1514 = vmax.f32 %v1400, 0.0
        %v1515 = vmax.f32 %v1403, 0.0
        %v1516 = vmax.f32 %v1408, 0.0
        %v1517 = vmax.f32 %v1411, 0.0
        %v1518 = vmax.f32 %v1416, 0.0
        %v1519 = vmax.f32 %v1419, 0.0
        %v1520 = vmax.f32 %v1424, 0.0
        %v1521 = vmax.f32 %v1427, 0.0
        %v1522 = vmax.f32 %v1432, 0.0
        %v1523 = vmax.f32 %v1435, 0.0
        %v1524 = vmax.f32 %v1440, 0.0
        %v1525 = vmax.f32 %v1443, 0.0
        %v1526 = vmax.f32 %v1448, 0.0
        %v1527 = vmax.f32 %v1451, 0.0
        %v1528 = vmax.f32 %v1456, 0.0
        %v1529 = vmax.f32 %v1459, 0.0
        %v1530 = vmax.f32 %v1464, 0.0
        %v1531 = vmax.f32 %v1467, 0.0
        %v1532 = vmax.f32 %v1472, 0.0
        %v1533 = vmax.f32 %v1475, 0.0
        %v1534 = vmax.f32 %v1480, 0.0
        %v1535 = vmax.f32 %v1483, 0.0
        %v1536 = vmax.f32 %v1488, 0.0
        %v1537 = vmax.f32 %v1491, 0.0
        %v1538 = vmax.f32 %v1496, 0.0
        %v1539 = vmax.f32 %v1499, 0.0
        %v1540 = vmax.f32 %v1504, 0.0
        %v1541 = vmax.f32 %v1507, 0.0
        %v1542 = vpack.c.bf16 %v1511, %v1510
        %v1543 = vpack.c.bf16 %v1513, %v1512
        %v1544 = vpack.c.bf16 %v1515, %v1514
        %v1545 = vpack.c.bf16 %v1517, %v1516
        %v1546 = vpack.c.bf16 %v1519, %v1518
        %v1547 = vpack.c.bf16 %v1521, %v1520
        %v1548 = vpack.c.bf16 %v1523, %v1522
        %v1549 = vpack.c.bf16 %v1525, %v1524
        %v1550 = vpack.c.bf16 %v1527, %v1526
        %v1551 = vpack.c.bf16 %v1529, %v1528
        %v1552 = vpack.c.bf16 %v1531, %v1530
        %v1553 = vpack.c.bf16 %v1533, %v1532
        %v1554 = vpack.c.bf16 %v1535, %v1534
        %v1555 = vpack.c.bf16 %v1537, %v1536
        %v1556 = vpack.c.bf16 %v1539, %v1538
        %v1557 = vpack.c.bf16 %v1541, %v1540
        %v1558 = vld [vmem:[%s9 + $0x40] sm:$0xff]
        %v1559 = vld [vmem:[%s9 + $0x48] sm:$0xff]
        %v1560 = vld [vmem:[%s9 + $0x50] sm:$0xff]
        %v1561 = vld [vmem:[%s9 + $0x58] sm:$0xff]
        %v1562 = vld [vmem:[%s9 + $0x60] sm:$0xff]
        %v1563 = vld [vmem:[%s9 + $0x68] sm:$0xff]
        %v1564 = vld [vmem:[%s9 + $0x70] sm:$0xff]
        %v1565 = vld [vmem:[%s9 + $0x78] sm:$0xff]
        %v1566 = vld [vmem:[%s9 + $0x80] sm:$0xff]
        %v1567 = vld [vmem:[%s9 + $0x88] sm:$0xff]
        %v1568 = vld [vmem:[%s9 + $0x90] sm:$0xff]
        %v1569 = vld [vmem:[%s9 + $0x98] sm:$0xff]
        %v1570 = vld [vmem:[%s9 + $0xa0] sm:$0xff]
        %v1571 = vld [vmem:[%s9 + $0xa8] sm:$0xff]
        %v1572 = vld [vmem:[%s9 + $0xb0] sm:$0xff]
        %v1573 = vld [vmem:[%s9 + $0xb8] sm:$0xff]
        %v1590 = vunpack.c.l.b16 %v1558
        %v1591 = vunpack.c.h.b16 %v1558
        %v1592 = vunpack.c.l.b16 %v1559
        %v1593 = vunpack.c.h.b16 %v1559
        %v1594 = vunpack.c.l.b16 %v1560
        %v1595 = vunpack.c.h.b16 %v1560
        %v1596 = vunpack.c.l.b16 %v1561
        %v1597 = vunpack.c.h.b16 %v1561
        %v1598 = vunpack.c.l.b16 %v1562
        %v1599 = vunpack.c.h.b16 %v1562
        %v1600 = vunpack.c.l.b16 %v1563
        %v1601 = vunpack.c.h.b16 %v1563
        %v1602 = vunpack.c.l.b16 %v1564
        %v1603 = vunpack.c.h.b16 %v1564
        %v1604 = vunpack.c.l.b16 %v1565
        %v1605 = vunpack.c.h.b16 %v1565
        %v1606 = vunpack.c.l.b16 %v1566
        %v1607 = vunpack.c.h.b16 %v1566
        %v1608 = vunpack.c.l.b16 %v1567
        %v1609 = vunpack.c.h.b16 %v1567
        %v1610 = vunpack.c.l.b16 %v1568
        %v1611 = vunpack.c.h.b16 %v1568
        %v1612 = vunpack.c.l.b16 %v1569
        %v1613 = vunpack.c.h.b16 %v1569
        %v1614 = vunpack.c.l.b16 %v1570
        %v1615 = vunpack.c.h.b16 %v1570
        %v1616 = vunpack.c.l.b16 %v1571
        %v1617 = vunpack.c.h.b16 %v1571
        %v1618 = vunpack.c.l.b16 %v1572
        %v1619 = vunpack.c.h.b16 %v1572
        %v1620 = vunpack.c.l.b16 %v1573
        %v1621 = vunpack.c.h.b16 %v1573
        %v1622 = vpack.c.b16 %v1592, %v1590
        %v1623 = vpack.c.b16 %v1593, %v1591
        %v1624 = vpack.c.b16 %v1596, %v1594
        %v1625 = vpack.c.b16 %v1597, %v1595
        %v1626 = vpack.c.b16 %v1600, %v1598
        %v1627 = vpack.c.b16 %v1601, %v1599
        %v1628 = vpack.c.b16 %v1604, %v1602
        %v1629 = vpack.c.b16 %v1605, %v1603
        %v1630 = vpack.c.b16 %v1608, %v1606
        %v1631 = vpack.c.b16 %v1609, %v1607
        %v1632 = vpack.c.b16 %v1612, %v1610
        %v1633 = vpack.c.b16 %v1613, %v1611
        %v1634 = vpack.c.b16 %v1616, %v1614
        %v1635 = vpack.c.b16 %v1617, %v1615
        %v1636 = vpack.c.b16 %v1620, %v1618
        %v1637 = vpack.c.b16 %v1621, %v1619
        %1654 = vmatprep.subr.bf16.mxu0 %v1623
        %1655 = vmatpush1.bf16.msra.mxu0 %v1622
        %1656 = vmatprep.subr.bf16.mxu0 %v1625
        %1657 = vmatpush1.bf16.msra.mxu0 %v1624
        %1658 = vmatprep.subr.bf16.mxu0 %v1627
        %1659 = vmatpush1.bf16.msra.mxu0 %v1626
        %1660 = vmatprep.subr.bf16.mxu0 %v1629
        %1661 = vmatpush1.bf16.msra.mxu0 %v1628
        %1662 = vmatprep.subr.bf16.mxu0 %v1631
        %1663 = vmatpush1.bf16.msra.mxu0 %v1630
        %1664 = vmatprep.subr.bf16.mxu0 %v1633
        %1665 = vmatpush1.bf16.msra.mxu0 %v1632
        %1666 = vmatprep.subr.bf16.mxu0 %v1635
        %1667 = vmatpush1.bf16.msra.mxu0 %v1634
        %1668 = vmatprep.subr.bf16.mxu0 %v1637
        %1669 = vmatpush1.bf16.msra.mxu0 %v1636
        %1670 = vmatprep.subr.bf16.mxu0 0
        %1671 = vmatpush1.bf16.msra.mxu0 0
        %1672 = vmatprep.subr.bf16.mxu0 0
        %1673 = vmatpush1.bf16.msra.mxu0 0
        %1674 = vmatprep.subr.bf16.mxu0 0
        %1675 = vmatpush1.bf16.msra.mxu0 0
        %1676 = vmatprep.subr.bf16.mxu0 0
        %1677 = vmatpush1.bf16.msra.mxu0 0
        %1678 = vmatprep.subr.bf16.mxu0 0
        %1679 = vmatpush1.bf16.msra.mxu0 0
        %1680 = vmatprep.subr.bf16.mxu0 0
        %1681 = vmatpush1.bf16.msra.mxu0 0
        %1682 = vmatprep.subr.bf16.mxu0 0
        %1683 = vmatpush1.bf16.msra.mxu0 0
        %1684 = vmatprep.subr.bf16.mxu0 0
        %1685 = vmatpush1.bf16.msra.mxu0 0
        %1686 = vmatprep.mubr.bf16.mxu0 0
        %1687 = vmatmul.mubr.bf16.gmra.mrb[0].mxu0 %v1542
        %v1688 = vpop.f32.mrb[0].mxu0
        %v1689 = vadd.f32 0.0, %v1688
        %v1690 = vpop.f32.mrb[0].mxu0
        %v1691 = vadd.f32 0.0, %v1690
        %v1692 = vpop.f32.mrb[0].mxu0
        %v1693 = vadd.f32 0.0, %v1692
        %v1694 = vpop.f32.mrb[0].mxu0
        %v1695 = vadd.f32 0.0, %v1694
        %1696 = vmatprep.mubr.bf16.mxu0 0
        %1697 = vmatmul.mubr.bf16.gmra.mrb[0].mxu0 %v1543
        %v1698 = vpop.f32.mrb[0].mxu0
        %v1699 = vadd.f32 0.0, %v1698
        %v1700 = vpop.f32.mrb[0].mxu0
        %v1701 = vadd.f32 0.0, %v1700
        %v1702 = vpop.f32.mrb[0].mxu0
        %v1703 = vadd.f32 0.0, %v1702
        %v1704 = vpop.f32.mrb[0].mxu0
        %v1705 = vadd.f32 0.0, %v1704
        %1706 = vmatprep.mubr.bf16.mxu0 0
        %1707 = vmatmul.mubr.bf16.gmra.mrb[0].mxu0 %v1544
        %v1708 = vpop.f32.mrb[0].mxu0
        %v1709 = vadd.f32 0.0, %v1708
        %v1710 = vpop.f32.mrb[0].mxu0
        %v1711 = vadd.f32 0.0, %v1710
        %v1712 = vpop.f32.mrb[0].mxu0
        %v1713 = vadd.f32 0.0, %v1712
        %v1714 = vpop.f32.mrb[0].mxu0
        %v1715 = vadd.f32 0.0, %v1714
        %1716 = vmatprep.mubr.bf16.mxu0 0
        %1717 = vmatmul.mubr.bf16.gmra.mrb[0].mxu0 %v1545
        %v1718 = vpop.f32.mrb[0].mxu0
        %v1719 = vadd.f32 0.0, %v1718
        %v1720 = vpop.f32.mrb[0].mxu0
        %v1721 = vadd.f32 0.0, %v1720
        %v1722 = vpop.f32.mrb[0].mxu0
        %v1723 = vadd.f32 0.0, %v1722
        %v1724 = vpop.f32.mrb[0].mxu0
        %v1725 = vadd.f32 0.0, %v1724
        %1726 = vmatprep.mubr.bf16.mxu0 0
        %1727 = vmatmul.mubr.bf16.gmra.mrb[0].mxu0 %v1546
        %v1728 = vpop.f32.mrb[0].mxu0
        %v1729 = vadd.f32 0.0, %v1728
        %v1730 = vpop.f32.mrb[0].mxu0
        %v1731 = vadd.f32 0.0, %v1730
        %v1732 = vpop.f32.mrb[0].mxu0
        %v1733 = vadd.f32 0.0, %v1732
        %v1734 = vpop.f32.mrb[0].mxu0
        %v1735 = vadd.f32 0.0, %v1734
        %1736 = vmatprep.mubr.bf16.mxu0 0
        %1737 = vmatmul.mubr.bf16.gmra.mrb[0].mxu0 %v1547
        %v1738 = vpop.f32.mrb[0].mxu0
        %v1739 = vadd.f32 0.0, %v1738
        %v1740 = vpop.f32.mrb[0].mxu0
        %v1741 = vadd.f32 0.0, %v1740
        %v1742 = vpop.f32.mrb[0].mxu0
        %v1743 = vadd.f32 0.0, %v1742
        %v1744 = vpop.f32.mrb[0].mxu0
        %v1745 = vadd.f32 0.0, %v1744
        %1746 = vmatprep.mubr.bf16.mxu0 0
        %1747 = vmatmul.mubr.bf16.gmra.mrb[0].mxu0 %v1548
        %v1748 = vpop.f32.mrb[0].mxu0
        %v1749 = vadd.f32 0.0, %v1748
        %v1750 = vpop.f32.mrb[0].mxu0
        %v1751 = vadd.f32 0.0, %v1750
        %v1752 = vpop.f32.mrb[0].mxu0
        %v1753 = vadd.f32 0.0, %v1752
        %v1754 = vpop.f32.mrb[0].mxu0
        %v1755 = vadd.f32 0.0, %v1754
        %1756 = vmatprep.mubr.bf16.mxu0 0
        %1757 = vmatmul.mubr.bf16.gmra.mrb[0].mxu0 %v1549
        %v1758 = vpop.f32.mrb[0].mxu0
        %v1759 = vadd.f32 0.0, %v1758
        %v1760 = vpop.f32.mrb[0].mxu0
        %v1761 = vadd.f32 0.0, %v1760
        %v1762 = vpop.f32.mrb[0].mxu0
        %v1763 = vadd.f32 0.0, %v1762
        %v1764 = vpop.f32.mrb[0].mxu0
        %v1765 = vadd.f32 0.0, %v1764
        %1766 = vmatprep.mubr.bf16.mxu0 0
        %1767 = vmatmul.mubr.bf16.gmra.mrb[0].mxu0 %v1550
        %v1768 = vpop.f32.mrb[0].mxu0
        %v1769 = vadd.f32 0.0, %v1768
        %v1770 = vpop.f32.mrb[0].mxu0
        %v1771 = vadd.f32 0.0, %v1770
        %v1772 = vpop.f32.mrb[0].mxu0
        %v1773 = vadd.f32 0.0, %v1772
        %v1774 = vpop.f32.mrb[0].mxu0
        %v1775 = vadd.f32 0.0, %v1774
        %1776 = vmatprep.mubr.bf16.mxu0 0
        %1777 = vmatmul.mubr.bf16.gmra.mrb[0].mxu0 %v1551
        %v1778 = vpop.f32.mrb[0].mxu0
        %v1779 = vadd.f32 0.0, %v1778
        %v1780 = vpop.f32.mrb[0].mxu0
        %v1781 = vadd.f32 0.0, %v1780
        %v1782 = vpop.f32.mrb[0].mxu0
        %v1783 = vadd.f32 0.0, %v1782
        %v1784 = vpop.f32.mrb[0].mxu0
        %v1785 = vadd.f32 0.0, %v1784
        %1786 = vmatprep.mubr.bf16.mxu0 0
        %1787 = vmatmul.mubr.bf16.gmra.mrb[0].mxu0 %v1552
        %v1788 = vpop.f32.mrb[0].mxu0
        %v1789 = vadd.f32 0.0, %v1788
        %v1790 = vpop.f32.mrb[0].mxu0
        %v1791 = vadd.f32 0.0, %v1790
        %v1792 = vpop.f32.mrb[0].mxu0
        %v1793 = vadd.f32 0.0, %v1792
        %v1794 = vpop.f32.mrb[0].mxu0
        %v1795 = vadd.f32 0.0, %v1794
        %1796 = vmatprep.mubr.bf16.mxu0 0
        %1797 = vmatmul.mubr.bf16.gmra.mrb[0].mxu0 %v1553
        %v1798 = vpop.f32.mrb[0].mxu0
        %v1799 = vadd.f32 0.0, %v1798
        %v1800 = vpop.f32.mrb[0].mxu0
        %v1801 = vadd.f32 0.0, %v1800
        %v1802 = vpop.f32.mrb[0].mxu0
        %v1803 = vadd.f32 0.0, %v1802
        %v1804 = vpop.f32.mrb[0].mxu0
        %v1805 = vadd.f32 0.0, %v1804
        %1806 = vmatprep.mubr.bf16.mxu0 0
        %1807 = vmatmul.mubr.bf16.gmra.mrb[0].mxu0 %v1554
        %v1808 = vpop.f32.mrb[0].mxu0
        %v1809 = vadd.f32 0.0, %v1808
        %v1810 = vpop.f32.mrb[0].mxu0
        %v1811 = vadd.f32 0.0, %v1810
        %v1812 = vpop.f32.mrb[0].mxu0
        %v1813 = vadd.f32 0.0, %v1812
        %v1814 = vpop.f32.mrb[0].mxu0
        %v1815 = vadd.f32 0.0, %v1814
        %1816 = vmatprep.mubr.bf16.mxu0 0
        %1817 = vmatmul.mubr.bf16.gmra.mrb[0].mxu0 %v1555
        %v1818 = vpop.f32.mrb[0].mxu0
        %v1819 = vadd.f32 0.0, %v1818
        %v1820 = vpop.f32.mrb[0].mxu0
        %v1821 = vadd.f32 0.0, %v1820
        %v1822 = vpop.f32.mrb[0].mxu0
        %v1823 = vadd.f32 0.0, %v1822
        %v1824 = vpop.f32.mrb[0].mxu0
        %v1825 = vadd.f32 0.0, %v1824
        %1826 = vmatprep.mubr.bf16.mxu0 0
        %1827 = vmatmul.mubr.bf16.gmra.mrb[0].mxu0 %v1556
        %v1828 = vpop.f32.mrb[0].mxu0
        %v1829 = vadd.f32 0.0, %v1828
        %v1830 = vpop.f32.mrb[0].mxu0
        %v1831 = vadd.f32 0.0, %v1830
        %v1832 = vpop.f32.mrb[0].mxu0
        %v1833 = vadd.f32 0.0, %v1832
        %v1834 = vpop.f32.mrb[0].mxu0
        %v1835 = vadd.f32 0.0, %v1834
        %1836 = vmatprep.mubr.bf16.mxu0 0
        %1837 = vmatmul.mubr.bf16.gmra.mrb[0].mxu0 %v1557
        %v1838 = vpop.f32.mrb[0].mxu0
        %v1839 = vadd.f32 0.0, %v1838
        %v1840 = vpop.f32.mrb[0].mxu0
        %v1841 = vadd.f32 0.0, %v1840
        %v1842 = vpop.f32.mrb[0].mxu0
        %v1843 = vadd.f32 0.0, %v1842
        %v1844 = vpop.f32.mrb[0].mxu0
        %v1845 = vadd.f32 0.0, %v1844
        %1846 = vdwg.mxu0
        %v1855 = vunpack.c.l.b16 %v1253
        %v1856 = vunpack.c.h.b16 %v1253
        %v1857 = vunpack.c.l.b16 %v1254
        %v1858 = vunpack.c.h.b16 %v1254
        %v1859 = vunpack.c.l.b16 %v1255
        %v1860 = vunpack.c.h.b16 %v1255
        %v1861 = vunpack.c.l.b16 %v1256
        %v1862 = vunpack.c.h.b16 %v1256
        %v1863 = vunpack.c.l.b16 %v1257
        %v1864 = vunpack.c.h.b16 %v1257
        %v1865 = vunpack.c.l.b16 %v1258
        %v1866 = vunpack.c.h.b16 %v1258
        %v1867 = vunpack.c.l.b16 %v1259
        %v1868 = vunpack.c.h.b16 %v1259
        %v1869 = vunpack.c.l.b16 %v1260
        %v1870 = vunpack.c.h.b16 %v1260
        %v1871 = vpack.c.b16 %v1857, %v1855
        %v1872 = vpack.c.b16 %v1858, %v1856
        %v1873 = vpack.c.b16 %v1861, %v1859
        %v1874 = vpack.c.b16 %v1862, %v1860
        %v1875 = vpack.c.b16 %v1865, %v1863
        %v1876 = vpack.c.b16 %v1866, %v1864
        %v1877 = vpack.c.b16 %v1869, %v1867
        %v1878 = vpack.c.b16 %v1870, %v1868
        %1887 = vmatprep.subr.bf16.mxu0 %v1872
        %1888 = vmatpush1.bf16.msra.mxu0 %v1871
        %1889 = vmatprep.subr.bf16.mxu0 %v1874
        %1890 = vmatpush1.bf16.msra.mxu0 %v1873
        %1891 = vmatprep.subr.bf16.mxu0 %v1876
        %1892 = vmatpush1.bf16.msra.mxu0 %v1875
        %1893 = vmatprep.subr.bf16.mxu0 %v1878
        %1894 = vmatpush1.bf16.msra.mxu0 %v1877
        %1895 = vmatprep.subr.bf16.mxu0 0
        %1896 = vmatpush1.bf16.msra.mxu0 0
        %1897 = vmatprep.subr.bf16.mxu0 0
        %1898 = vmatpush1.bf16.msra.mxu0 0
        %1899 = vmatprep.subr.bf16.mxu0 0
        %1900 = vmatpush1.bf16.msra.mxu0 0
        %1901 = vmatprep.subr.bf16.mxu0 0
        %1902 = vmatpush1.bf16.msra.mxu0 0
        %1903 = vmatprep.subr.bf16.mxu0 0
        %1904 = vmatpush1.bf16.msra.mxu0 0
        %1905 = vmatprep.subr.bf16.mxu0 0
        %1906 = vmatpush1.bf16.msra.mxu0 0
        %1907 = vmatprep.subr.bf16.mxu0 0
        %1908 = vmatpush1.bf16.msra.mxu0 0
        %1909 = vmatprep.subr.bf16.mxu0 0
        %1910 = vmatpush1.bf16.msra.mxu0 0
        %1911 = vmatprep.subr.bf16.mxu0 0
        %1912 = vmatpush1.bf16.msra.mxu0 0
        %1913 = vmatprep.subr.bf16.mxu0 0
        %1914 = vmatpush1.bf16.msra.mxu0 0
        %1915 = vmatprep.subr.bf16.mxu0 0
        %1916 = vmatpush1.bf16.msra.mxu0 0
        %1917 = vmatprep.subr.bf16.mxu0 0
        %1918 = vmatpush1.bf16.msra.mxu0 0
        %1919 = vmatprep.mubr.bf16.mxu0 0
        %1920 = vmatmul.mubr.bf16.gmra.mrb[0].mxu0 %v1302
        %v1921 = vpop.f32.mrb[0].mxu0
        %v1922 = vadd.f32 %v1689, %v1921
        %v1923 = vpop.f32.mrb[0].mxu0
        %v1924 = vadd.f32 %v1691, %v1923
        %v1925 = vpop.f32.mrb[0].mxu0
        %v1926 = vadd.f32 %v1693, %v1925
        %v1927 = vpop.f32.mrb[0].mxu0
        %v1928 = vadd.f32 %v1695, %v1927
        %1929 = vmatprep.mubr.bf16.mxu0 0
        %1930 = vmatmul.mubr.bf16.gmra.mrb[0].mxu0 %v1305
        %v1931 = vpop.f32.mrb[0].mxu0
        %v1932 = vadd.f32 %v1699, %v1931
        %v1933 = vpop.f32.mrb[0].mxu0
        %v1934 = vadd.f32 %v1701, %v1933
        %v1935 = vpop.f32.mrb[0].mxu0
        %v1936 = vadd.f32 %v1703, %v1935
        %v1937 = vpop.f32.mrb[0].mxu0
        %v1938 = vadd.f32 %v1705, %v1937
        %1939 = vmatprep.mubr.bf16.mxu0 0
        %1940 = vmatmul.mubr.bf16.gmra.mrb[0].mxu0 %v1308
        %v1941 = vpop.f32.mrb[0].mxu0
        %v1942 = vadd.f32 %v1709, %v1941
        %v1943 = vpop.f32.mrb[0].mxu0
        %v1944 = vadd.f32 %v1711, %v1943
        %v1945 = vpop.f32.mrb[0].mxu0
        %v1946 = vadd.f32 %v1713, %v1945
        %v1947 = vpop.f32.mrb[0].mxu0
        %v1948 = vadd.f32 %v1715, %v1947
        %1949 = vmatprep.mubr.bf16.mxu0 0
        %1950 = vmatmul.mubr.bf16.gmra.mrb[0].mxu0 %v1311
        %v1951 = vpop.f32.mrb[0].mxu0
        %v1952 = vadd.f32 %v1719, %v1951
        %v1953 = vpop.f32.mrb[0].mxu0
        %v1954 = vadd.f32 %v1721, %v1953
        %v1955 = vpop.f32.mrb[0].mxu0
        %v1956 = vadd.f32 %v1723, %v1955
        %v1957 = vpop.f32.mrb[0].mxu0
        %v1958 = vadd.f32 %v1725, %v1957
        %1959 = vmatprep.mubr.bf16.mxu0 0
        %1960 = vmatmul.mubr.bf16.gmra.mrb[0].mxu0 %v1314
        %v1961 = vpop.f32.mrb[0].mxu0
        %v1962 = vadd.f32 %v1729, %v1961
        %v1963 = vpop.f32.mrb[0].mxu0
        %v1964 = vadd.f32 %v1731, %v1963
        %v1965 = vpop.f32.mrb[0].mxu0
        %v1966 = vadd.f32 %v1733, %v1965
        %v1967 = vpop.f32.mrb[0].mxu0
        %v1968 = vadd.f32 %v1735, %v1967
        %1969 = vmatprep.mubr.bf16.mxu0 0
        %1970 = vmatmul.mubr.bf16.gmra.mrb[0].mxu0 %v1317
        %v1971 = vpop.f32.mrb[0].mxu0
        %v1972 = vadd.f32 %v1739, %v1971
        %v1973 = vpop.f32.mrb[0].mxu0
        %v1974 = vadd.f32 %v1741, %v1973
        %v1975 = vpop.f32.mrb[0].mxu0
        %v1976 = vadd.f32 %v1743, %v1975
        %v1977 = vpop.f32.mrb[0].mxu0
        %v1978 = vadd.f32 %v1745, %v1977
        %1979 = vmatprep.mubr.bf16.mxu0 0
        %1980 = vmatmul.mubr.bf16.gmra.mrb[0].mxu0 %v1320
        %v1981 = vpop.f32.mrb[0].mxu0
        %v1982 = vadd.f32 %v1749, %v1981
        %v1983 = vpop.f32.mrb[0].mxu0
        %v1984 = vadd.f32 %v1751, %v1983
        %v1985 = vpop.f32.mrb[0].mxu0
        %v1986 = vadd.f32 %v1753, %v1985
        %v1987 = vpop.f32.mrb[0].mxu0
        %v1988 = vadd.f32 %v1755, %v1987
        %1989 = vmatprep.mubr.bf16.mxu0 0
        %1990 = vmatmul.mubr.bf16.gmra.mrb[0].mxu0 %v1323
        %v1991 = vpop.f32.mrb[0].mxu0
        %v1992 = vadd.f32 %v1759, %v1991
        %v1993 = vpop.f32.mrb[0].mxu0
        %v1994 = vadd.f32 %v1761, %v1993
        %v1995 = vpop.f32.mrb[0].mxu0
        %v1996 = vadd.f32 %v1763, %v1995
        %v1997 = vpop.f32.mrb[0].mxu0
        %v1998 = vadd.f32 %v1765, %v1997
        %1999 = vmatprep.mubr.bf16.mxu0 0
        %2000 = vmatmul.mubr.bf16.gmra.mrb[0].mxu0 %v1326
        %v2001 = vpop.f32.mrb[0].mxu0
        %v2002 = vadd.f32 %v1769, %v2001
        %v2003 = vpop.f32.mrb[0].mxu0
        %v2004 = vadd.f32 %v1771, %v2003
        %v2005 = vpop.f32.mrb[0].mxu0
        %v2006 = vadd.f32 %v1773, %v2005
        %v2007 = vpop.f32.mrb[0].mxu0
        %v2008 = vadd.f32 %v1775, %v2007
        %2009 = vmatprep.mubr.bf16.mxu0 0
        %2010 = vmatmul.mubr.bf16.gmra.mrb[0].mxu0 %v1329
        %v2011 = vpop.f32.mrb[0].mxu0
        %v2012 = vadd.f32 %v1779, %v2011
        %v2013 = vpop.f32.mrb[0].mxu0
        %v2014 = vadd.f32 %v1781, %v2013
        %v2015 = vpop.f32.mrb[0].mxu0
        %v2016 = vadd.f32 %v1783, %v2015
        %v2017 = vpop.f32.mrb[0].mxu0
        %v2018 = vadd.f32 %v1785, %v2017
        %2019 = vmatprep.mubr.bf16.mxu0 0
        %2020 = vmatmul.mubr.bf16.gmra.mrb[0].mxu0 %v1332
        %v2021 = vpop.f32.mrb[0].mxu0
        %v2022 = vadd.f32 %v1789, %v2021
        %v2023 = vpop.f32.mrb[0].mxu0
        %v2024 = vadd.f32 %v1791, %v2023
        %v2025 = vpop.f32.mrb[0].mxu0
        %v2026 = vadd.f32 %v1793, %v2025
        %v2027 = vpop.f32.mrb[0].mxu0
        %v2028 = vadd.f32 %v1795, %v2027
        %2029 = vmatprep.mubr.bf16.mxu0 0
        %2030 = vmatmul.mubr.bf16.gmra.mrb[0].mxu0 %v1335
        %v2031 = vpop.f32.mrb[0].mxu0
        %v2032 = vadd.f32 %v1799, %v2031
        %v2033 = vpop.f32.mrb[0].mxu0
        %v2034 = vadd.f32 %v1801, %v2033
        %v2035 = vpop.f32.mrb[0].mxu0
        %v2036 = vadd.f32 %v1803, %v2035
        %v2037 = vpop.f32.mrb[0].mxu0
        %v2038 = vadd.f32 %v1805, %v2037
        %2039 = vmatprep.mubr.bf16.mxu0 0
        %2040 = vmatmul.mubr.bf16.gmra.mrb[0].mxu0 %v1338
        %v2041 = vpop.f32.mrb[0].mxu0
        %v2042 = vadd.f32 %v1809, %v2041
        %v2043 = vpop.f32.mrb[0].mxu0
        %v2044 = vadd.f32 %v1811, %v2043
        %v2045 = vpop.f32.mrb[0].mxu0
        %v2046 = vadd.f32 %v1813, %v2045
        %v2047 = vpop.f32.mrb[0].mxu0
        %v2048 = vadd.f32 %v1815, %v2047
        %2049 = vmatprep.mubr.bf16.mxu0 0
        %2050 = vmatmul.mubr.bf16.gmra.mrb[0].mxu0 %v1341
        %v2051 = vpop.f32.mrb[0].mxu0
        %v2052 = vadd.f32 %v1819, %v2051
        %v2053 = vpop.f32.mrb[0].mxu0
        %v2054 = vadd.f32 %v1821, %v2053
        %v2055 = vpop.f32.mrb[0].mxu0
        %v2056 = vadd.f32 %v1823, %v2055
        %v2057 = vpop.f32.mrb[0].mxu0
        %v2058 = vadd.f32 %v1825, %v2057
        %2059 = vmatprep.mubr.bf16.mxu0 0
        %2060 = vmatmul.mubr.bf16.gmra.mrb[0].mxu0 %v1344
        %v2061 = vpop.f32.mrb[0].mxu0
        %v2062 = vadd.f32 %v1829, %v2061
        %v2063 = vpop.f32.mrb[0].mxu0
        %v2064 = vadd.f32 %v1831, %v2063
        %v2065 = vpop.f32.mrb[0].mxu0
        %v2066 = vadd.f32 %v1833, %v2065
        %v2067 = vpop.f32.mrb[0].mxu0
        %v2068 = vadd.f32 %v1835, %v2067
        %2069 = vmatprep.mubr.bf16.mxu0 0
        %2070 = vmatmul.mubr.bf16.gmra.mrb[0].mxu0 %v1347
        %v2071 = vpop.f32.mrb[0].mxu0
        %v2072 = vadd.f32 %v1839, %v2071
        %v2073 = vpop.f32.mrb[0].mxu0
        %v2074 = vadd.f32 %v1841, %v2073
        %v2075 = vpop.f32.mrb[0].mxu0
        %v2076 = vadd.f32 %v1843, %v2075
        %v2077 = vpop.f32.mrb[0].mxu0
        %v2078 = vadd.f32 %v1845, %v2077
        %2079 = vdwg.mxu0
        %v2080 = vld [vmem:[#allocation2] sm:$0xff]
        %v2081 = vld [vmem:[#allocation2 + $0x8] sm:$0xff]
        %v2082 = vld [vmem:[#allocation2 + $0x10] sm:$0xff]
        %v2083 = vld [vmem:[#allocation2 + $0x18] sm:$0xff]
        %v2084 = vld [vmem:[#allocation2 + $0x20] sm:$0xff]
        %v2085 = vld [vmem:[#allocation2 + $0x28] sm:$0xff]
        %v2086 = vld [vmem:[#allocation2 + $0x30] sm:$0xff]
        %v2087 = vld [vmem:[#allocation2 + $0x38] sm:$0xff]
        %v2088 = vld [vmem:[#allocation2 + $0x40] sm:$0xff]
        %v2089 = vld [vmem:[#allocation2 + $0x48] sm:$0xff]
        %v2090 = vld [vmem:[#allocation2 + $0x50] sm:$0xff]
        %v2091 = vld [vmem:[#allocation2 + $0x58] sm:$0xff]
        %v2092 = vld [vmem:[#allocation2 + $0x60] sm:$0xff]
        %v2093 = vld [vmem:[#allocation2 + $0x68] sm:$0xff]
        %v2094 = vld [vmem:[#allocation2 + $0x70] sm:$0xff]
        %v2095 = vld [vmem:[#allocation2 + $0x78] sm:$0xff]
        %v2096 = vld [vmem:[%s6] sm:$0x3]
        %v2098 = vlaneseq
        %v2099 = vshrl.u32 %v2098, 7
        %v2100 = vsub.s32 0, %v2099
        %v2101 = vrot.slane %v2096, %v2100
        %v2102 = vlaneseq
        %v2103 = vshrl.u32 %v2102, 7
        %v2104 = vsub.s32 1, %v2103
        %v2105 = vrot.slane %v2096, %v2104
        %v2124 = vunpack.c.l.b16 %v2080
        %v2125 = vunpack.c.h.b16 %v2080
        %v2126 = vunpack.c.l.b16 %v2081
        %v2127 = vunpack.c.h.b16 %v2081
        %v2128 = vunpack.c.l.b16 %v2082
        %v2129 = vunpack.c.h.b16 %v2082
        %v2130 = vunpack.c.l.b16 %v2083
        %v2131 = vunpack.c.h.b16 %v2083
        %v2132 = vunpack.c.l.b16 %v2084
        %v2133 = vunpack.c.h.b16 %v2084
        %v2134 = vunpack.c.l.b16 %v2085
        %v2135 = vunpack.c.h.b16 %v2085
        %v2136 = vunpack.c.l.b16 %v2086
        %v2137 = vunpack.c.h.b16 %v2086
        %v2138 = vunpack.c.l.b16 %v2087
        %v2139 = vunpack.c.h.b16 %v2087
        %v2140 = vunpack.c.l.b16 %v2088
        %v2141 = vunpack.c.h.b16 %v2088
        %v2142 = vunpack.c.l.b16 %v2089
        %v2143 = vunpack.c.h.b16 %v2089
        %v2144 = vunpack.c.l.b16 %v2090
        %v2145 = vunpack.c.h.b16 %v2090
        %v2146 = vunpack.c.l.b16 %v2091
        %v2147 = vunpack.c.h.b16 %v2091
        %v2148 = vunpack.c.l.b16 %v2092
        %v2149 = vunpack.c.h.b16 %v2092
        %v2150 = vunpack.c.l.b16 %v2093
        %v2151 = vunpack.c.h.b16 %v2093
        %v2152 = vunpack.c.l.b16 %v2094
        %v2153 = vunpack.c.h.b16 %v2094
        %v2154 = vunpack.c.l.b16 %v2095
        %v2155 = vunpack.c.h.b16 %v2095
        %v2156 = vpack.c.b16 %v2126, %v2124
        %v2157 = vpack.c.b16 %v2127, %v2125
        %v2158 = vpack.c.b16 %v2130, %v2128
        %v2159 = vpack.c.b16 %v2131, %v2129
        %v2160 = vpack.c.b16 %v2134, %v2132
        %v2161 = vpack.c.b16 %v2135, %v2133
        %v2162 = vpack.c.b16 %v2138, %v2136
        %v2163 = vpack.c.b16 %v2139, %v2137
        %v2164 = vpack.c.b16 %v2142, %v2140
        %v2165 = vpack.c.b16 %v2143, %v2141
        %v2166 = vpack.c.b16 %v2146, %v2144
        %v2167 = vpack.c.b16 %v2147, %v2145
        %v2168 = vpack.c.b16 %v2150, %v2148
        %v2169 = vpack.c.b16 %v2151, %v2149
        %v2170 = vpack.c.b16 %v2154, %v2152
        %v2171 = vpack.c.b16 %v2155, %v2153
        %2188 = vmatprep.subr.bf16.mxu0 %v2157
        %2189 = vmatpush1.bf16.msra.mxu0 %v2156
        %2190 = vmatprep.subr.bf16.mxu0 %v2159
        %2191 = vmatpush1.bf16.msra.mxu0 %v2158
        %2192 = vmatprep.subr.bf16.mxu0 %v2161
        %2193 = vmatpush1.bf16.msra.mxu0 %v2160
        %2194 = vmatprep.subr.bf16.mxu0 %v2163
        %2195 = vmatpush1.bf16.msra.mxu0 %v2162
        %2196 = vmatprep.subr.bf16.mxu0 %v2165
        %2197 = vmatpush1.bf16.msra.mxu0 %v2164
        %2198 = vmatprep.subr.bf16.mxu0 %v2167
        %2199 = vmatpush1.bf16.msra.mxu0 %v2166
        %2200 = vmatprep.subr.bf16.mxu0 %v2169
        %2201 = vmatpush1.bf16.msra.mxu0 %v2168
        %2202 = vmatprep.subr.bf16.mxu0 %v2171
        %2203 = vmatpush1.bf16.msra.mxu0 %v2170
        %2204 = vmatprep.subr.bf16.mxu0 0
        %2205 = vmatpush1.bf16.msra.mxu0 0
        %2206 = vmatprep.subr.bf16.mxu0 0
        %2207 = vmatpush1.bf16.msra.mxu0 0
        %2208 = vmatprep.subr.bf16.mxu0 0
        %2209 = vmatpush1.bf16.msra.mxu0 0
        %2210 = vmatprep.subr.bf16.mxu0 0
        %2211 = vmatpush1.bf16.msra.mxu0 0
        %2212 = vmatprep.subr.bf16.mxu0 0
        %2213 = vmatpush1.bf16.msra.mxu0 0
        %2214 = vmatprep.subr.bf16.mxu0 0
        %2215 = vmatpush1.bf16.msra.mxu0 0
        %2216 = vmatprep.subr.bf16.mxu0 0
        %2217 = vmatpush1.bf16.msra.mxu0 0
        %2218 = vmatprep.subr.bf16.mxu0 0
        %2219 = vmatpush1.bf16.msra.mxu0 0
        %2220 = vmatprep.mubr.bf16.mxu0 0
        %2221 = vmatmul.mubr.bf16.gmra.mrb[0].mxu0 %v1542
        %v2222 = vpop.f32.mrb[0].mxu0
        %v2223 = vadd.f32 %v2101, %v2222
        %v2224 = vpop.f32.mrb[0].mxu0
        %v2225 = vadd.f32 %v2105, %v2224
        %v2226 = vpop.f32.mrb[0].mxu0
        %v2227 = vadd.f32 %v2101, %v2226
        %v2228 = vpop.f32.mrb[0].mxu0
        %v2229 = vadd.f32 %v2105, %v2228
        %2230 = vmatprep.mubr.bf16.mxu0 0
        %2231 = vmatmul.mubr.bf16.gmra.mrb[0].mxu0 %v1543
        %v2232 = vpop.f32.mrb[0].mxu0
        %v2233 = vadd.f32 %v2101, %v2232
        %v2234 = vpop.f32.mrb[0].mxu0
        %v2235 = vadd.f32 %v2105, %v2234
        %v2236 = vpop.f32.mrb[0].mxu0
        %v2237 = vadd.f32 %v2101, %v2236
        %v2238 = vpop.f32.mrb[0].mxu0
        %v2239 = vadd.f32 %v2105, %v2238
        %2240 = vmatprep.mubr.bf16.mxu0 0
        %2241 = vmatmul.mubr.bf16.gmra.mrb[0].mxu0 %v1544
        %v2242 = vpop.f32.mrb[0].mxu0
        %v2243 = vadd.f32 %v2101, %v2242
        %v2244 = vpop.f32.mrb[0].mxu0
        %v2245 = vadd.f32 %v2105, %v2244
        %v2246 = vpop.f32.mrb[0].mxu0
        %v2247 = vadd.f32 %v2101, %v2246
        %v2248 = vpop.f32.mrb[0].mxu0
        %v2249 = vadd.f32 %v2105, %v2248
        %2250 = vmatprep.mubr.bf16.mxu0 0
        %2251 = vmatmul.mubr.bf16.gmra.mrb[0].mxu0 %v1545
        %v2252 = vpop.f32.mrb[0].mxu0
        %v2253 = vadd.f32 %v2101, %v2252
        %v2254 = vpop.f32.mrb[0].mxu0
        %v2255 = vadd.f32 %v2105, %v2254
        %v2256 = vpop.f32.mrb[0].mxu0
        %v2257 = vadd.f32 %v2101, %v2256
        %v2258 = vpop.f32.mrb[0].mxu0
        %v2259 = vadd.f32 %v2105, %v2258
        %2260 = vmatprep.mubr.bf16.mxu0 0
        %2261 = vmatmul.mubr.bf16.gmra.mrb[0].mxu0 %v1546
        %v2262 = vpop.f32.mrb[0].mxu0
        %v2263 = vadd.f32 %v2101, %v2262
        %v2264 = vpop.f32.mrb[0].mxu0
        %v2265 = vadd.f32 %v2105, %v2264
        %v2266 = vpop.f32.mrb[0].mxu0
        %v2267 = vadd.f32 %v2101, %v2266
        %v2268 = vpop.f32.mrb[0].mxu0
        %v2269 = vadd.f32 %v2105, %v2268
        %2270 = vmatprep.mubr.bf16.mxu0 0
        %2271 = vmatmul.mubr.bf16.gmra.mrb[0].mxu0 %v1547
        %v2272 = vpop.f32.mrb[0].mxu0
        %v2273 = vadd.f32 %v2101, %v2272
        %v2274 = vpop.f32.mrb[0].mxu0
        %v2275 = vadd.f32 %v2105, %v2274
        %v2276 = vpop.f32.mrb[0].mxu0
        %v2277 = vadd.f32 %v2101, %v2276
        %v2278 = vpop.f32.mrb[0].mxu0
        %v2279 = vadd.f32 %v2105, %v2278
        %2280 = vmatprep.mubr.bf16.mxu0 0
        %2281 = vmatmul.mubr.bf16.gmra.mrb[0].mxu0 %v1548
        %v2282 = vpop.f32.mrb[0].mxu0
        %v2283 = vadd.f32 %v2101, %v2282
        %v2284 = vpop.f32.mrb[0].mxu0
        %v2285 = vadd.f32 %v2105, %v2284
        %v2286 = vpop.f32.mrb[0].mxu0
        %v2287 = vadd.f32 %v2101, %v2286
        %v2288 = vpop.f32.mrb[0].mxu0
        %v2289 = vadd.f32 %v2105, %v2288
        %2290 = vmatprep.mubr.bf16.mxu0 0
        %2291 = vmatmul.mubr.bf16.gmra.mrb[0].mxu0 %v1549
        %v2292 = vpop.f32.mrb[0].mxu0
        %v2293 = vadd.f32 %v2101, %v2292
        %v2294 = vpop.f32.mrb[0].mxu0
        %v2295 = vadd.f32 %v2105, %v2294
        %v2296 = vpop.f32.mrb[0].mxu0
        %v2297 = vadd.f32 %v2101, %v2296
        %v2298 = vpop.f32.mrb[0].mxu0
        %v2299 = vadd.f32 %v2105, %v2298
        %2300 = vmatprep.mubr.bf16.mxu0 0
        %2301 = vmatmul.mubr.bf16.gmra.mrb[0].mxu0 %v1550
        %v2302 = vpop.f32.mrb[0].mxu0
        %v2303 = vadd.f32 %v2101, %v2302
        %v2304 = vpop.f32.mrb[0].mxu0
        %v2305 = vadd.f32 %v2105, %v2304
        %v2306 = vpop.f32.mrb[0].mxu0
        %v2307 = vadd.f32 %v2101, %v2306
        %v2308 = vpop.f32.mrb[0].mxu0
        %v2309 = vadd.f32 %v2105, %v2308
        %2310 = vmatprep.mubr.bf16.mxu0 0
        %2311 = vmatmul.mubr.bf16.gmra.mrb[0].mxu0 %v1551
        %v2312 = vpop.f32.mrb[0].mxu0
        %v2313 = vadd.f32 %v2101, %v2312
        %v2314 = vpop.f32.mrb[0].mxu0
        %v2315 = vadd.f32 %v2105, %v2314
        %v2316 = vpop.f32.mrb[0].mxu0
        %v2317 = vadd.f32 %v2101, %v2316
        %v2318 = vpop.f32.mrb[0].mxu0
        %v2319 = vadd.f32 %v2105, %v2318
        %2320 = vmatprep.mubr.bf16.mxu0 0
        %2321 = vmatmul.mubr.bf16.gmra.mrb[0].mxu0 %v1552
        %v2322 = vpop.f32.mrb[0].mxu0
        %v2323 = vadd.f32 %v2101, %v2322
        %v2324 = vpop.f32.mrb[0].mxu0
        %v2325 = vadd.f32 %v2105, %v2324
        %v2326 = vpop.f32.mrb[0].mxu0
        %v2327 = vadd.f32 %v2101, %v2326
        %v2328 = vpop.f32.mrb[0].mxu0
        %v2329 = vadd.f32 %v2105, %v2328
        %2330 = vmatprep.mubr.bf16.mxu0 0
        %2331 = vmatmul.mubr.bf16.gmra.mrb[0].mxu0 %v1553
        %v2332 = vpop.f32.mrb[0].mxu0
        %v2333 = vadd.f32 %v2101, %v2332
        %v2334 = vpop.f32.mrb[0].mxu0
        %v2335 = vadd.f32 %v2105, %v2334
        %v2336 = vpop.f32.mrb[0].mxu0
        %v2337 = vadd.f32 %v2101, %v2336
        %v2338 = vpop.f32.mrb[0].mxu0
        %v2339 = vadd.f32 %v2105, %v2338
        %2340 = vmatprep.mubr.bf16.mxu0 0
        %2341 = vmatmul.mubr.bf16.gmra.mrb[0].mxu0 %v1554
        %v2342 = vpop.f32.mrb[0].mxu0
        %v2343 = vadd.f32 %v2101, %v2342
        %v2344 = vpop.f32.mrb[0].mxu0
        %v2345 = vadd.f32 %v2105, %v2344
        %v2346 = vpop.f32.mrb[0].mxu0
        %v2347 = vadd.f32 %v2101, %v2346
        %v2348 = vpop.f32.mrb[0].mxu0
        %v2349 = vadd.f32 %v2105, %v2348
        %2350 = vmatprep.mubr.bf16.mxu0 0
        %2351 = vmatmul.mubr.bf16.gmra.mrb[0].mxu0 %v1555
        %v2352 = vpop.f32.mrb[0].mxu0
        %v2353 = vadd.f32 %v2101, %v2352
        %v2354 = vpop.f32.mrb[0].mxu0
        %v2355 = vadd.f32 %v2105, %v2354
        %v2356 = vpop.f32.mrb[0].mxu0
        %v2357 = vadd.f32 %v2101, %v2356
        %v2358 = vpop.f32.mrb[0].mxu0
        %v2359 = vadd.f32 %v2105, %v2358
        %2360 = vmatprep.mubr.bf16.mxu0 0
        %2361 = vmatmul.mubr.bf16.gmra.mrb[0].mxu0 %v1556
        %v2362 = vpop.f32.mrb[0].mxu0
        %v2363 = vadd.f32 %v2101, %v2362
        %v2364 = vpop.f32.mrb[0].mxu0
        %v2365 = vadd.f32 %v2105, %v2364
        %v2366 = vpop.f32.mrb[0].mxu0
        %v2367 = vadd.f32 %v2101, %v2366
        %v2368 = vpop.f32.mrb[0].mxu0
        %v2369 = vadd.f32 %v2105, %v2368
        %2370 = vmatprep.mubr.bf16.mxu0 0
        %2371 = vmatmul.mubr.bf16.gmra.mrb[0].mxu0 %v1557
        %v2372 = vpop.f32.mrb[0].mxu0
        %v2373 = vadd.f32 %v2101, %v2372
        %v2374 = vpop.f32.mrb[0].mxu0
        %v2375 = vadd.f32 %v2105, %v2374
        %v2376 = vpop.f32.mrb[0].mxu0
        %v2377 = vadd.f32 %v2101, %v2376
        %v2378 = vpop.f32.mrb[0].mxu0
        %v2379 = vadd.f32 %v2105, %v2378
        %2380 = vdwg.mxu0
        %v2381 = vmax.f32 %v2223, 0.0
        %v2382 = vmax.f32 %v2225, 0.0
        %v2383 = vmax.f32 %v2227, 0.0
        %v2384 = vmax.f32 %v2229, 0.0
        %v2385 = vmax.f32 %v2233, 0.0
        %v2386 = vmax.f32 %v2235, 0.0
        %v2387 = vmax.f32 %v2237, 0.0
        %v2388 = vmax.f32 %v2239, 0.0
        %v2389 = vmax.f32 %v2243, 0.0
        %v2390 = vmax.f32 %v2245, 0.0
        %v2391 = vmax.f32 %v2247, 0.0
        %v2392 = vmax.f32 %v2249, 0.0
        %v2393 = vmax.f32 %v2253, 0.0
        %v2394 = vmax.f32 %v2255, 0.0
        %v2395 = vmax.f32 %v2257, 0.0
        %v2396 = vmax.f32 %v2259, 0.0
        %v2397 = vmax.f32 %v2263, 0.0
        %v2398 = vmax.f32 %v2265, 0.0
        %v2399 = vmax.f32 %v2267, 0.0
        %v2400 = vmax.f32 %v2269, 0.0
        %v2401 = vmax.f32 %v2273, 0.0
        %v2402 = vmax.f32 %v2275, 0.0
        %v2403 = vmax.f32 %v2277, 0.0
        %v2404 = vmax.f32 %v2279, 0.0
        %v2405 = vmax.f32 %v2283, 0.0
        %v2406 = vmax.f32 %v2285, 0.0
        %v2407 = vmax.f32 %v2287, 0.0
        %v2408 = vmax.f32 %v2289, 0.0
        %v2409 = vmax.f32 %v2293, 0.0
        %v2410 = vmax.f32 %v2295, 0.0
        %v2411 = vmax.f32 %v2297, 0.0
        %v2412 = vmax.f32 %v2299, 0.0
        %v2413 = vmax.f32 %v2303, 0.0
        %v2414 = vmax.f32 %v2305, 0.0
        %v2415 = vmax.f32 %v2307, 0.0
        %v2416 = vmax.f32 %v2309, 0.0
        %v2417 = vmax.f32 %v2313, 0.0
        %v2418 = vmax.f32 %v2315, 0.0
        %v2419 = vmax.f32 %v2317, 0.0
        %v2420 = vmax.f32 %v2319, 0.0
        %v2421 = vmax.f32 %v2323, 0.0
        %v2422 = vmax.f32 %v2325, 0.0
        %v2423 = vmax.f32 %v2327, 0.0
        %v2424 = vmax.f32 %v2329, 0.0
        %v2425 = vmax.f32 %v2333, 0.0
        %v2426 = vmax.f32 %v2335, 0.0
        %v2427 = vmax.f32 %v2337, 0.0
        %v2428 = vmax.f32 %v2339, 0.0
        %v2429 = vmax.f32 %v2343, 0.0
        %v2430 = vmax.f32 %v2345, 0.0
        %v2431 = vmax.f32 %v2347, 0.0
        %v2432 = vmax.f32 %v2349, 0.0
        %v2433 = vmax.f32 %v2353, 0.0
        %v2434 = vmax.f32 %v2355, 0.0
        %v2435 = vmax.f32 %v2357, 0.0
        %v2436 = vmax.f32 %v2359, 0.0
        %v2437 = vmax.f32 %v2363, 0.0
        %v2438 = vmax.f32 %v2365, 0.0
        %v2439 = vmax.f32 %v2367, 0.0
        %v2440 = vmax.f32 %v2369, 0.0
        %v2441 = vmax.f32 %v2373, 0.0
        %v2442 = vmax.f32 %v2375, 0.0
        %v2443 = vmax.f32 %v2377, 0.0
        %v2444 = vmax.f32 %v2379, 0.0
        %v2445 = vpack.c.bf16 %v2383, %v2381
        %v2446 = vpack.c.bf16 %v2384, %v2382
        %v2447 = vpack.c.bf16 %v2387, %v2385
        %v2448 = vpack.c.bf16 %v2388, %v2386
        %v2449 = vpack.c.bf16 %v2391, %v2389
        %v2450 = vpack.c.bf16 %v2392, %v2390
        %v2451 = vpack.c.bf16 %v2395, %v2393
        %v2452 = vpack.c.bf16 %v2396, %v2394
        %v2453 = vpack.c.bf16 %v2399, %v2397
        %v2454 = vpack.c.bf16 %v2400, %v2398
        %v2455 = vpack.c.bf16 %v2403, %v2401
        %v2456 = vpack.c.bf16 %v2404, %v2402
        %v2457 = vpack.c.bf16 %v2407, %v2405
        %v2458 = vpack.c.bf16 %v2408, %v2406
        %v2459 = vpack.c.bf16 %v2411, %v2409
        %v2460 = vpack.c.bf16 %v2412, %v2410
        %v2461 = vpack.c.bf16 %v2415, %v2413
        %v2462 = vpack.c.bf16 %v2416, %v2414
        %v2463 = vpack.c.bf16 %v2419, %v2417
        %v2464 = vpack.c.bf16 %v2420, %v2418
        %v2465 = vpack.c.bf16 %v2423, %v2421
        %v2466 = vpack.c.bf16 %v2424, %v2422
        %v2467 = vpack.c.bf16 %v2427, %v2425
        %v2468 = vpack.c.bf16 %v2428, %v2426
        %v2469 = vpack.c.bf16 %v2431, %v2429
        %v2470 = vpack.c.bf16 %v2432, %v2430
        %v2471 = vpack.c.bf16 %v2435, %v2433
        %v2472 = vpack.c.bf16 %v2436, %v2434
        %v2473 = vpack.c.bf16 %v2439, %v2437
        %v2474 = vpack.c.bf16 %v2440, %v2438
        %v2475 = vpack.c.bf16 %v2443, %v2441
        %v2476 = vpack.c.bf16 %v2444, %v2442
        %v2477 = vld [vmem:[%s9 + $0xc0] sm:$0xff]
        %v2478 = vld [vmem:[%s9 + $0xc8] sm:$0xff]
        %v2479 = vld [vmem:[%s9 + $0xd0] sm:$0xff]
        %v2480 = vld [vmem:[%s9 + $0xd8] sm:$0xff]
        %v2481 = vld [vmem:[%s9 + $0xe0] sm:$0xff]
        %v2482 = vld [vmem:[%s9 + $0xe8] sm:$0xff]
        %v2483 = vld [vmem:[%s9 + $0xf0] sm:$0xff]
        %v2484 = vld [vmem:[%s9 + $0xf8] sm:$0xff]
        %v2485 = vld [vmem:[%s9 + $0x100] sm:$0xff]
        %v2486 = vld [vmem:[%s9 + $0x108] sm:$0xff]
        %v2487 = vld [vmem:[%s9 + $0x110] sm:$0xff]
        %v2488 = vld [vmem:[%s9 + $0x118] sm:$0xff]
        %v2489 = vld [vmem:[%s9 + $0x120] sm:$0xff]
        %v2490 = vld [vmem:[%s9 + $0x128] sm:$0xff]
        %v2491 = vld [vmem:[%s9 + $0x130] sm:$0xff]
        %v2492 = vld [vmem:[%s9 + $0x138] sm:$0xff]
        %v2493 = vld [vmem:[%s9 + $0x140] sm:$0xff]
        %v2494 = vld [vmem:[%s9 + $0x148] sm:$0xff]
        %v2495 = vld [vmem:[%s9 + $0x150] sm:$0xff]
        %v2496 = vld [vmem:[%s9 + $0x158] sm:$0xff]
        %v2497 = vld [vmem:[%s9 + $0x160] sm:$0xff]
        %v2498 = vld [vmem:[%s9 + $0x168] sm:$0xff]
        %v2499 = vld [vmem:[%s9 + $0x170] sm:$0xff]
        %v2500 = vld [vmem:[%s9 + $0x178] sm:$0xff]
        %v2501 = vld [vmem:[%s9 + $0x180] sm:$0xff]
        %v2502 = vld [vmem:[%s9 + $0x188] sm:$0xff]
        %v2503 = vld [vmem:[%s9 + $0x190] sm:$0xff]
        %v2504 = vld [vmem:[%s9 + $0x198] sm:$0xff]
        %v2505 = vld [vmem:[%s9 + $0x1a0] sm:$0xff]
        %v2506 = vld [vmem:[%s9 + $0x1a8] sm:$0xff]
        %v2507 = vld [vmem:[%s9 + $0x1b0] sm:$0xff]
        %v2508 = vld [vmem:[%s9 + $0x1b8] sm:$0xff]
        %v2541 = vunpack.c.l.b16 %v2477
        %v2542 = vunpack.c.h.b16 %v2477
        %v2543 = vunpack.c.l.b16 %v2478
        %v2544 = vunpack.c.h.b16 %v2478
        %v2545 = vunpack.c.l.b16 %v2479
        %v2546 = vunpack.c.h.b16 %v2479
        %v2547 = vunpack.c.l.b16 %v2480
        %v2548 = vunpack.c.h.b16 %v2480
        %v2549 = vunpack.c.l.b16 %v2481
        %v2550 = vunpack.c.h.b16 %v2481
        %v2551 = vunpack.c.l.b16 %v2482
        %v2552 = vunpack.c.h.b16 %v2482
        %v2553 = vunpack.c.l.b16 %v2483
        %v2554 = vunpack.c.h.b16 %v2483
        %v2555 = vunpack.c.l.b16 %v2484
        %v2556 = vunpack.c.h.b16 %v2484
        %v2557 = vunpack.c.l.b16 %v2485
        %v2558 = vunpack.c.h.b16 %v2485
        %v2559 = vunpack.c.l.b16 %v2486
        %v2560 = vunpack.c.h.b16 %v2486
        %v2561 = vunpack.c.l.b16 %v2487
        %v2562 = vunpack.c.h.b16 %v2487
        %v2563 = vunpack.c.l.b16 %v2488
        %v2564 = vunpack.c.h.b16 %v2488
        %v2565 = vunpack.c.l.b16 %v2489
        %v2566 = vunpack.c.h.b16 %v2489
        %v2567 = vunpack.c.l.b16 %v2490
        %v2568 = vunpack.c.h.b16 %v2490
        %v2569 = vunpack.c.l.b16 %v2491
        %v2570 = vunpack.c.h.b16 %v2491
        %v2571 = vunpack.c.l.b16 %v2492
        %v2572 = vunpack.c.h.b16 %v2492
        %v2573 = vunpack.c.l.b16 %v2493
        %v2574 = vunpack.c.h.b16 %v2493
        %v2575 = vunpack.c.l.b16 %v2494
        %v2576 = vunpack.c.h.b16 %v2494
        %v2577 = vunpack.c.l.b16 %v2495
        %v2578 = vunpack.c.h.b16 %v2495
        %v2579 = vunpack.c.l.b16 %v2496
        %v2580 = vunpack.c.h.b16 %v2496
        %v2581 = vunpack.c.l.b16 %v2497
        %v2582 = vunpack.c.h.b16 %v2497
        %v2583 = vunpack.c.l.b16 %v2498
        %v2584 = vunpack.c.h.b16 %v2498
        %v2585 = vunpack.c.l.b16 %v2499
        %v2586 = vunpack.c.h.b16 %v2499
        %v2587 = vunpack.c.l.b16 %v2500
        %v2588 = vunpack.c.h.b16 %v2500
        %v2589 = vunpack.c.l.b16 %v2501
        %v2590 = vunpack.c.h.b16 %v2501
        %v2591 = vunpack.c.l.b16 %v2502
        %v2592 = vunpack.c.h.b16 %v2502
        %v2593 = vunpack.c.l.b16 %v2503
        %v2594 = vunpack.c.h.b16 %v2503
        %v2595 = vunpack.c.l.b16 %v2504
        %v2596 = vunpack.c.h.b16 %v2504
        %v2597 = vunpack.c.l.b16 %v2505
        %v2598 = vunpack.c.h.b16 %v2505
        %v2599 = vunpack.c.l.b16 %v2506
        %v2600 = vunpack.c.h.b16 %v2506
        %v2601 = vunpack.c.l.b16 %v2507
        %v2602 = vunpack.c.h.b16 %v2507
        %v2603 = vunpack.c.l.b16 %v2508
        %v2604 = vunpack.c.h.b16 %v2508
        %v2605 = vpack.c.b16 %v2543, %v2541
        %v2606 = vpack.c.b16 %v2544, %v2542
        %v2607 = vpack.c.b16 %v2547, %v2545
        %v2608 = vpack.c.b16 %v2548, %v2546
        %v2609 = vpack.c.b16 %v2551, %v2549
        %v2610 = vpack.c.b16 %v2552, %v2550
        %v2611 = vpack.c.b16 %v2555, %v2553
        %v2612 = vpack.c.b16 %v2556, %v2554
        %v2613 = vpack.c.b16 %v2559, %v2557
        %v2614 = vpack.c.b16 %v2560, %v2558
        %v2615 = vpack.c.b16 %v2563, %v2561
        %v2616 = vpack.c.b16 %v2564, %v2562
        %v2617 = vpack.c.b16 %v2567, %v2565
        %v2618 = vpack.c.b16 %v2568, %v2566
        %v2619 = vpack.c.b16 %v2571, %v2569
        %v2620 = vpack.c.b16 %v2572, %v2570
        %v2621 = vpack.c.b16 %v2575, %v2573
        %v2622 = vpack.c.b16 %v2576, %v2574
        %v2623 = vpack.c.b16 %v2579, %v2577
        %v2624 = vpack.c.b16 %v2580, %v2578
        %v2625 = vpack.c.b16 %v2583, %v2581
        %v2626 = vpack.c.b16 %v2584, %v2582
        %v2627 = vpack.c.b16 %v2587, %v2585
        %v2628 = vpack.c.b16 %v2588, %v2586
        %v2629 = vpack.c.b16 %v2591, %v2589
        %v2630 = vpack.c.b16 %v2592, %v2590
        %v2631 = vpack.c.b16 %v2595, %v2593
        %v2632 = vpack.c.b16 %v2596, %v2594
        %v2633 = vpack.c.b16 %v2599, %v2597
        %v2634 = vpack.c.b16 %v2600, %v2598
        %v2635 = vpack.c.b16 %v2603, %v2601
        %v2636 = vpack.c.b16 %v2604, %v2602
        %2669 = vmatprep.subr.bf16.mxu0 %v2606
        %2670 = vmatpush1.bf16.msra.mxu0 %v2605
        %2671 = vmatprep.subr.bf16.mxu0 %v2608
        %2672 = vmatpush1.bf16.msra.mxu0 %v2607
        %2673 = vmatprep.subr.bf16.mxu0 %v2610
        %2674 = vmatpush1.bf16.msra.mxu0 %v2609
        %2675 = vmatprep.subr.bf16.mxu0 %v2612
        %2676 = vmatpush1.bf16.msra.mxu0 %v2611
        %2677 = vmatprep.subr.bf16.mxu0 %v2614
        %2678 = vmatpush1.bf16.msra.mxu0 %v2613
        %2679 = vmatprep.subr.bf16.mxu0 %v2616
        %2680 = vmatpush1.bf16.msra.mxu0 %v2615
        %2681 = vmatprep.subr.bf16.mxu0 %v2618
        %2682 = vmatpush1.bf16.msra.mxu0 %v2617
        %2683 = vmatprep.subr.bf16.mxu0 %v2620
        %2684 = vmatpush1.bf16.msra.mxu0 %v2619
        %2685 = vmatprep.subr.bf16.mxu0 %v2622
        %2686 = vmatpush1.bf16.msra.mxu0 %v2621
        %2687 = vmatprep.subr.bf16.mxu0 %v2624
        %2688 = vmatpush1.bf16.msra.mxu0 %v2623
        %2689 = vmatprep.subr.bf16.mxu0 %v2626
        %2690 = vmatpush1.bf16.msra.mxu0 %v2625
        %2691 = vmatprep.subr.bf16.mxu0 %v2628
        %2692 = vmatpush1.bf16.msra.mxu0 %v2627
        %2693 = vmatprep.subr.bf16.mxu0 %v2630
        %2694 = vmatpush1.bf16.msra.mxu0 %v2629
        %2695 = vmatprep.subr.bf16.mxu0 %v2632
        %2696 = vmatpush1.bf16.msra.mxu0 %v2631
        %2697 = vmatprep.subr.bf16.mxu0 %v2634
        %2698 = vmatpush1.bf16.msra.mxu0 %v2633
        %2699 = vmatprep.subr.bf16.mxu0 %v2636
        %2700 = vmatpush1.bf16.msra.mxu0 %v2635
        %2701 = vmatprep.mubr.bf16.mxu0 %v2446
        %2702 = vmatmul.mubr.bf16.gmra.mrb[0].mxu0 %v2445
        %v2703 = vpop.f32.mrb[0].mxu0
        %v2704 = vadd.f32 0.0, %v2703
        %v2705 = vpop.f32.mrb[0].mxu0
        %v2706 = vadd.f32 0.0, %v2705
        %v2707 = vpop.f32.mrb[0].mxu0
        %v2708 = vadd.f32 0.0, %v2707
        %v2709 = vpop.f32.mrb[0].mxu0
        %v2710 = vadd.f32 0.0, %v2709
        %2711 = vmatprep.mubr.bf16.mxu0 %v2448
        %2712 = vmatmul.mubr.bf16.gmra.mrb[0].mxu0 %v2447
        %v2713 = vpop.f32.mrb[0].mxu0
        %v2714 = vadd.f32 0.0, %v2713
        %v2715 = vpop.f32.mrb[0].mxu0
        %v2716 = vadd.f32 0.0, %v2715
        %v2717 = vpop.f32.mrb[0].mxu0
        %v2718 = vadd.f32 0.0, %v2717
        %v2719 = vpop.f32.mrb[0].mxu0
        %v2720 = vadd.f32 0.0, %v2719
        %2721 = vmatprep.mubr.bf16.mxu0 %v2450
        %2722 = vmatmul.mubr.bf16.gmra.mrb[0].mxu0 %v2449
        %v2723 = vpop.f32.mrb[0].mxu0
        %v2724 = vadd.f32 0.0, %v2723
        %v2725 = vpop.f32.mrb[0].mxu0
        %v2726 = vadd.f32 0.0, %v2725
        %v2727 = vpop.f32.mrb[0].mxu0
        %v2728 = vadd.f32 0.0, %v2727
        %v2729 = vpop.f32.mrb[0].mxu0
        %v2730 = vadd.f32 0.0, %v2729
        %2731 = vmatprep.mubr.bf16.mxu0 %v2452
        %2732 = vmatmul.mubr.bf16.gmra.mrb[0].mxu0 %v2451
        %v2733 = vpop.f32.mrb[0].mxu0
        %v2734 = vadd.f32 0.0, %v2733
        %v2735 = vpop.f32.mrb[0].mxu0
        %v2736 = vadd.f32 0.0, %v2735
        %v2737 = vpop.f32.mrb[0].mxu0
        %v2738 = vadd.f32 0.0, %v2737
        %v2739 = vpop.f32.mrb[0].mxu0
        %v2740 = vadd.f32 0.0, %v2739
        %2741 = vmatprep.mubr.bf16.mxu0 %v2454
        %2742 = vmatmul.mubr.bf16.gmra.mrb[0].mxu0 %v2453
        %v2743 = vpop.f32.mrb[0].mxu0
        %v2744 = vadd.f32 0.0, %v2743
        %v2745 = vpop.f32.mrb[0].mxu0
        %v2746 = vadd.f32 0.0, %v2745
        %v2747 = vpop.f32.mrb[0].mxu0
        %v2748 = vadd.f32 0.0, %v2747
        %v2749 = vpop.f32.mrb[0].mxu0
        %v2750 = vadd.f32 0.0, %v2749
        %2751 = vmatprep.mubr.bf16.mxu0 %v2456
        %2752 = vmatmul.mubr.bf16.gmra.mrb[0].mxu0 %v2455
        %v2753 = vpop.f32.mrb[0].mxu0
        %v2754 = vadd.f32 0.0, %v2753
        %v2755 = vpop.f32.mrb[0].mxu0
        %v2756 = vadd.f32 0.0, %v2755
        %v2757 = vpop.f32.mrb[0].mxu0
        %v2758 = vadd.f32 0.0, %v2757
        %v2759 = vpop.f32.mrb[0].mxu0
        %v2760 = vadd.f32 0.0, %v2759
        %2761 = vmatprep.mubr.bf16.mxu0 %v2458
        %2762 = vmatmul.mubr.bf16.gmra.mrb[0].mxu0 %v2457
        %v2763 = vpop.f32.mrb[0].mxu0
        %v2764 = vadd.f32 0.0, %v2763
        %v2765 = vpop.f32.mrb[0].mxu0
        %v2766 = vadd.f32 0.0, %v2765
        %v2767 = vpop.f32.mrb[0].mxu0
        %v2768 = vadd.f32 0.0, %v2767
        %v2769 = vpop.f32.mrb[0].mxu0
        %v2770 = vadd.f32 0.0, %v2769
        %2771 = vmatprep.mubr.bf16.mxu0 %v2460
        %2772 = vmatmul.mubr.bf16.gmra.mrb[0].mxu0 %v2459
        %v2773 = vpop.f32.mrb[0].mxu0
        %v2774 = vadd.f32 0.0, %v2773
        %v2775 = vpop.f32.mrb[0].mxu0
        %v2776 = vadd.f32 0.0, %v2775
        %v2777 = vpop.f32.mrb[0].mxu0
        %v2778 = vadd.f32 0.0, %v2777
        %v2779 = vpop.f32.mrb[0].mxu0
        %v2780 = vadd.f32 0.0, %v2779
        %2781 = vmatprep.mubr.bf16.mxu0 %v2462
        %2782 = vmatmul.mubr.bf16.gmra.mrb[0].mxu0 %v2461
        %v2783 = vpop.f32.mrb[0].mxu0
        %v2784 = vadd.f32 0.0, %v2783
        %v2785 = vpop.f32.mrb[0].mxu0
        %v2786 = vadd.f32 0.0, %v2785
        %v2787 = vpop.f32.mrb[0].mxu0
        %v2788 = vadd.f32 0.0, %v2787
        %v2789 = vpop.f32.mrb[0].mxu0
        %v2790 = vadd.f32 0.0, %v2789
        %2791 = vmatprep.mubr.bf16.mxu0 %v2464
        %2792 = vmatmul.mubr.bf16.gmra.mrb[0].mxu0 %v2463
        %v2793 = vpop.f32.mrb[0].mxu0
        %v2794 = vadd.f32 0.0, %v2793
        %v2795 = vpop.f32.mrb[0].mxu0
        %v2796 = vadd.f32 0.0, %v2795
        %v2797 = vpop.f32.mrb[0].mxu0
        %v2798 = vadd.f32 0.0, %v2797
        %v2799 = vpop.f32.mrb[0].mxu0
        %v2800 = vadd.f32 0.0, %v2799
        %2801 = vmatprep.mubr.bf16.mxu0 %v2466
        %2802 = vmatmul.mubr.bf16.gmra.mrb[0].mxu0 %v2465
        %v2803 = vpop.f32.mrb[0].mxu0
        %v2804 = vadd.f32 0.0, %v2803
        %v2805 = vpop.f32.mrb[0].mxu0
        %v2806 = vadd.f32 0.0, %v2805
        %v2807 = vpop.f32.mrb[0].mxu0
        %v2808 = vadd.f32 0.0, %v2807
        %v2809 = vpop.f32.mrb[0].mxu0
        %v2810 = vadd.f32 0.0, %v2809
        %2811 = vmatprep.mubr.bf16.mxu0 %v2468
        %2812 = vmatmul.mubr.bf16.gmra.mrb[0].mxu0 %v2467
        %v2813 = vpop.f32.mrb[0].mxu0
        %v2814 = vadd.f32 0.0, %v2813
        %v2815 = vpop.f32.mrb[0].mxu0
        %v2816 = vadd.f32 0.0, %v2815
        %v2817 = vpop.f32.mrb[0].mxu0
        %v2818 = vadd.f32 0.0, %v2817
        %v2819 = vpop.f32.mrb[0].mxu0
        %v2820 = vadd.f32 0.0, %v2819
        %2821 = vmatprep.mubr.bf16.mxu0 %v2470
        %2822 = vmatmul.mubr.bf16.gmra.mrb[0].mxu0 %v2469
        %v2823 = vpop.f32.mrb[0].mxu0
        %v2824 = vadd.f32 0.0, %v2823
        %v2825 = vpop.f32.mrb[0].mxu0
        %v2826 = vadd.f32 0.0, %v2825
        %v2827 = vpop.f32.mrb[0].mxu0
        %v2828 = vadd.f32 0.0, %v2827
        %v2829 = vpop.f32.mrb[0].mxu0
        %v2830 = vadd.f32 0.0, %v2829
        %2831 = vmatprep.mubr.bf16.mxu0 %v2472
        %2832 = vmatmul.mubr.bf16.gmra.mrb[0].mxu0 %v2471
        %v2833 = vpop.f32.mrb[0].mxu0
        %v2834 = vadd.f32 0.0, %v2833
        %v2835 = vpop.f32.mrb[0].mxu0
        %v2836 = vadd.f32 0.0, %v2835
        %v2837 = vpop.f32.mrb[0].mxu0
        %v2838 = vadd.f32 0.0, %v2837
        %v2839 = vpop.f32.mrb[0].mxu0
        %v2840 = vadd.f32 0.0, %v2839
        %2841 = vmatprep.mubr.bf16.mxu0 %v2474
        %2842 = vmatmul.mubr.bf16.gmra.mrb[0].mxu0 %v2473
        %v2843 = vpop.f32.mrb[0].mxu0
        %v2844 = vadd.f32 0.0, %v2843
        %v2845 = vpop.f32.mrb[0].mxu0
        %v2846 = vadd.f32 0.0, %v2845
        %v2847 = vpop.f32.mrb[0].mxu0
        %v2848 = vadd.f32 0.0, %v2847
        %v2849 = vpop.f32.mrb[0].mxu0
        %v2850 = vadd.f32 0.0, %v2849
        %2851 = vmatprep.mubr.bf16.mxu0 %v2476
        %2852 = vmatmul.mubr.bf16.gmra.mrb[0].mxu0 %v2475
        %v2853 = vpop.f32.mrb[0].mxu0
        %v2854 = vadd.f32 0.0, %v2853
        %v2855 = vpop.f32.mrb[0].mxu0
        %v2856 = vadd.f32 0.0, %v2855
        %v2857 = vpop.f32.mrb[0].mxu0
        %v2858 = vadd.f32 0.0, %v2857
        %v2859 = vpop.f32.mrb[0].mxu0
        %v2860 = vadd.f32 0.0, %v2859
        %2861 = vdwg.mxu0
        %v2862 = vadd.f32 %v1922, %v2704
        %v2863 = vadd.f32 %v1924, %v2706
        %v2864 = vadd.f32 %v1926, %v2708
        %v2865 = vadd.f32 %v1928, %v2710
        %v2866 = vadd.f32 %v1932, %v2714
        %v2867 = vadd.f32 %v1934, %v2716
        %v2868 = vadd.f32 %v1936, %v2718
        %v2869 = vadd.f32 %v1938, %v2720
        %v2870 = vadd.f32 %v1942, %v2724
        %v2871 = vadd.f32 %v1944, %v2726
        %v2872 = vadd.f32 %v1946, %v2728
        %v2873 = vadd.f32 %v1948, %v2730
        %v2874 = vadd.f32 %v1952, %v2734
        %v2875 = vadd.f32 %v1954, %v2736
        %v2876 = vadd.f32 %v1956, %v2738
        %v2877 = vadd.f32 %v1958, %v2740
        %v2878 = vadd.f32 %v1962, %v2744
        %v2879 = vadd.f32 %v1964, %v2746
        %v2880 = vadd.f32 %v1966, %v2748
        %v2881 = vadd.f32 %v1968, %v2750
        %v2882 = vadd.f32 %v1972, %v2754
        %v2883 = vadd.f32 %v1974, %v2756
        %v2884 = vadd.f32 %v1976, %v2758
        %v2885 = vadd.f32 %v1978, %v2760
        %v2886 = vadd.f32 %v1982, %v2764
        %v2887 = vadd.f32 %v1984, %v2766
        %v2888 = vadd.f32 %v1986, %v2768
        %v2889 = vadd.f32 %v1988, %v2770
        %v2890 = vadd.f32 %v1992, %v2774
        %v2891 = vadd.f32 %v1994, %v2776
        %v2892 = vadd.f32 %v1996, %v2778
        %v2893 = vadd.f32 %v1998, %v2780
        %v2894 = vadd.f32 %v2002, %v2784
        %v2895 = vadd.f32 %v2004, %v2786
        %v2896 = vadd.f32 %v2006, %v2788
        %v2897 = vadd.f32 %v2008, %v2790
        %v2898 = vadd.f32 %v2012, %v2794
        %v2899 = vadd.f32 %v2014, %v2796
        %v2900 = vadd.f32 %v2016, %v2798
        %v2901 = vadd.f32 %v2018, %v2800
        %v2902 = vadd.f32 %v2022, %v2804
        %v2903 = vadd.f32 %v2024, %v2806
        %v2904 = vadd.f32 %v2026, %v2808
        %v2905 = vadd.f32 %v2028, %v2810
        %v2906 = vadd.f32 %v2032, %v2814
        %v2907 = vadd.f32 %v2034, %v2816
        %v2908 = vadd.f32 %v2036, %v2818
        %v2909 = vadd.f32 %v2038, %v2820
        %v2910 = vadd.f32 %v2042, %v2824
        %v2911 = vadd.f32 %v2044, %v2826
        %v2912 = vadd.f32 %v2046, %v2828
        %v2913 = vadd.f32 %v2048, %v2830
        %v2914 = vadd.f32 %v2052, %v2834
        %v2915 = vadd.f32 %v2054, %v2836
        %v2916 = vadd.f32 %v2056, %v2838
        %v2917 = vadd.f32 %v2058, %v2840
        %v2918 = vadd.f32 %v2062, %v2844
        %v2919 = vadd.f32 %v2064, %v2846
        %v2920 = vadd.f32 %v2066, %v2848
        %v2921 = vadd.f32 %v2068, %v2850
        %v2922 = vadd.f32 %v2072, %v2854
        %v2923 = vadd.f32 %v2074, %v2856
        %v2924 = vadd.f32 %v2076, %v2858
        %v2925 = vadd.f32 %v2078, %v2860
        %v2926 = vld [vmem:[#allocation4] sm:$0xf]
        %v2927 = vld [vmem:[#allocation4 + $0x4] sm:$0xf]
        %v2928 = vld [vmem:[#allocation4 + $0x8] sm:$0xf]
        %v2929 = vld [vmem:[#allocation4 + $0xc] sm:$0xf]
        %v2930 = vld [vmem:[#allocation4 + $0x10] sm:$0xf]
        %v2931 = vld [vmem:[#allocation4 + $0x14] sm:$0xf]
        %v2932 = vld [vmem:[#allocation4 + $0x18] sm:$0xf]
        %v2933 = vld [vmem:[#allocation4 + $0x1c] sm:$0xf]
        %v2934 = vld [vmem:[#allocation4 + $0x20] sm:$0xf]
        %v2935 = vld [vmem:[#allocation4 + $0x24] sm:$0xf]
        %v2936 = vld [vmem:[#allocation4 + $0x28] sm:$0xf]
        %v2937 = vld [vmem:[#allocation4 + $0x2c] sm:$0xf]
        %v2938 = vld [vmem:[#allocation4 + $0x30] sm:$0xf]
        %v2939 = vld [vmem:[#allocation4 + $0x34] sm:$0xf]
        %v2940 = vld [vmem:[#allocation4 + $0x38] sm:$0xf]
        %v2941 = vld [vmem:[#allocation4 + $0x3c] sm:$0xf]
        %v2942 = vld [vmem:[#allocation4 + $0x40] sm:$0xf]
        %v2943 = vld [vmem:[#allocation4 + $0x44] sm:$0xf]
        %v2944 = vld [vmem:[#allocation4 + $0x48] sm:$0xf]
        %v2945 = vld [vmem:[#allocation4 + $0x4c] sm:$0xf]
        %v2946 = vld [vmem:[#allocation4 + $0x50] sm:$0xf]
        %v2947 = vld [vmem:[#allocation4 + $0x54] sm:$0xf]
        %v2948 = vld [vmem:[#allocation4 + $0x58] sm:$0xf]
        %v2949 = vld [vmem:[#allocation4 + $0x5c] sm:$0xf]
        %v2950 = vld [vmem:[#allocation4 + $0x60] sm:$0xf]
        %v2951 = vld [vmem:[#allocation4 + $0x64] sm:$0xf]
        %v2952 = vld [vmem:[#allocation4 + $0x68] sm:$0xf]
        %v2953 = vld [vmem:[#allocation4 + $0x6c] sm:$0xf]
        %v2954 = vld [vmem:[#allocation4 + $0x70] sm:$0xf]
        %v2955 = vld [vmem:[#allocation4 + $0x74] sm:$0xf]
        %v2956 = vld [vmem:[#allocation4 + $0x78] sm:$0xf]
        %v2957 = vld [vmem:[#allocation4 + $0x7c] sm:$0xf]
        %v2958 = vld [vmem:[%s8] sm:$0x1]
        %v2960 = vlaneseq
        %v2961 = vshrl.u32 %v2960, 7
        %v2962 = vsub.s32 0, %v2961
        %v2963 = vrot.slane %v2958, %v2962
        %v2997 = vunpack.c.l.b16 %v2926
        %v2998 = vunpack.c.l.b16 %v2927
        %v2999 = vunpack.c.l.b16 %v2928
        %v3000 = vunpack.c.l.b16 %v2929
        %v3001 = vunpack.c.l.b16 %v2930
        %v3002 = vunpack.c.l.b16 %v2931
        %v3003 = vunpack.c.l.b16 %v2932
        %v3004 = vunpack.c.l.b16 %v2933
        %v3005 = vunpack.c.l.b16 %v2934
        %v3006 = vunpack.c.l.b16 %v2935
        %v3007 = vunpack.c.l.b16 %v2936
        %v3008 = vunpack.c.l.b16 %v2937
        %v3009 = vunpack.c.l.b16 %v2938
        %v3010 = vunpack.c.l.b16 %v2939
        %v3011 = vunpack.c.l.b16 %v2940
        %v3012 = vunpack.c.l.b16 %v2941
        %v3013 = vunpack.c.l.b16 %v2942
        %v3014 = vunpack.c.l.b16 %v2943
        %v3015 = vunpack.c.l.b16 %v2944
        %v3016 = vunpack.c.l.b16 %v2945
        %v3017 = vunpack.c.l.b16 %v2946
        %v3018 = vunpack.c.l.b16 %v2947
        %v3019 = vunpack.c.l.b16 %v2948
        %v3020 = vunpack.c.l.b16 %v2949
        %v3021 = vunpack.c.l.b16 %v2950
        %v3022 = vunpack.c.l.b16 %v2951
        %v3023 = vunpack.c.l.b16 %v2952
        %v3024 = vunpack.c.l.b16 %v2953
        %v3025 = vunpack.c.l.b16 %v2954
        %v3026 = vunpack.c.l.b16 %v2955
        %v3027 = vunpack.c.l.b16 %v2956
        %v3028 = vunpack.c.l.b16 %v2957
        %v3029 = vpack.c.b16 %v2998, %v2997
        %v3030 = vpack.c.b16 %v3000, %v2999
        %v3031 = vpack.c.b16 %v3002, %v3001
        %v3032 = vpack.c.b16 %v3004, %v3003
        %v3033 = vpack.c.b16 %v3006, %v3005
        %v3034 = vpack.c.b16 %v3008, %v3007
        %v3035 = vpack.c.b16 %v3010, %v3009
        %v3036 = vpack.c.b16 %v3012, %v3011
        %v3037 = vpack.c.b16 %v3014, %v3013
        %v3038 = vpack.c.b16 %v3016, %v3015
        %v3039 = vpack.c.b16 %v3018, %v3017
        %v3040 = vpack.c.b16 %v3020, %v3019
        %v3041 = vpack.c.b16 %v3022, %v3021
        %v3042 = vpack.c.b16 %v3024, %v3023
        %v3043 = vpack.c.b16 %v3026, %v3025
        %v3044 = vpack.c.b16 %v3028, %v3027
        %3061 = vmatprep.subr.bf16.mxu0 0
        %3062 = vmatpush1.bf16.msra.mxu0 %v3029
        %3063 = vmatprep.subr.bf16.mxu0 0
        %3064 = vmatpush1.bf16.msra.mxu0 %v3030
        %3065 = vmatprep.subr.bf16.mxu0 0
        %3066 = vmatpush1.bf16.msra.mxu0 %v3031
        %3067 = vmatprep.subr.bf16.mxu0 0
        %3068 = vmatpush1.bf16.msra.mxu0 %v3032
        %3069 = vmatprep.subr.bf16.mxu0 0
        %3070 = vmatpush1.bf16.msra.mxu0 %v3033
        %3071 = vmatprep.subr.bf16.mxu0 0
        %3072 = vmatpush1.bf16.msra.mxu0 %v3034
        %3073 = vmatprep.subr.bf16.mxu0 0
        %3074 = vmatpush1.bf16.msra.mxu0 %v3035
        %3075 = vmatprep.subr.bf16.mxu0 0
        %3076 = vmatpush1.bf16.msra.mxu0 %v3036
        %3077 = vmatprep.subr.bf16.mxu0 0
        %3078 = vmatpush1.bf16.msra.mxu0 %v3037
        %3079 = vmatprep.subr.bf16.mxu0 0
        %3080 = vmatpush1.bf16.msra.mxu0 %v3038
        %3081 = vmatprep.subr.bf16.mxu0 0
        %3082 = vmatpush1.bf16.msra.mxu0 %v3039
        %3083 = vmatprep.subr.bf16.mxu0 0
        %3084 = vmatpush1.bf16.msra.mxu0 %v3040
        %3085 = vmatprep.subr.bf16.mxu0 0
        %3086 = vmatpush1.bf16.msra.mxu0 %v3041
        %3087 = vmatprep.subr.bf16.mxu0 0
        %3088 = vmatpush1.bf16.msra.mxu0 %v3042
        %3089 = vmatprep.subr.bf16.mxu0 0
        %3090 = vmatpush1.bf16.msra.mxu0 %v3043
        %3091 = vmatprep.subr.bf16.mxu0 0
        %3092 = vmatpush1.bf16.msra.mxu0 %v3044
        %3093 = vmatprep.mubr.bf16.mxu0 %v2446
        %3094 = vmatmul.mubr.bf16.gmra.mrb[0].mxu0 %v2445
        %v3095 = vpop.f32.mrb[0].mxu0
        %v3096 = vadd.f32 %v2963, %v3095
        %v3097 = vpop.f32.mrb[0].mxu0
        %v3098 = vpop.f32.mrb[0].mxu0
        %v3099 = vadd.f32 %v2963, %v3098
        %v3100 = vpop.f32.mrb[0].mxu0
        %3101 = vmatprep.mubr.bf16.mxu0 %v2448
        %3102 = vmatmul.mubr.bf16.gmra.mrb[0].mxu0 %v2447
        %v3103 = vpop.f32.mrb[0].mxu0
        %v3104 = vadd.f32 %v2963, %v3103
        %v3105 = vpop.f32.mrb[0].mxu0
        %v3106 = vpop.f32.mrb[0].mxu0
        %v3107 = vadd.f32 %v2963, %v3106
        %v3108 = vpop.f32.mrb[0].mxu0
        %3109 = vmatprep.mubr.bf16.mxu0 %v2450
        %3110 = vmatmul.mubr.bf16.gmra.mrb[0].mxu0 %v2449
        %v3111 = vpop.f32.mrb[0].mxu0
        %v3112 = vadd.f32 %v2963, %v3111
        %v3113 = vpop.f32.mrb[0].mxu0
        %v3114 = vpop.f32.mrb[0].mxu0
        %v3115 = vadd.f32 %v2963, %v3114
        %v3116 = vpop.f32.mrb[0].mxu0
        %3117 = vmatprep.mubr.bf16.mxu0 %v2452
        %3118 = vmatmul.mubr.bf16.gmra.mrb[0].mxu0 %v2451
        %v3119 = vpop.f32.mrb[0].mxu0
        %v3120 = vadd.f32 %v2963, %v3119
        %v3121 = vpop.f32.mrb[0].mxu0
        %v3122 = vpop.f32.mrb[0].mxu0
        %v3123 = vadd.f32 %v2963, %v3122
        %v3124 = vpop.f32.mrb[0].mxu0
        %3125 = vmatprep.mubr.bf16.mxu0 %v2454
        %3126 = vmatmul.mubr.bf16.gmra.mrb[0].mxu0 %v2453
        %v3127 = vpop.f32.mrb[0].mxu0
        %v3128 = vadd.f32 %v2963, %v3127
        %v3129 = vpop.f32.mrb[0].mxu0
        %v3130 = vpop.f32.mrb[0].mxu0
        %v3131 = vadd.f32 %v2963, %v3130
        %v3132 = vpop.f32.mrb[0].mxu0
        %3133 = vmatprep.mubr.bf16.mxu0 %v2456
        %3134 = vmatmul.mubr.bf16.gmra.mrb[0].mxu0 %v2455
        %v3135 = vpop.f32.mrb[0].mxu0
        %v3136 = vadd.f32 %v2963, %v3135
        %v3137 = vpop.f32.mrb[0].mxu0
        %v3138 = vpop.f32.mrb[0].mxu0
        %v3139 = vadd.f32 %v2963, %v3138
        %v3140 = vpop.f32.mrb[0].mxu0
        %3141 = vmatprep.mubr.bf16.mxu0 %v2458
        %3142 = vmatmul.mubr.bf16.gmra.mrb[0].mxu0 %v2457
        %v3143 = vpop.f32.mrb[0].mxu0
        %v3144 = vadd.f32 %v2963, %v3143
        %v3145 = vpop.f32.mrb[0].mxu0
        %v3146 = vpop.f32.mrb[0].mxu0
        %v3147 = vadd.f32 %v2963, %v3146
        %v3148 = vpop.f32.mrb[0].mxu0
        %3149 = vmatprep.mubr.bf16.mxu0 %v2460
        %3150 = vmatmul.mubr.bf16.gmra.mrb[0].mxu0 %v2459
        %v3151 = vpop.f32.mrb[0].mxu0
        %v3152 = vadd.f32 %v2963, %v3151
        %v3153 = vpop.f32.mrb[0].mxu0
        %v3154 = vpop.f32.mrb[0].mxu0
        %v3155 = vadd.f32 %v2963, %v3154
        %v3156 = vpop.f32.mrb[0].mxu0
        %3157 = vmatprep.mubr.bf16.mxu0 %v2462
        %3158 = vmatmul.mubr.bf16.gmra.mrb[0].mxu0 %v2461
        %v3159 = vpop.f32.mrb[0].mxu0
        %v3160 = vadd.f32 %v2963, %v3159
        %v3161 = vpop.f32.mrb[0].mxu0
        %v3162 = vpop.f32.mrb[0].mxu0
        %v3163 = vadd.f32 %v2963, %v3162
        %v3164 = vpop.f32.mrb[0].mxu0
        %3165 = vmatprep.mubr.bf16.mxu0 %v2464
        %3166 = vmatmul.mubr.bf16.gmra.mrb[0].mxu0 %v2463
        %v3167 = vpop.f32.mrb[0].mxu0
        %v3168 = vadd.f32 %v2963, %v3167
        %v3169 = vpop.f32.mrb[0].mxu0
        %v3170 = vpop.f32.mrb[0].mxu0
        %v3171 = vadd.f32 %v2963, %v3170
        %v3172 = vpop.f32.mrb[0].mxu0
        %3173 = vmatprep.mubr.bf16.mxu0 %v2466
        %3174 = vmatmul.mubr.bf16.gmra.mrb[0].mxu0 %v2465
        %v3175 = vpop.f32.mrb[0].mxu0
        %v3176 = vadd.f32 %v2963, %v3175
        %v3177 = vpop.f32.mrb[0].mxu0
        %v3178 = vpop.f32.mrb[0].mxu0
        %v3179 = vadd.f32 %v2963, %v3178
        %v3180 = vpop.f32.mrb[0].mxu0
        %3181 = vmatprep.mubr.bf16.mxu0 %v2468
        %3182 = vmatmul.mubr.bf16.gmra.mrb[0].mxu0 %v2467
        %v3183 = vpop.f32.mrb[0].mxu0
        %v3184 = vadd.f32 %v2963, %v3183
        %v3185 = vpop.f32.mrb[0].mxu0
        %v3186 = vpop.f32.mrb[0].mxu0
        %v3187 = vadd.f32 %v2963, %v3186
        %v3188 = vpop.f32.mrb[0].mxu0
        %3189 = vmatprep.mubr.bf16.mxu0 %v2470
        %3190 = vmatmul.mubr.bf16.gmra.mrb[0].mxu0 %v2469
        %v3191 = vpop.f32.mrb[0].mxu0
        %v3192 = vadd.f32 %v2963, %v3191
        %v3193 = vpop.f32.mrb[0].mxu0
        %v3194 = vpop.f32.mrb[0].mxu0
        %v3195 = vadd.f32 %v2963, %v3194
        %v3196 = vpop.f32.mrb[0].mxu0
        %3197 = vmatprep.mubr.bf16.mxu0 %v2472
        %3198 = vmatmul.mubr.bf16.gmra.mrb[0].mxu0 %v2471
        %v3199 = vpop.f32.mrb[0].mxu0
        %v3200 = vadd.f32 %v2963, %v3199
        %v3201 = vpop.f32.mrb[0].mxu0
        %v3202 = vpop.f32.mrb[0].mxu0
        %v3203 = vadd.f32 %v2963, %v3202
        %v3204 = vpop.f32.mrb[0].mxu0
        %3205 = vmatprep.mubr.bf16.mxu0 %v2474
        %3206 = vmatmul.mubr.bf16.gmra.mrb[0].mxu0 %v2473
        %v3207 = vpop.f32.mrb[0].mxu0
        %v3208 = vadd.f32 %v2963, %v3207
        %v3209 = vpop.f32.mrb[0].mxu0
        %v3210 = vpop.f32.mrb[0].mxu0
        %v3211 = vadd.f32 %v2963, %v3210
        %v3212 = vpop.f32.mrb[0].mxu0
        %3213 = vmatprep.mubr.bf16.mxu0 %v2476
        %3214 = vmatmul.mubr.bf16.gmra.mrb[0].mxu0 %v2475
        %v3215 = vpop.f32.mrb[0].mxu0
        %v3216 = vadd.f32 %v2963, %v3215
        %v3217 = vpop.f32.mrb[0].mxu0
        %v3218 = vpop.f32.mrb[0].mxu0
        %v3219 = vadd.f32 %v2963, %v3218
        %v3220 = vpop.f32.mrb[0].mxu0
        %3221 = vdwg.mxu0
        %v3222 = vmax.f32 %v3096, %v3099
        %v3223 = vmax.f32 %v3222, %v3104
        %v3224 = vmax.f32 %v3223, %v3107
        %v3225 = vmax.f32 %v3224, %v3112
        %v3226 = vmax.f32 %v3225, %v3115
        %v3227 = vmax.f32 %v3226, %v3120
        %v3228 = vmax.f32 %v3227, %v3123
        %v3229 = vrot.slane %v3228, 4
        %v3230 = vmax.f32 %v3228, %v3229
        %v3231 = vrot.slane %v3230, 2
        %v3232 = vmax.f32 %v3230, %v3231
        %v3233 = vrot.slane %v3232, 1
        %v3234 = vmax.f32 %v3232, %v3233
        %v3235 = vmax.f32 %v3128, %v3131
        %v3236 = vmax.f32 %v3235, %v3136
        %v3237 = vmax.f32 %v3236, %v3139
        %v3238 = vmax.f32 %v3237, %v3144
        %v3239 = vmax.f32 %v3238, %v3147
        %v3240 = vmax.f32 %v3239, %v3152
        %v3241 = vmax.f32 %v3240, %v3155
        %v3242 = vrot.slane %v3241, 4
        %v3243 = vmax.f32 %v3241, %v3242
        %v3244 = vrot.slane %v3243, 2
        %v3245 = vmax.f32 %v3243, %v3244
        %v3246 = vrot.slane %v3245, 1
        %v3247 = vmax.f32 %v3245, %v3246
        %v3248 = vmax.f32 %v3160, %v3163
        %v3249 = vmax.f32 %v3248, %v3168
        %v3250 = vmax.f32 %v3249, %v3171
        %v3251 = vmax.f32 %v3250, %v3176
        %v3252 = vmax.f32 %v3251, %v3179
        %v3253 = vmax.f32 %v3252, %v3184
        %v3254 = vmax.f32 %v3253, %v3187
        %v3255 = vrot.slane %v3254, 4
        %v3256 = vmax.f32 %v3254, %v3255
        %v3257 = vrot.slane %v3256, 2
        %v3258 = vmax.f32 %v3256, %v3257
        %v3259 = vrot.slane %v3258, 1
        %v3260 = vmax.f32 %v3258, %v3259
        %v3261 = vmax.f32 %v3192, %v3195
        %v3262 = vmax.f32 %v3261, %v3200
        %v3263 = vmax.f32 %v3262, %v3203
        %v3264 = vmax.f32 %v3263, %v3208
        %v3265 = vmax.f32 %v3264, %v3211
        %v3266 = vmax.f32 %v3265, %v3216
        %v3267 = vmax.f32 %v3266, %v3219
        %v3268 = vrot.slane %v3267, 4
        %v3269 = vmax.f32 %v3267, %v3268
        %v3270 = vrot.slane %v3269, 2
        %v3271 = vmax.f32 %v3269, %v3270
        %v3272 = vrot.slane %v3271, 1
        %v3273 = vmax.f32 %v3271, %v3272
        %v3274 = vpack.c.bf16 %v3234, %v3234
        %v3275 = vpack.c.bf16 %v3247, %v3247
        %v3276 = vpack.c.bf16 %v3260, %v3260
        %v3277 = vpack.c.bf16 %v3273, %v3273
        %v3278 = vld [vmem:[%s9 + $0x1c0] sm:$0xff]
        %v3279 = vld [vmem:[%s9 + $0x1c8] sm:$0xff]
        %v3280 = vld [vmem:[%s9 + $0x1d0] sm:$0xff]
        %v3281 = vld [vmem:[%s9 + $0x1d8] sm:$0xff]
        %v3282 = vld [vmem:[%s9 + $0x1e0] sm:$0xff]
        %v3283 = vld [vmem:[%s9 + $0x1e8] sm:$0xff]
        %v3284 = vld [vmem:[%s9 + $0x1f0] sm:$0xff]
        %v3285 = vld [vmem:[%s9 + $0x1f8] sm:$0xff]
        %v3286 = vld [vmem:[%s9 + $0x200] sm:$0xff]
        %v3287 = vld [vmem:[%s9 + $0x208] sm:$0xff]
        %v3288 = vld [vmem:[%s9 + $0x210] sm:$0xff]
        %v3289 = vld [vmem:[%s9 + $0x218] sm:$0xff]
        %v3290 = vld [vmem:[%s9 + $0x220] sm:$0xff]
        %v3291 = vld [vmem:[%s9 + $0x228] sm:$0xff]
        %v3292 = vld [vmem:[%s9 + $0x230] sm:$0xff]
        %v3293 = vld [vmem:[%s9 + $0x238] sm:$0xff]
        %v3294 = vld [vmem:[%s10] sm:$0x3]
        %v3296 = vlaneseq
        %v3297 = vshrl.u32 %v3296, 7
        %v3298 = vsub.s32 0, %v3297
        %v3299 = vrot.slane %v3294, %v3298
        %v3300 = vlaneseq
        %v3301 = vshrl.u32 %v3300, 7
        %v3302 = vsub.s32 1, %v3301
        %v3303 = vrot.slane %v3294, %v3302
        %v3310 = vunpack.c.l.b16 %v3274
        %v3311 = vunpack.c.l.b16 %v3275
        %v3312 = vunpack.c.l.b16 %v3276
        %v3313 = vunpack.c.l.b16 %v3277
        %vm3314 = vcmask 1041409
        %v3315 = vsel %vm3314, %v3311, %v3310
        %vm3316 = vcmask 1042434
        %v3317 = vsel %vm3316, %v3312, %v3315
        %vm3318 = vcmask 1043459
        %v3319 = vsel %vm3318, %v3313, %v3317
        %v3320 = vpack.c.b16 %v3319, %v3319
        %v3338 = vunpack.c.l.b16 %v3278
        %v3339 = vunpack.c.h.b16 %v3278
        %v3340 = vunpack.c.l.b16 %v3279
        %v3341 = vunpack.c.h.b16 %v3279
        %v3342 = vunpack.c.l.b16 %v3280
        %v3343 = vunpack.c.h.b16 %v3280
        %v3344 = vunpack.c.l.b16 %v3281
        %v3345 = vunpack.c.h.b16 %v3281
        %v3346 = vunpack.c.l.b16 %v3282
        %v3347 = vunpack.c.h.b16 %v3282
        %v3348 = vunpack.c.l.b16 %v3283
        %v3349 = vunpack.c.h.b16 %v3283
        %v3350 = vunpack.c.l.b16 %v3284
        %v3351 = vunpack.c.h.b16 %v3284
        %v3352 = vunpack.c.l.b16 %v3285
        %v3353 = vunpack.c.h.b16 %v3285
        %v3354 = vunpack.c.l.b16 %v3286
        %v3355 = vunpack.c.h.b16 %v3286
        %v3356 = vunpack.c.l.b16 %v3287
        %v3357 = vunpack.c.h.b16 %v3287
        %v3358 = vunpack.c.l.b16 %v3288
        %v3359 = vunpack.c.h.b16 %v3288
        %v3360 = vunpack.c.l.b16 %v3289
        %v3361 = vunpack.c.h.b16 %v3289
        %v3362 = vunpack.c.l.b16 %v3290
        %v3363 = vunpack.c.h.b16 %v3290
        %v3364 = vunpack.c.l.b16 %v3291
        %v3365 = vunpack.c.h.b16 %v3291
        %v3366 = vunpack.c.l.b16 %v3292
        %v3367 = vunpack.c.h.b16 %v3292
        %v3368 = vunpack.c.l.b16 %v3293
        %v3369 = vunpack.c.h.b16 %v3293
        %v3370 = vpack.c.b16 %v3340, %v3338
        %v3371 = vpack.c.b16 %v3341, %v3339
        %v3372 = vpack.c.b16 %v3344, %v3342
        %v3373 = vpack.c.b16 %v3345, %v3343
        %v3374 = vpack.c.b16 %v3348, %v3346
        %v3375 = vpack.c.b16 %v3349, %v3347
        %v3376 = vpack.c.b16 %v3352, %v3350
        %v3377 = vpack.c.b16 %v3353, %v3351
        %v3378 = vpack.c.b16 %v3356, %v3354
        %v3379 = vpack.c.b16 %v3357, %v3355
        %v3380 = vpack.c.b16 %v3360, %v3358
        %v3381 = vpack.c.b16 %v3361, %v3359
        %v3382 = vpack.c.b16 %v3364, %v3362
        %v3383 = vpack.c.b16 %v3365, %v3363
        %v3384 = vpack.c.b16 %v3368, %v3366
        %v3385 = vpack.c.b16 %v3369, %v3367
        %3402 = vmatprep.subr.bf16.mxu0 %v3371
        %3403 = vmatpush1.bf16.msra.mxu0 %v3370
        %3404 = vmatprep.subr.bf16.mxu0 %v3373
        %3405 = vmatpush1.bf16.msra.mxu0 %v3372
        %3406 = vmatprep.subr.bf16.mxu0 %v3375
        %3407 = vmatpush1.bf16.msra.mxu0 %v3374
        %3408 = vmatprep.subr.bf16.mxu0 %v3377
        %3409 = vmatpush1.bf16.msra.mxu0 %v3376
        %3410 = vmatprep.subr.bf16.mxu0 %v3379
        %3411 = vmatpush1.bf16.msra.mxu0 %v3378
        %3412 = vmatprep.subr.bf16.mxu0 %v3381
        %3413 = vmatpush1.bf16.msra.mxu0 %v3380
        %3414 = vmatprep.subr.bf16.mxu0 %v3383
        %3415 = vmatpush1.bf16.msra.mxu0 %v3382
        %3416 = vmatprep.subr.bf16.mxu0 %v3385
        %3417 = vmatpush1.bf16.msra.mxu0 %v3384
        %3418 = vmatprep.subr.bf16.mxu0 0
        %3419 = vmatpush1.bf16.msra.mxu0 0
        %3420 = vmatprep.subr.bf16.mxu0 0
        %3421 = vmatpush1.bf16.msra.mxu0 0
        %3422 = vmatprep.subr.bf16.mxu0 0
        %3423 = vmatpush1.bf16.msra.mxu0 0
        %3424 = vmatprep.subr.bf16.mxu0 0
        %3425 = vmatpush1.bf16.msra.mxu0 0
        %3426 = vmatprep.subr.bf16.mxu0 0
        %3427 = vmatpush1.bf16.msra.mxu0 0
        %3428 = vmatprep.subr.bf16.mxu0 0
        %3429 = vmatpush1.bf16.msra.mxu0 0
        %3430 = vmatprep.subr.bf16.mxu0 0
        %3431 = vmatpush1.bf16.msra.mxu0 0
        %3432 = vmatprep.subr.bf16.mxu0 0
        %3433 = vmatpush1.bf16.msra.mxu0 0
        %3434 = vmatprep.mubr.bf16.mxu0 0
        %3435 = vmatmul.mubr.bf16.gmra.mrb[0].mxu0 %v3320
        %v3436 = vpop.f32.mrb[0].mxu0
        %v3437 = vadd.f32 %v3299, %v3436
        %v3438 = vpop.f32.mrb[0].mxu0
        %v3439 = vadd.f32 %v3303, %v3438
        %v3440 = vpop.f32.mrb[0].mxu0
        %v3441 = vpop.f32.mrb[0].mxu0
        %3442 = vdwg.mxu0
        %v3445 = vcombine.low %v3437, %v3439
        %v3447 = vunpack.c.l.s4 1966171168
        %v3448 = vunpack.c.0.s8 %v3447
        %v3449 = vlaneseq
        %v3450 = vshrl.u32 %v3449, 7
        %v3451 = vsub.s32 %v3448, %v3450
        %v3452 = vrot.slane %v3445, %v3451
        %v3453 = vcombine.high %v3452, %v3452
        %v3455 = vunpack.c.l.s4 1966171168
        %v3456 = vunpack.c.0.s8 %v3455
        %v3457 = vlaneseq
        %v3458 = vshrl.u32 %v3457, 7
        %v3459 = vsub.s32 %v3456, %v3458
        %v3460 = vrot.slane %v3452, %v3459
        %v3462 = vunpack.c.l.s4 1966171168
        %v3463 = vunpack.c.0.s8 %v3462
        %v3464 = vlaneseq
        %v3465 = vshrl.u32 %v3464, 7
        %v3466 = vsub.s32 %v3463, %v3465
        %v3467 = vrot.slane %v3453, %v3466
        %v3468 = vcombine.high %v3460, %v3460
        %v3469 = vcombine.high %v3467, %v3467
        %v3470 = vlaneseq
        %v3471 = vshrl.u32 %v3470, 7
        %v3472 = vsub.s32 0, %v3471
        %v3473 = vrot.slane %v3460, %v3472
        %v3474 = vlaneseq
        %v3475 = vshrl.u32 %v3474, 7
        %v3476 = vsub.s32 1, %v3475
        %v3477 = vrot.slane %v3460, %v3476
        %v3478 = vlaneseq
        %v3479 = vshrl.u32 %v3478, 7
        %v3480 = vsub.s32 0, %v3479
        %v3481 = vrot.slane %v3467, %v3480
        %v3482 = vlaneseq
        %v3483 = vshrl.u32 %v3482, 7
        %v3484 = vsub.s32 1, %v3483
        %v3485 = vrot.slane %v3467, %v3484
        %v3486 = vlaneseq
        %v3487 = vshrl.u32 %v3486, 7
        %v3488 = vsub.s32 0, %v3487
        %v3489 = vrot.slane %v3468, %v3488
        %v3490 = vlaneseq
        %v3491 = vshrl.u32 %v3490, 7
        %v3492 = vsub.s32 1, %v3491
        %v3493 = vrot.slane %v3468, %v3492
        %v3494 = vlaneseq
        %v3495 = vshrl.u32 %v3494, 7
        %v3496 = vsub.s32 0, %v3495
        %v3497 = vrot.slane %v3469, %v3496
        %v3498 = vlaneseq
        %v3499 = vshrl.u32 %v3498, 7
        %v3500 = vsub.s32 1, %v3499
        %v3501 = vrot.slane %v3469, %v3500
        %v3510 = vadd.f32 %v2862, %v3473
        %v3511 = vadd.f32 %v2863, %v3477
        %v3512 = vadd.f32 %v2864, %v3473
        %v3513 = vadd.f32 %v2865, %v3477
        %v3514 = vadd.f32 %v2866, %v3473
        %v3515 = vadd.f32 %v2867, %v3477
        %v3516 = vadd.f32 %v2868, %v3473
        %v3517 = vadd.f32 %v2869, %v3477
        %v3518 = vadd.f32 %v2870, %v3473
        %v3519 = vadd.f32 %v2871, %v3477
        %v3520 = vadd.f32 %v2872, %v3473
        %v3521 = vadd.f32 %v2873, %v3477
        %v3522 = vadd.f32 %v2874, %v3473
        %v3523 = vadd.f32 %v2875, %v3477
        %v3524 = vadd.f32 %v2876, %v3473
        %v3525 = vadd.f32 %v2877, %v3477
        %v3526 = vadd.f32 %v2878, %v3481
        %v3527 = vadd.f32 %v2879, %v3485
        %v3528 = vadd.f32 %v2880, %v3481
        %v3529 = vadd.f32 %v2881, %v3485
        %v3530 = vadd.f32 %v2882, %v3481
        %v3531 = vadd.f32 %v2883, %v3485
        %v3532 = vadd.f32 %v2884, %v3481
        %v3533 = vadd.f32 %v2885, %v3485
        %v3534 = vadd.f32 %v2886, %v3481
        %v3535 = vadd.f32 %v2887, %v3485
        %v3536 = vadd.f32 %v2888, %v3481
        %v3537 = vadd.f32 %v2889, %v3485
        %v3538 = vadd.f32 %v2890, %v3481
        %v3539 = vadd.f32 %v2891, %v3485
        %v3540 = vadd.f32 %v2892, %v3481
        %v3541 = vadd.f32 %v2893, %v3485
        %v3542 = vadd.f32 %v2894, %v3489
        %v3543 = vadd.f32 %v2895, %v3493
        %v3544 = vadd.f32 %v2896, %v3489
        %v3545 = vadd.f32 %v2897, %v3493
        %v3546 = vadd.f32 %v2898, %v3489
        %v3547 = vadd.f32 %v2899, %v3493
        %v3548 = vadd.f32 %v2900, %v3489
        %v3549 = vadd.f32 %v2901, %v3493
        %v3550 = vadd.f32 %v2902, %v3489
        %v3551 = vadd.f32 %v2903, %v3493
        %v3552 = vadd.f32 %v2904, %v3489
        %v3553 = vadd.f32 %v2905, %v3493
        %v3554 = vadd.f32 %v2906, %v3489
        %v3555 = vadd.f32 %v2907, %v3493
        %v3556 = vadd.f32 %v2908, %v3489
        %v3557 = vadd.f32 %v2909, %v3493
        %v3558 = vadd.f32 %v2910, %v3497
        %v3559 = vadd.f32 %v2911, %v3501
        %v3560 = vadd.f32 %v2912, %v3497
        %v3561 = vadd.f32 %v2913, %v3501
        %v3562 = vadd.f32 %v2914, %v3497
        %v3563 = vadd.f32 %v2915, %v3501
        %v3564 = vadd.f32 %v2916, %v3497
        %v3565 = vadd.f32 %v2917, %v3501
        %v3566 = vadd.f32 %v2918, %v3497
        %v3567 = vadd.f32 %v2919, %v3501
        %v3568 = vadd.f32 %v2920, %v3497
        %v3569 = vadd.f32 %v2921, %v3501
        %v3570 = vadd.f32 %v2922, %v3497
        %v3571 = vadd.f32 %v2923, %v3501
        %v3572 = vadd.f32 %v2924, %v3497
        %v3573 = vadd.f32 %v2925, %v3501
        %v3574 = vmax.f32 %v3510, 0.0
        %v3575 = vmax.f32 %v3511, 0.0
        %v3576 = vmax.f32 %v3512, 0.0
        %v3577 = vmax.f32 %v3513, 0.0
        %v3578 = vmax.f32 %v3514, 0.0
        %v3579 = vmax.f32 %v3515, 0.0
        %v3580 = vmax.f32 %v3516, 0.0
        %v3581 = vmax.f32 %v3517, 0.0
        %v3582 = vmax.f32 %v3518, 0.0
        %v3583 = vmax.f32 %v3519, 0.0
        %v3584 = vmax.f32 %v3520, 0.0
        %v3585 = vmax.f32 %v3521, 0.0
        %v3586 = vmax.f32 %v3522, 0.0
        %v3587 = vmax.f32 %v3523, 0.0
        %v3588 = vmax.f32 %v3524, 0.0
        %v3589 = vmax.f32 %v3525, 0.0
        %v3590 = vmax.f32 %v3526, 0.0
        %v3591 = vmax.f32 %v3527, 0.0
        %v3592 = vmax.f32 %v3528, 0.0
        %v3593 = vmax.f32 %v3529, 0.0
        %v3594 = vmax.f32 %v3530, 0.0
        %v3595 = vmax.f32 %v3531, 0.0
        %v3596 = vmax.f32 %v3532, 0.0
        %v3597 = vmax.f32 %v3533, 0.0
        %v3598 = vmax.f32 %v3534, 0.0
        %v3599 = vmax.f32 %v3535, 0.0
        %v3600 = vmax.f32 %v3536, 0.0
        %v3601 = vmax.f32 %v3537, 0.0
        %v3602 = vmax.f32 %v3538, 0.0
        %v3603 = vmax.f32 %v3539, 0.0
        %v3604 = vmax.f32 %v3540, 0.0
        %v3605 = vmax.f32 %v3541, 0.0
        %v3606 = vmax.f32 %v3542, 0.0
        %v3607 = vmax.f32 %v3543, 0.0
        %v3608 = vmax.f32 %v3544, 0.0
        %v3609 = vmax.f32 %v3545, 0.0
        %v3610 = vmax.f32 %v3546, 0.0
        %v3611 = vmax.f32 %v3547, 0.0
        %v3612 = vmax.f32 %v3548, 0.0
        %v3613 = vmax.f32 %v3549, 0.0
        %v3614 = vmax.f32 %v3550, 0.0
        %v3615 = vmax.f32 %v3551, 0.0
        %v3616 = vmax.f32 %v3552, 0.0
        %v3617 = vmax.f32 %v3553, 0.0
        %v3618 = vmax.f32 %v3554, 0.0
        %v3619 = vmax.f32 %v3555, 0.0
        %v3620 = vmax.f32 %v3556, 0.0
        %v3621 = vmax.f32 %v3557, 0.0
        %v3622 = vmax.f32 %v3558, 0.0
        %v3623 = vmax.f32 %v3559, 0.0
        %v3624 = vmax.f32 %v3560, 0.0
        %v3625 = vmax.f32 %v3561, 0.0
        %v3626 = vmax.f32 %v3562, 0.0
        %v3627 = vmax.f32 %v3563, 0.0
        %v3628 = vmax.f32 %v3564, 0.0
        %v3629 = vmax.f32 %v3565, 0.0
        %v3630 = vmax.f32 %v3566, 0.0
        %v3631 = vmax.f32 %v3567, 0.0
        %v3632 = vmax.f32 %v3568, 0.0
        %v3633 = vmax.f32 %v3569, 0.0
        %v3634 = vmax.f32 %v3570, 0.0
        %v3635 = vmax.f32 %v3571, 0.0
        %v3636 = vmax.f32 %v3572, 0.0
        %v3637 = vmax.f32 %v3573, 0.0
        %v3638 = vpack.c.bf16 %v3576, %v3574
        %v3639 = vpack.c.bf16 %v3577, %v3575
        %v3640 = vpack.c.bf16 %v3580, %v3578
        %v3641 = vpack.c.bf16 %v3581, %v3579
        %v3642 = vpack.c.bf16 %v3584, %v3582
        %v3643 = vpack.c.bf16 %v3585, %v3583
        %v3644 = vpack.c.bf16 %v3588, %v3586
        %v3645 = vpack.c.bf16 %v3589, %v3587
        %v3646 = vpack.c.bf16 %v3592, %v3590
        %v3647 = vpack.c.bf16 %v3593, %v3591
        %v3648 = vpack.c.bf16 %v3596, %v3594
        %v3649 = vpack.c.bf16 %v3597, %v3595
        %v3650 = vpack.c.bf16 %v3600, %v3598
        %v3651 = vpack.c.bf16 %v3601, %v3599
        %v3652 = vpack.c.bf16 %v3604, %v3602
        %v3653 = vpack.c.bf16 %v3605, %v3603
        %v3654 = vpack.c.bf16 %v3608, %v3606
        %v3655 = vpack.c.bf16 %v3609, %v3607
        %v3656 = vpack.c.bf16 %v3612, %v3610
        %v3657 = vpack.c.bf16 %v3613, %v3611
        %v3658 = vpack.c.bf16 %v3616, %v3614
        %v3659 = vpack.c.bf16 %v3617, %v3615
        %v3660 = vpack.c.bf16 %v3620, %v3618
        %v3661 = vpack.c.bf16 %v3621, %v3619
        %v3662 = vpack.c.bf16 %v3624, %v3622
        %v3663 = vpack.c.bf16 %v3625, %v3623
        %v3664 = vpack.c.bf16 %v3628, %v3626
        %v3665 = vpack.c.bf16 %v3629, %v3627
        %v3666 = vpack.c.bf16 %v3632, %v3630
        %v3667 = vpack.c.bf16 %v3633, %v3631
        %v3668 = vpack.c.bf16 %v3636, %v3634
        %v3669 = vpack.c.bf16 %v3637, %v3635
        %v3670 = vld [vmem:[#allocation6] sm:$0xf]
        %v3671 = vld [vmem:[#allocation6 + $0x4] sm:$0xf]
        %v3672 = vld [vmem:[#allocation6 + $0x8] sm:$0xf]
        %v3673 = vld [vmem:[#allocation6 + $0xc] sm:$0xf]
        %v3674 = vld [vmem:[#allocation6 + $0x10] sm:$0xf]
        %v3675 = vld [vmem:[#allocation6 + $0x14] sm:$0xf]
        %v3676 = vld [vmem:[#allocation6 + $0x18] sm:$0xf]
        %v3677 = vld [vmem:[#allocation6 + $0x1c] sm:$0xf]
        %v3678 = vld [vmem:[#allocation6 + $0x20] sm:$0xf]
        %v3679 = vld [vmem:[#allocation6 + $0x24] sm:$0xf]
        %v3680 = vld [vmem:[#allocation6 + $0x28] sm:$0xf]
        %v3681 = vld [vmem:[#allocation6 + $0x2c] sm:$0xf]
        %v3682 = vld [vmem:[#allocation6 + $0x30] sm:$0xf]
        %v3683 = vld [vmem:[#allocation6 + $0x34] sm:$0xf]
        %v3684 = vld [vmem:[#allocation6 + $0x38] sm:$0xf]
        %v3685 = vld [vmem:[#allocation6 + $0x3c] sm:$0xf]
        %v3686 = vld [vmem:[#allocation6 + $0x40] sm:$0xf]
        %v3687 = vld [vmem:[#allocation6 + $0x44] sm:$0xf]
        %v3688 = vld [vmem:[#allocation6 + $0x48] sm:$0xf]
        %v3689 = vld [vmem:[#allocation6 + $0x4c] sm:$0xf]
        %v3690 = vld [vmem:[#allocation6 + $0x50] sm:$0xf]
        %v3691 = vld [vmem:[#allocation6 + $0x54] sm:$0xf]
        %v3692 = vld [vmem:[#allocation6 + $0x58] sm:$0xf]
        %v3693 = vld [vmem:[#allocation6 + $0x5c] sm:$0xf]
        %v3694 = vld [vmem:[#allocation6 + $0x60] sm:$0xf]
        %v3695 = vld [vmem:[#allocation6 + $0x64] sm:$0xf]
        %v3696 = vld [vmem:[#allocation6 + $0x68] sm:$0xf]
        %v3697 = vld [vmem:[#allocation6 + $0x6c] sm:$0xf]
        %v3698 = vld [vmem:[#allocation6 + $0x70] sm:$0xf]
        %v3699 = vld [vmem:[#allocation6 + $0x74] sm:$0xf]
        %v3700 = vld [vmem:[#allocation6 + $0x78] sm:$0xf]
        %v3701 = vld [vmem:[#allocation6 + $0x7c] sm:$0xf]
        %v3702 = vld [vmem:[%s12] sm:$0x1]
        %v3704 = vlaneseq
        %v3705 = vshrl.u32 %v3704, 7
        %v3706 = vsub.s32 0, %v3705
        %v3707 = vrot.slane %v3702, %v3706
        %v3741 = vunpack.c.l.b16 %v3670
        %v3742 = vunpack.c.l.b16 %v3671
        %v3743 = vunpack.c.l.b16 %v3672
        %v3744 = vunpack.c.l.b16 %v3673
        %v3745 = vunpack.c.l.b16 %v3674
        %v3746 = vunpack.c.l.b16 %v3675
        %v3747 = vunpack.c.l.b16 %v3676
        %v3748 = vunpack.c.l.b16 %v3677
        %v3749 = vunpack.c.l.b16 %v3678
        %v3750 = vunpack.c.l.b16 %v3679
        %v3751 = vunpack.c.l.b16 %v3680
        %v3752 = vunpack.c.l.b16 %v3681
        %v3753 = vunpack.c.l.b16 %v3682
        %v3754 = vunpack.c.l.b16 %v3683
        %v3755 = vunpack.c.l.b16 %v3684
        %v3756 = vunpack.c.l.b16 %v3685
        %v3757 = vunpack.c.l.b16 %v3686
        %v3758 = vunpack.c.l.b16 %v3687
        %v3759 = vunpack.c.l.b16 %v3688
        %v3760 = vunpack.c.l.b16 %v3689
        %v3761 = vunpack.c.l.b16 %v3690
        %v3762 = vunpack.c.l.b16 %v3691
        %v3763 = vunpack.c.l.b16 %v3692
        %v3764 = vunpack.c.l.b16 %v3693
        %v3765 = vunpack.c.l.b16 %v3694
        %v3766 = vunpack.c.l.b16 %v3695
        %v3767 = vunpack.c.l.b16 %v3696
        %v3768 = vunpack.c.l.b16 %v3697
        %v3769 = vunpack.c.l.b16 %v3698
        %v3770 = vunpack.c.l.b16 %v3699
        %v3771 = vunpack.c.l.b16 %v3700
        %v3772 = vunpack.c.l.b16 %v3701
        %v3773 = vpack.c.b16 %v3742, %v3741
        %v3774 = vpack.c.b16 %v3744, %v3743
        %v3775 = vpack.c.b16 %v3746, %v3745
        %v3776 = vpack.c.b16 %v3748, %v3747
        %v3777 = vpack.c.b16 %v3750, %v3749
        %v3778 = vpack.c.b16 %v3752, %v3751
        %v3779 = vpack.c.b16 %v3754, %v3753
        %v3780 = vpack.c.b16 %v3756, %v3755
        %v3781 = vpack.c.b16 %v3758, %v3757
        %v3782 = vpack.c.b16 %v3760, %v3759
        %v3783 = vpack.c.b16 %v3762, %v3761
        %v3784 = vpack.c.b16 %v3764, %v3763
        %v3785 = vpack.c.b16 %v3766, %v3765
        %v3786 = vpack.c.b16 %v3768, %v3767
        %v3787 = vpack.c.b16 %v3770, %v3769
        %v3788 = vpack.c.b16 %v3772, %v3771
        %3805 = vmatprep.subr.bf16.mxu0 0
        %3806 = vmatpush1.bf16.msra.mxu0 %v3773
        %3807 = vmatprep.subr.bf16.mxu0 0
        %3808 = vmatpush1.bf16.msra.mxu0 %v3774
        %3809 = vmatprep.subr.bf16.mxu0 0
        %3810 = vmatpush1.bf16.msra.mxu0 %v3775
        %3811 = vmatprep.subr.bf16.mxu0 0
        %3812 = vmatpush1.bf16.msra.mxu0 %v3776
        %3813 = vmatprep.subr.bf16.mxu0 0
        %3814 = vmatpush1.bf16.msra.mxu0 %v3777
        %3815 = vmatprep.subr.bf16.mxu0 0
        %3816 = vmatpush1.bf16.msra.mxu0 %v3778
        %3817 = vmatprep.subr.bf16.mxu0 0
        %3818 = vmatpush1.bf16.msra.mxu0 %v3779
        %3819 = vmatprep.subr.bf16.mxu0 0
        %3820 = vmatpush1.bf16.msra.mxu0 %v3780
        %3821 = vmatprep.subr.bf16.mxu0 0
        %3822 = vmatpush1.bf16.msra.mxu0 %v3781
        %3823 = vmatprep.subr.bf16.mxu0 0
        %3824 = vmatpush1.bf16.msra.mxu0 %v3782
        %3825 = vmatprep.subr.bf16.mxu0 0
        %3826 = vmatpush1.bf16.msra.mxu0 %v3783
        %3827 = vmatprep.subr.bf16.mxu0 0
        %3828 = vmatpush1.bf16.msra.mxu0 %v3784
        %3829 = vmatprep.subr.bf16.mxu0 0
        %3830 = vmatpush1.bf16.msra.mxu0 %v3785
        %3831 = vmatprep.subr.bf16.mxu0 0
        %3832 = vmatpush1.bf16.msra.mxu0 %v3786
        %3833 = vmatprep.subr.bf16.mxu0 0
        %3834 = vmatpush1.bf16.msra.mxu0 %v3787
        %3835 = vmatprep.subr.bf16.mxu0 0
        %3836 = vmatpush1.bf16.msra.mxu0 %v3788
        %3837 = vmatprep.mubr.bf16.mxu0 %v3639
        %3838 = vmatmul.mubr.bf16.gmra.mrb[0].mxu0 %v3638
        %v3839 = vpop.f32.mrb[0].mxu0
        %v3840 = vadd.f32 %v3707, %v3839
        %v3841 = vpop.f32.mrb[0].mxu0
        %v3842 = vpop.f32.mrb[0].mxu0
        %v3843 = vadd.f32 %v3707, %v3842
        %v3844 = vpop.f32.mrb[0].mxu0
        %3845 = vmatprep.mubr.bf16.mxu0 %v3641
        %3846 = vmatmul.mubr.bf16.gmra.mrb[0].mxu0 %v3640
        %v3847 = vpop.f32.mrb[0].mxu0
        %v3848 = vadd.f32 %v3707, %v3847
        %v3849 = vpop.f32.mrb[0].mxu0
        %v3850 = vpop.f32.mrb[0].mxu0
        %v3851 = vadd.f32 %v3707, %v3850
        %v3852 = vpop.f32.mrb[0].mxu0
        %3853 = vmatprep.mubr.bf16.mxu0 %v3643
        %3854 = vmatmul.mubr.bf16.gmra.mrb[0].mxu0 %v3642
        %v3855 = vpop.f32.mrb[0].mxu0
        %v3856 = vadd.f32 %v3707, %v3855
        %v3857 = vpop.f32.mrb[0].mxu0
        %v3858 = vpop.f32.mrb[0].mxu0
        %v3859 = vadd.f32 %v3707, %v3858
        %v3860 = vpop.f32.mrb[0].mxu0
        %3861 = vmatprep.mubr.bf16.mxu0 %v3645
        %3862 = vmatmul.mubr.bf16.gmra.mrb[0].mxu0 %v3644
        %v3863 = vpop.f32.mrb[0].mxu0
        %v3864 = vadd.f32 %v3707, %v3863
        %v3865 = vpop.f32.mrb[0].mxu0
        %v3866 = vpop.f32.mrb[0].mxu0
        %v3867 = vadd.f32 %v3707, %v3866
        %v3868 = vpop.f32.mrb[0].mxu0
        %3869 = vmatprep.mubr.bf16.mxu0 %v3647
        %3870 = vmatmul.mubr.bf16.gmra.mrb[0].mxu0 %v3646
        %v3871 = vpop.f32.mrb[0].mxu0
        %v3872 = vadd.f32 %v3707, %v3871
        %v3873 = vpop.f32.mrb[0].mxu0
        %v3874 = vpop.f32.mrb[0].mxu0
        %v3875 = vadd.f32 %v3707, %v3874
        %v3876 = vpop.f32.mrb[0].mxu0
        %3877 = vmatprep.mubr.bf16.mxu0 %v3649
        %3878 = vmatmul.mubr.bf16.gmra.mrb[0].mxu0 %v3648
        %v3879 = vpop.f32.mrb[0].mxu0
        %v3880 = vadd.f32 %v3707, %v3879
        %v3881 = vpop.f32.mrb[0].mxu0
        %v3882 = vpop.f32.mrb[0].mxu0
        %v3883 = vadd.f32 %v3707, %v3882
        %v3884 = vpop.f32.mrb[0].mxu0
        %3885 = vmatprep.mubr.bf16.mxu0 %v3651
        %3886 = vmatmul.mubr.bf16.gmra.mrb[0].mxu0 %v3650
        %v3887 = vpop.f32.mrb[0].mxu0
        %v3888 = vadd.f32 %v3707, %v3887
        %v3889 = vpop.f32.mrb[0].mxu0
        %v3890 = vpop.f32.mrb[0].mxu0
        %v3891 = vadd.f32 %v3707, %v3890
        %v3892 = vpop.f32.mrb[0].mxu0
        %3893 = vmatprep.mubr.bf16.mxu0 %v3653
        %3894 = vmatmul.mubr.bf16.gmra.mrb[0].mxu0 %v3652
        %v3895 = vpop.f32.mrb[0].mxu0
        %v3896 = vadd.f32 %v3707, %v3895
        %v3897 = vpop.f32.mrb[0].mxu0
        %v3898 = vpop.f32.mrb[0].mxu0
        %v3899 = vadd.f32 %v3707, %v3898
        %v3900 = vpop.f32.mrb[0].mxu0
        %3901 = vmatprep.mubr.bf16.mxu0 %v3655
        %3902 = vmatmul.mubr.bf16.gmra.mrb[0].mxu0 %v3654
        %v3903 = vpop.f32.mrb[0].mxu0
        %v3904 = vadd.f32 %v3707, %v3903
        %v3905 = vpop.f32.mrb[0].mxu0
        %v3906 = vpop.f32.mrb[0].mxu0
        %v3907 = vadd.f32 %v3707, %v3906
        %v3908 = vpop.f32.mrb[0].mxu0
        %3909 = vmatprep.mubr.bf16.mxu0 %v3657
        %3910 = vmatmul.mubr.bf16.gmra.mrb[0].mxu0 %v3656
        %v3911 = vpop.f32.mrb[0].mxu0
        %v3912 = vadd.f32 %v3707, %v3911
        %v3913 = vpop.f32.mrb[0].mxu0
        %v3914 = vpop.f32.mrb[0].mxu0
        %v3915 = vadd.f32 %v3707, %v3914
        %v3916 = vpop.f32.mrb[0].mxu0
        %3917 = vmatprep.mubr.bf16.mxu0 %v3659
        %3918 = vmatmul.mubr.bf16.gmra.mrb[0].mxu0 %v3658
        %v3919 = vpop.f32.mrb[0].mxu0
        %v3920 = vadd.f32 %v3707, %v3919
        %v3921 = vpop.f32.mrb[0].mxu0
        %v3922 = vpop.f32.mrb[0].mxu0
        %v3923 = vadd.f32 %v3707, %v3922
        %v3924 = vpop.f32.mrb[0].mxu0
        %3925 = vmatprep.mubr.bf16.mxu0 %v3661
        %3926 = vmatmul.mubr.bf16.gmra.mrb[0].mxu0 %v3660
        %v3927 = vpop.f32.mrb[0].mxu0
        %v3928 = vadd.f32 %v3707, %v3927
        %v3929 = vpop.f32.mrb[0].mxu0
        %v3930 = vpop.f32.mrb[0].mxu0
        %v3931 = vadd.f32 %v3707, %v3930
        %v3932 = vpop.f32.mrb[0].mxu0
        %3933 = vmatprep.mubr.bf16.mxu0 %v3663
        %3934 = vmatmul.mubr.bf16.gmra.mrb[0].mxu0 %v3662
        %v3935 = vpop.f32.mrb[0].mxu0
        %v3936 = vadd.f32 %v3707, %v3935
        %v3937 = vpop.f32.mrb[0].mxu0
        %v3938 = vpop.f32.mrb[0].mxu0
        %v3939 = vadd.f32 %v3707, %v3938
        %v3940 = vpop.f32.mrb[0].mxu0
        %3941 = vmatprep.mubr.bf16.mxu0 %v3665
        %3942 = vmatmul.mubr.bf16.gmra.mrb[0].mxu0 %v3664
        %v3943 = vpop.f32.mrb[0].mxu0
        %v3944 = vadd.f32 %v3707, %v3943
        %v3945 = vpop.f32.mrb[0].mxu0
        %v3946 = vpop.f32.mrb[0].mxu0
        %v3947 = vadd.f32 %v3707, %v3946
        %v3948 = vpop.f32.mrb[0].mxu0
        %3949 = vmatprep.mubr.bf16.mxu0 %v3667
        %3950 = vmatmul.mubr.bf16.gmra.mrb[0].mxu0 %v3666
        %v3951 = vpop.f32.mrb[0].mxu0
        %v3952 = vadd.f32 %v3707, %v3951
        %v3953 = vpop.f32.mrb[0].mxu0
        %v3954 = vpop.f32.mrb[0].mxu0
        %v3955 = vadd.f32 %v3707, %v3954
        %v3956 = vpop.f32.mrb[0].mxu0
        %3957 = vmatprep.mubr.bf16.mxu0 %v3669
        %3958 = vmatmul.mubr.bf16.gmra.mrb[0].mxu0 %v3668
        %v3959 = vpop.f32.mrb[0].mxu0
        %v3960 = vadd.f32 %v3707, %v3959
        %v3961 = vpop.f32.mrb[0].mxu0
        %v3962 = vpop.f32.mrb[0].mxu0
        %v3963 = vadd.f32 %v3707, %v3962
        %v3964 = vpop.f32.mrb[0].mxu0
        %3965 = vdwg.mxu0
        %v3966 = vmax.f32 %v3840, 0.0
        %v3967 = vmax.f32 %v3843, 0.0
        %v3968 = vmax.f32 %v3848, 0.0
        %v3969 = vmax.f32 %v3851, 0.0
        %v3970 = vmax.f32 %v3856, 0.0
        %v3971 = vmax.f32 %v3859, 0.0
        %v3972 = vmax.f32 %v3864, 0.0
        %v3973 = vmax.f32 %v3867, 0.0
        %v3974 = vmax.f32 %v3872, 0.0
        %v3975 = vmax.f32 %v3875, 0.0
        %v3976 = vmax.f32 %v3880, 0.0
        %v3977 = vmax.f32 %v3883, 0.0
        %v3978 = vmax.f32 %v3888, 0.0
        %v3979 = vmax.f32 %v3891, 0.0
        %v3980 = vmax.f32 %v3896, 0.0
        %v3981 = vmax.f32 %v3899, 0.0
        %v3982 = vmax.f32 %v3904, 0.0
        %v3983 = vmax.f32 %v3907, 0.0
        %v3984 = vmax.f32 %v3912, 0.0
        %v3985 = vmax.f32 %v3915, 0.0
        %v3986 = vmax.f32 %v3920, 0.0
        %v3987 = vmax.f32 %v3923, 0.0
        %v3988 = vmax.f32 %v3928, 0.0
        %v3989 = vmax.f32 %v3931, 0.0
        %v3990 = vmax.f32 %v3936, 0.0
        %v3991 = vmax.f32 %v3939, 0.0
        %v3992 = vmax.f32 %v3944, 0.0
        %v3993 = vmax.f32 %v3947, 0.0
        %v3994 = vmax.f32 %v3952, 0.0
        %v3995 = vmax.f32 %v3955, 0.0
        %v3996 = vmax.f32 %v3960, 0.0
        %v3997 = vmax.f32 %v3963, 0.0
        %v3998 = vpack.c.bf16 %v3967, %v3966
        %v3999 = vpack.c.bf16 %v3969, %v3968
        %v4000 = vpack.c.bf16 %v3971, %v3970
        %v4001 = vpack.c.bf16 %v3973, %v3972
        %v4002 = vpack.c.bf16 %v3975, %v3974
        %v4003 = vpack.c.bf16 %v3977, %v3976
        %v4004 = vpack.c.bf16 %v3979, %v3978
        %v4005 = vpack.c.bf16 %v3981, %v3980
        %v4006 = vpack.c.bf16 %v3983, %v3982
        %v4007 = vpack.c.bf16 %v3985, %v3984
        %v4008 = vpack.c.bf16 %v3987, %v3986
        %v4009 = vpack.c.bf16 %v3989, %v3988
        %v4010 = vpack.c.bf16 %v3991, %v3990
        %v4011 = vpack.c.bf16 %v3993, %v3992
        %v4012 = vpack.c.bf16 %v3995, %v3994
        %v4013 = vpack.c.bf16 %v3997, %v3996
        %v4014 = vld [vmem:[%s13] sm:$0xf]
        %v4015 = vld [vmem:[%s13 + $0x4] sm:$0xf]
        %v4016 = vld [vmem:[%s13 + $0x8] sm:$0xf]
        %v4017 = vld [vmem:[%s13 + $0xc] sm:$0xf]
        %v4018 = vld [vmem:[%s13 + $0x10] sm:$0xf]
        %v4019 = vld [vmem:[%s13 + $0x14] sm:$0xf]
        %v4020 = vld [vmem:[%s13 + $0x18] sm:$0xf]
        %v4021 = vld [vmem:[%s13 + $0x1c] sm:$0xf]
        %v4022 = vld [vmem:[%s13 + $0x20] sm:$0xf]
        %v4023 = vld [vmem:[%s13 + $0x24] sm:$0xf]
        %v4024 = vld [vmem:[%s13 + $0x28] sm:$0xf]
        %v4025 = vld [vmem:[%s13 + $0x2c] sm:$0xf]
        %v4026 = vld [vmem:[%s13 + $0x30] sm:$0xf]
        %v4027 = vld [vmem:[%s13 + $0x34] sm:$0xf]
        %v4028 = vld [vmem:[%s13 + $0x38] sm:$0xf]
        %v4029 = vld [vmem:[%s13 + $0x3c] sm:$0xf]
        %v4030 = vld [vmem:[%s14] sm:$0x1]
        %v4032 = vlaneseq
        %v4033 = vshrl.u32 %v4032, 7
        %v4034 = vsub.s32 0, %v4033
        %v4035 = vrot.slane %v4030, %v4034
        %v4053 = vunpack.c.l.b16 %v4014
        %v4054 = vunpack.c.l.b16 %v4015
        %v4055 = vunpack.c.l.b16 %v4016
        %v4056 = vunpack.c.l.b16 %v4017
        %v4057 = vunpack.c.l.b16 %v4018
        %v4058 = vunpack.c.l.b16 %v4019
        %v4059 = vunpack.c.l.b16 %v4020
        %v4060 = vunpack.c.l.b16 %v4021
        %v4061 = vunpack.c.l.b16 %v4022
        %v4062 = vunpack.c.l.b16 %v4023
        %v4063 = vunpack.c.l.b16 %v4024
        %v4064 = vunpack.c.l.b16 %v4025
        %v4065 = vunpack.c.l.b16 %v4026
        %v4066 = vunpack.c.l.b16 %v4027
        %v4067 = vunpack.c.l.b16 %v4028
        %v4068 = vunpack.c.l.b16 %v4029
        %v4069 = vpack.c.b16 %v4054, %v4053
        %v4070 = vpack.c.b16 %v4056, %v4055
        %v4071 = vpack.c.b16 %v4058, %v4057
        %v4072 = vpack.c.b16 %v4060, %v4059
        %v4073 = vpack.c.b16 %v4062, %v4061
        %v4074 = vpack.c.b16 %v4064, %v4063
        %v4075 = vpack.c.b16 %v4066, %v4065
        %v4076 = vpack.c.b16 %v4068, %v4067
        %4085 = vmatprep.subr.bf16.mxu0 0
        %4086 = vmatpush1.bf16.msra.mxu0 %v4069
        %4087 = vmatprep.subr.bf16.mxu0 0
        %4088 = vmatpush1.bf16.msra.mxu0 %v4070
        %4089 = vmatprep.subr.bf16.mxu0 0
        %4090 = vmatpush1.bf16.msra.mxu0 %v4071
        %4091 = vmatprep.subr.bf16.mxu0 0
        %4092 = vmatpush1.bf16.msra.mxu0 %v4072
        %4093 = vmatprep.subr.bf16.mxu0 0
        %4094 = vmatpush1.bf16.msra.mxu0 %v4073
        %4095 = vmatprep.subr.bf16.mxu0 0
        %4096 = vmatpush1.bf16.msra.mxu0 %v4074
        %4097 = vmatprep.subr.bf16.mxu0 0
        %4098 = vmatpush1.bf16.msra.mxu0 %v4075
        %4099 = vmatprep.subr.bf16.mxu0 0
        %4100 = vmatpush1.bf16.msra.mxu0 %v4076
        %4101 = vmatprep.subr.bf16.mxu0 0
        %4102 = vmatpush1.bf16.msra.mxu0 0
        %4103 = vmatprep.subr.bf16.mxu0 0
        %4104 = vmatpush1.bf16.msra.mxu0 0
        %4105 = vmatprep.subr.bf16.mxu0 0
        %4106 = vmatpush1.bf16.msra.mxu0 0
        %4107 = vmatprep.subr.bf16.mxu0 0
        %4108 = vmatpush1.bf16.msra.mxu0 0
        %4109 = vmatprep.subr.bf16.mxu0 0
        %4110 = vmatpush1.bf16.msra.mxu0 0
        %4111 = vmatprep.subr.bf16.mxu0 0
        %4112 = vmatpush1.bf16.msra.mxu0 0
        %4113 = vmatprep.subr.bf16.mxu0 0
        %4114 = vmatpush1.bf16.msra.mxu0 0
        %4115 = vmatprep.subr.bf16.mxu0 0
        %4116 = vmatpush1.bf16.msra.mxu0 0
        %4117 = vmatprep.mubr.bf16.mxu0 0
        %4118 = vmatmul.mubr.bf16.gmra.mrb[0].mxu0 %v3998
        %v4119 = vpop.f32.mrb[0].mxu0
        %v4120 = vadd.f32 %v4035, %v4119
        %v4121 = vpop.f32.mrb[0].mxu0
        %v4122 = vpop.f32.mrb[0].mxu0
        %v4123 = vadd.f32 %v4035, %v4122
        %v4124 = vpop.f32.mrb[0].mxu0
        %4125 = vmatprep.mubr.bf16.mxu0 0
        %4126 = vmatmul.mubr.bf16.gmra.mrb[0].mxu0 %v3999
        %v4127 = vpop.f32.mrb[0].mxu0
        %v4128 = vadd.f32 %v4035, %v4127
        %v4129 = vpop.f32.mrb[0].mxu0
        %v4130 = vpop.f32.mrb[0].mxu0
        %v4131 = vadd.f32 %v4035, %v4130
        %v4132 = vpop.f32.mrb[0].mxu0
        %4133 = vmatprep.mubr.bf16.mxu0 0
        %4134 = vmatmul.mubr.bf16.gmra.mrb[0].mxu0 %v4000
        %v4135 = vpop.f32.mrb[0].mxu0
        %v4136 = vadd.f32 %v4035, %v4135
        %v4137 = vpop.f32.mrb[0].mxu0
        %v4138 = vpop.f32.mrb[0].mxu0
        %v4139 = vadd.f32 %v4035, %v4138
        %v4140 = vpop.f32.mrb[0].mxu0
        %4141 = vmatprep.mubr.bf16.mxu0 0
        %4142 = vmatmul.mubr.bf16.gmra.mrb[0].mxu0 %v4001
        %v4143 = vpop.f32.mrb[0].mxu0
        %v4144 = vadd.f32 %v4035, %v4143
        %v4145 = vpop.f32.mrb[0].mxu0
        %v4146 = vpop.f32.mrb[0].mxu0
        %v4147 = vadd.f32 %v4035, %v4146
        %v4148 = vpop.f32.mrb[0].mxu0
        %4149 = vmatprep.mubr.bf16.mxu0 0
        %4150 = vmatmul.mubr.bf16.gmra.mrb[0].mxu0 %v4002
        %v4151 = vpop.f32.mrb[0].mxu0
        %v4152 = vadd.f32 %v4035, %v4151
        %v4153 = vpop.f32.mrb[0].mxu0
        %v4154 = vpop.f32.mrb[0].mxu0
        %v4155 = vadd.f32 %v4035, %v4154
        %v4156 = vpop.f32.mrb[0].mxu0
        %4157 = vmatprep.mubr.bf16.mxu0 0
        %4158 = vmatmul.mubr.bf16.gmra.mrb[0].mxu0 %v4003
        %v4159 = vpop.f32.mrb[0].mxu0
        %v4160 = vadd.f32 %v4035, %v4159
        %v4161 = vpop.f32.mrb[0].mxu0
        %v4162 = vpop.f32.mrb[0].mxu0
        %v4163 = vadd.f32 %v4035, %v4162
        %v4164 = vpop.f32.mrb[0].mxu0
        %4165 = vmatprep.mubr.bf16.mxu0 0
        %4166 = vmatmul.mubr.bf16.gmra.mrb[0].mxu0 %v4004
        %v4167 = vpop.f32.mrb[0].mxu0
        %v4168 = vadd.f32 %v4035, %v4167
        %v4169 = vpop.f32.mrb[0].mxu0
        %v4170 = vpop.f32.mrb[0].mxu0
        %v4171 = vadd.f32 %v4035, %v4170
        %v4172 = vpop.f32.mrb[0].mxu0
        %4173 = vmatprep.mubr.bf16.mxu0 0
        %4174 = vmatmul.mubr.bf16.gmra.mrb[0].mxu0 %v4005
        %v4175 = vpop.f32.mrb[0].mxu0
        %v4176 = vadd.f32 %v4035, %v4175
        %v4177 = vpop.f32.mrb[0].mxu0
        %v4178 = vpop.f32.mrb[0].mxu0
        %v4179 = vadd.f32 %v4035, %v4178
        %v4180 = vpop.f32.mrb[0].mxu0
        %4181 = vmatprep.mubr.bf16.mxu0 0
        %4182 = vmatmul.mubr.bf16.gmra.mrb[0].mxu0 %v4006
        %v4183 = vpop.f32.mrb[0].mxu0
        %v4184 = vadd.f32 %v4035, %v4183
        %v4185 = vpop.f32.mrb[0].mxu0
        %v4186 = vpop.f32.mrb[0].mxu0
        %v4187 = vadd.f32 %v4035, %v4186
        %v4188 = vpop.f32.mrb[0].mxu0
        %4189 = vmatprep.mubr.bf16.mxu0 0
        %4190 = vmatmul.mubr.bf16.gmra.mrb[0].mxu0 %v4007
        %v4191 = vpop.f32.mrb[0].mxu0
        %v4192 = vadd.f32 %v4035, %v4191
        %v4193 = vpop.f32.mrb[0].mxu0
        %v4194 = vpop.f32.mrb[0].mxu0
        %v4195 = vadd.f32 %v4035, %v4194
        %v4196 = vpop.f32.mrb[0].mxu0
        %4197 = vmatprep.mubr.bf16.mxu0 0
        %4198 = vmatmul.mubr.bf16.gmra.mrb[0].mxu0 %v4008
        %v4199 = vpop.f32.mrb[0].mxu0
        %v4200 = vadd.f32 %v4035, %v4199
        %v4201 = vpop.f32.mrb[0].mxu0
        %v4202 = vpop.f32.mrb[0].mxu0
        %v4203 = vadd.f32 %v4035, %v4202
        %v4204 = vpop.f32.mrb[0].mxu0
        %4205 = vmatprep.mubr.bf16.mxu0 0
        %4206 = vmatmul.mubr.bf16.gmra.mrb[0].mxu0 %v4009
        %v4207 = vpop.f32.mrb[0].mxu0
        %v4208 = vadd.f32 %v4035, %v4207
        %v4209 = vpop.f32.mrb[0].mxu0
        %v4210 = vpop.f32.mrb[0].mxu0
        %v4211 = vadd.f32 %v4035, %v4210
        %v4212 = vpop.f32.mrb[0].mxu0
        %4213 = vmatprep.mubr.bf16.mxu0 0
        %4214 = vmatmul.mubr.bf16.gmra.mrb[0].mxu0 %v4010
        %v4215 = vpop.f32.mrb[0].mxu0
        %v4216 = vadd.f32 %v4035, %v4215
        %v4217 = vpop.f32.mrb[0].mxu0
        %v4218 = vpop.f32.mrb[0].mxu0
        %v4219 = vadd.f32 %v4035, %v4218
        %v4220 = vpop.f32.mrb[0].mxu0
        %4221 = vmatprep.mubr.bf16.mxu0 0
        %4222 = vmatmul.mubr.bf16.gmra.mrb[0].mxu0 %v4011
        %v4223 = vpop.f32.mrb[0].mxu0
        %v4224 = vadd.f32 %v4035, %v4223
        %v4225 = vpop.f32.mrb[0].mxu0
        %v4226 = vpop.f32.mrb[0].mxu0
        %v4227 = vadd.f32 %v4035, %v4226
        %v4228 = vpop.f32.mrb[0].mxu0
        %4229 = vmatprep.mubr.bf16.mxu0 0
        %4230 = vmatmul.mubr.bf16.gmra.mrb[0].mxu0 %v4012
        %v4231 = vpop.f32.mrb[0].mxu0
        %v4232 = vadd.f32 %v4035, %v4231
        %v4233 = vpop.f32.mrb[0].mxu0
        %v4234 = vpop.f32.mrb[0].mxu0
        %v4235 = vadd.f32 %v4035, %v4234
        %v4236 = vpop.f32.mrb[0].mxu0
        %4237 = vmatprep.mubr.bf16.mxu0 0
        %4238 = vmatmul.mubr.bf16.gmra.mrb[0].mxu0 %v4013
        %v4239 = vpop.f32.mrb[0].mxu0
        %v4240 = vadd.f32 %v4035, %v4239
        %v4241 = vpop.f32.mrb[0].mxu0
        %v4242 = vpop.f32.mrb[0].mxu0
        %v4243 = vadd.f32 %v4035, %v4242
        %v4244 = vpop.f32.mrb[0].mxu0
        %4245 = vdwg.mxu0
        %vm4246 = vcmask 64512
        %4247 = vst.msk [vmem:[%s540] sm:$0xff] %vm4246, %v4120
        %4248 = vst.msk [vmem:[%s540 + $0x8] sm:$0xff] %vm4246, %v4123
        %4249 = vst.msk [vmem:[%s540 + $0x10] sm:$0xff] %vm4246, %v4128
        %4250 = vst.msk [vmem:[%s540 + $0x18] sm:$0xff] %vm4246, %v4131
        %4251 = vst.msk [vmem:[%s540 + $0x20] sm:$0xff] %vm4246, %v4136
        %4252 = vst.msk [vmem:[%s540 + $0x28] sm:$0xff] %vm4246, %v4139
        %4253 = vst.msk [vmem:[%s540 + $0x30] sm:$0xff] %vm4246, %v4144
        %4254 = vst.msk [vmem:[%s540 + $0x38] sm:$0xff] %vm4246, %v4147
        %4255 = vst.msk [vmem:[%s540 + $0x40] sm:$0xff] %vm4246, %v4152
        %4256 = vst.msk [vmem:[%s540 + $0x48] sm:$0xff] %vm4246, %v4155
        %4257 = vst.msk [vmem:[%s540 + $0x50] sm:$0xff] %vm4246, %v4160
        %4258 = vst.msk [vmem:[%s540 + $0x58] sm:$0xff] %vm4246, %v4163
        %4259 = vst.msk [vmem:[%s540 + $0x60] sm:$0xff] %vm4246, %v4168
        %4260 = vst.msk [vmem:[%s540 + $0x68] sm:$0xff] %vm4246, %v4171
        %4261 = vst.msk [vmem:[%s540 + $0x70] sm:$0xff] %vm4246, %v4176
        %4262 = vst.msk [vmem:[%s540 + $0x78] sm:$0xff] %vm4246, %v4179
        %4263 = vst.msk [vmem:[%s540 + $0x80] sm:$0xff] %vm4246, %v4184
        %4264 = vst.msk [vmem:[%s540 + $0x88] sm:$0xff] %vm4246, %v4187
        %4265 = vst.msk [vmem:[%s540 + $0x90] sm:$0xff] %vm4246, %v4192
        %4266 = vst.msk [vmem:[%s540 + $0x98] sm:$0xff] %vm4246, %v4195
        %4267 = vst.msk [vmem:[%s540 + $0xa0] sm:$0xff] %vm4246, %v4200
        %4268 = vst.msk [vmem:[%s540 + $0xa8] sm:$0xff] %vm4246, %v4203
        %4269 = vst.msk [vmem:[%s540 + $0xb0] sm:$0xff] %vm4246, %v4208
        %4270 = vst.msk [vmem:[%s540 + $0xb8] sm:$0xff] %vm4246, %v4211
        %4271 = vst.msk [vmem:[%s540 + $0xc0] sm:$0xff] %vm4246, %v4216
        %4272 = vst.msk [vmem:[%s540 + $0xc8] sm:$0xff] %vm4246, %v4219
        %4273 = vst.msk [vmem:[%s540 + $0xd0] sm:$0xff] %vm4246, %v4224
        %4274 = vst.msk [vmem:[%s540 + $0xd8] sm:$0xff] %vm4246, %v4227
        %4275 = vst.msk [vmem:[%s540 + $0xe0] sm:$0xff] %vm4246, %v4232
        %4276 = vst.msk [vmem:[%s540 + $0xe8] sm:$0xff] %vm4246, %v4235
        %4277 = vst.msk [vmem:[%s540 + $0xf0] sm:$0xff] %vm4246, %v4240
        %4278 = vst.msk [vmem:[%s540 + $0xf8] sm:$0xff] %vm4246, %v4243
        %s4279 = smul.u32 32, %s28
        %p4280 = scmp.lt.s32.totalorder %s4279, 63
        %s4281 = scalar_select %p4280, %s4279, 63
        %s4282 = smul.addr %s4281, 8
        %s4283 = scalar_lea.vmem %s15, %s4282
        // Predicated region
        $region93: #{tpu_custom_call.1} parent=79 // pred_check
          %p4284 = pneg %p366
        $region94: #{tpu_custom_call.1} parent=79 // pred_check_branch
          %4286 = sbr.rel (%p4284) target = $region96
        $region95: #{tpu_custom_call.1} parent=79 // pred_region
          %s4287 = smul.u32 32, %s28
        $region96: #{tpu_custom_call.1} parent=79 // pred_fallthru
          _
      $region80: #{tpu_custom_call.1} parent=5 // pred_fallthru
        _
      %p4288 = scmp.le.s32.totalorder 2, %s23
      // Predicated region
      $region97: #{tpu_custom_call.1} parent=5 // pred_check
        %p4289 = pneg %p4288
      $region98: #{tpu_custom_call.1} parent=5 // pred_check_branch
        %4291 = sbr.rel (%p4289) target = $region100
      $region99: #{tpu_custom_call.1} parent=5 // pred_region
        %s4292 = ssub.s32 %s23, 2
        // Predicated region
        $region101: #{tpu_custom_call.1} parent=99 // pred_check
          %p4293 = pneg %p372
        $region102: #{tpu_custom_call.1} parent=99 // pred_check_branch
          %4295 = sbr.rel (%p4293) target = $region104
        $region103: #{tpu_custom_call.1} parent=99 // pred_region
          %s4296 = smul.u32 32, %s29
          %p4297 = scmp.lt.s32.totalorder %s4296, 63
          %s4298 = scalar_select %p4297, %s4296, 63
          %s4299 = smul.addr %s4298, 8
          %s4300 = scalar_lea.vmem %s15, %s4299
        $region104: #{tpu_custom_call.1} parent=99 // pred_fallthru
          _
      $region100: #{tpu_custom_call.1} parent=5 // pred_fallthru
        _
    $region6: #{tpu_custom_call.1} parent=1 // loop_footer
      %s27 = sadd.s32 1, %s23
    $region7: #{tpu_custom_call.1} parent=1 // loop_footer_branch
      %22 = sbr.rel target = $region3
    $region8: #{tpu_custom_call.1} parent=1 // loop_exit
      _
    %4301 = vsyncpa [#allocation3], 1
    %s4302 = scalar_lea.sflag [#allocation3], 1
    %4303 = vsyncpa %s4302, 1
    %4304 = vsyncpa [#allocation5], 1

</llo_original>
